<compile_context>
chip_gen: v6e
topology: v6e:2x2x1
jax: 0.10.0
libtpu: 0.0.40
codegen_flags: <defaults>
</compile_context>

<pallas_src>
import numpy as np
import jax
import jax.numpy as jnp
from jax import lax
from jax.experimental import pallas as pl
from jax.experimental.pallas import tpu as pltpu

KSIZE = 5
STRIDE = 2


def conv2d_size_out(size, kernel_size=KSIZE, stride=STRIDE):
    return (size - (kernel_size - 1) - 1) // stride + 1


# --------------------------- parameter preparation ---------------------------

def _selection_matrices(hin, hout, batch):
    """S[kh] (B*hout, B*hin): picks input row b*hin + 2*oh + kh for output row b*hout + oh."""
    s = np.zeros((KSIZE, batch * hout, batch * hin), np.float32)
    for kh in range(KSIZE):
        for b in range(batch):
            for oh in range(hout):
                s[kh, b * hout + oh, b * hin + STRIDE * oh + kh] = 1.0
    return jnp.asarray(s)


def _expanded_conv_weight(w_oihw, win, wout):
    """Wexp[kh] (win*ci, wout*co): Wexp[kh][w*ci+c, ow*co+o] = W[o,c,kh,w-2*ow] (valid kw) else 0."""
    co, ci, kk, _ = w_oihw.shape
    e = np.zeros((kk, win, wout), np.float32)
    for kw in range(kk):
        for ow in range(wout):
            e[kw, STRIDE * ow + kw, ow] = 1.0
    wexp = jnp.einsum("kwo,dchk->hwcod", jnp.asarray(e), w_oihw.astype(jnp.float32))
    return wexp.reshape(kk, win * ci, wout * co)


def prepare_pg(params, h, w, batch, eps=1e-5):
    """Build all kernel-side constants once (selection mats, expanded weights,
    folded BN scale/shift rows, flatten-permuted fc1)."""
    chans = [4, 16, 32, 32]
    hin, win = h, w
    consts = []
    for i in range(1, 4):
        cout = chans[i]
        hout, wout = conv2d_size_out(hin), conv2d_size_out(win)
        sel = _selection_matrices(hin, hout, batch)
        wexp = _expanded_conv_weight(params[f"conv{i}_w"], win, wout)
        scale = params[f"bn{i}_gamma"] / jnp.sqrt(params[f"bn{i}_var"] + eps)
        shift = params[f"bn{i}_beta"] + scale * (params[f"conv{i}_b"] - params[f"bn{i}_mean"])
        sc_row = jnp.tile(scale, wout).reshape(1, wout * cout).astype(jnp.float32)
        sh_row = jnp.tile(shift, wout).reshape(1, wout * cout).astype(jnp.float32)
        consts.extend([sel, wexp, sc_row, sh_row])
        hin, win = hout, wout

    convh, convw, c3 = hin, win, chans[3]
    # fold PyTorch NCHW .view(B,-1) ordering into fc1's rows (one-time permutation).
    perm = np.array([c * convh * convw + hh * convw + ww
                     for hh in range(convh) for ww in range(convw) for c in range(c3)])
    fc1w = params["fc1_w"][perm, :].astype(jnp.float32)
    fc1b = params["fc1_b"].reshape(1, -1).astype(jnp.float32)
    fc2w = params["fc2_w"].astype(jnp.float32)
    fc2b = params["fc2_b"].reshape(1, 1).astype(jnp.float32)
    consts.extend([fc1w, fc1b, fc2w, fc2b])

    meta = dict(batch=batch, convh=convh, convw=convw, c3=c3)
    return tuple(consts), meta


# -------------------------------- fused kernel --------------------------------

def _make_fused_kernel(batch, convh, convw, c3):
    slab = convw * c3  # fc1 rows contributed by one spatial row of conv3 output

    def kernel(x_ref,
               s1_ref, w1_ref, sc1_ref, sh1_ref,
               s2_ref, w2_ref, sc2_ref, sh2_ref,
               s3_ref, w3_ref, sc3_ref, sh3_ref,
               fc1w_ref, fc1b_ref, fc2w_ref, fc2b_ref,
               o_ref):

        def conv_bn_relu(x, s_ref, w_ref, sc_ref, sh_ref):
            # x: (B*Hin, Win*Cin) in row layout [b*Hin + h, w*Cin + c].
            acc = None
            for kh in range(KSIZE):
                band = jnp.dot(s_ref[kh], x, preferred_element_type=jnp.float32)
                term = jnp.dot(band, w_ref[kh], preferred_element_type=jnp.float32)
                acc = term if acc is None else acc + term
            # folded BatchNorm (eval) affine + ReLU
            return jnp.maximum(acc * sc_ref[...] + sh_ref[...], 0.0)

        y = conv_bn_relu(x_ref[...], s1_ref, w1_ref, sc1_ref, sh1_ref)
        y = conv_bn_relu(y, s2_ref, w2_ref, sc2_ref, sh2_ref)
        y = conv_bn_relu(y, s3_ref, w3_ref, sc3_ref, sh3_ref)
        # y: (batch*convh, convw*c3); row b*convh + h holds conv3 out [w*c3 + c].

        for b in range(batch):
            acc = fc1b_ref[...]                                     # (1, 16)
            for hh in range(convh):
                row = y[b * convh + hh:b * convh + hh + 1, :]       # (1, convw*c3)
                wsl = fc1w_ref[hh * slab:(hh + 1) * slab, :]        # (convw*c3, 16)
                acc = acc + jnp.dot(row, wsl, preferred_element_type=jnp.float32)
            hidden = jnp.maximum(acc, 0.0)
            logit = (jnp.dot(hidden, fc2w_ref[...], preferred_element_type=jnp.float32)
                     + fc2b_ref[...])
            o_ref[b:b + 1, :] = 1.0 / (1.0 + jnp.exp(-logit))

    return kernel


def pg_forward(consts, meta, x):
    b, c, h, w = x.shape
    assert b == meta["batch"]
    # one-time layout glue: NCHW -> (B*H, W*C)
    x2d = x.astype(jnp.float32).transpose(0, 2, 3, 1).reshape(b * h, w * c)
    kernel = _make_fused_kernel(meta["batch"], meta["convh"], meta["convw"], meta["c3"])
    vmem = pl.BlockSpec(memory_space=pltpu.MemorySpace.VMEM)
    return pl.pallas_call(
        kernel,
        out_shape=jax.ShapeDtypeStruct((b, 1), jnp.float32),
        in_specs=[vmem] * (1 + len(consts)),
        out_specs=vmem,
    )(x2d, *consts)


# ------------------------------ model setup ----------------------------------

def init_params(key, h, w):
    convw = conv2d_size_out(conv2d_size_out(conv2d_size_out(w)))
    convh = conv2d_size_out(conv2d_size_out(conv2d_size_out(h)))
    lin = convw * convh * 32

    keys = jax.random.split(key, 16)
    p = {}
    shapes = [(16, 4, 5, 5), (32, 16, 5, 5), (32, 32, 5, 5)]
    for i, shp in enumerate(shapes, start=1):
        cout = shp[0]
        p[f"conv{i}_w"] = 0.05 * jax.random.normal(keys[4 * i - 4], shp, jnp.float32)
        p[f"conv{i}_b"] = 0.05 * jax.random.normal(keys[4 * i - 3], (cout,), jnp.float32)
        p[f"bn{i}_gamma"] = 1.0 + 0.1 * jax.random.normal(keys[4 * i - 2], (cout,), jnp.float32)
        p[f"bn{i}_beta"] = 0.1 * jax.random.normal(keys[4 * i - 1], (cout,), jnp.float32)
        p[f"bn{i}_mean"] = 0.05 * jax.random.normal(jax.random.fold_in(keys[4 * i - 1], 1),
                                                    (cout,), jnp.float32)
        p[f"bn{i}_var"] = 0.5 + jax.random.uniform(jax.random.fold_in(keys[4 * i - 1], 2),
                                                   (cout,), jnp.float32)
    p["fc1_w"] = 0.05 * jax.random.normal(keys[12], (lin, 16), jnp.float32)   # (in, out)
    p["fc1_b"] = 0.05 * jax.random.normal(keys[13], (16,), jnp.float32)
    p["fc2_w"] = 0.05 * jax.random.normal(keys[14], (16, 1), jnp.float32)
    p["fc2_b"] = 0.05 * jax.random.normal(keys[15], (1,), jnp.float32)
    return p


# ------------------------- pure-JAX reference check --------------------------

def pg_reference(params, x):
    def block(x, w, b, g, be, m, v):
        y = lax.conv_general_dilated(x, w, (2, 2), "VALID",
                                     dimension_numbers=("NCHW", "OIHW", "NCHW"))
        y = y + b.reshape(1, -1, 1, 1)
        y = (y - m.reshape(1, -1, 1, 1)) / jnp.sqrt(v.reshape(1, -1, 1, 1) + 1e-5)
        y = y * g.reshape(1, -1, 1, 1) + be.reshape(1, -1, 1, 1)
        return jnp.maximum(y, 0.0)

    p = params
    y = block(x, p["conv1_w"], p["conv1_b"], p["bn1_gamma"], p["bn1_beta"],
              p["bn1_mean"], p["bn1_var"])
    y = block(y, p["conv2_w"], p["conv2_b"], p["bn2_gamma"], p["bn2_beta"],
              p["bn2_mean"], p["bn2_var"])
    y = block(y, p["conv3_w"], p["conv3_b"], p["bn3_gamma"], p["bn3_beta"],
              p["bn3_mean"], p["bn3_var"])
    flat = y.reshape(y.shape[0], -1)
    h = jnp.maximum(flat @ p["fc1_w"] + p["fc1_b"], 0.0)
    return jax.nn.sigmoid(h @ p["fc2_w"] + p["fc2_b"])


# ---------------------------------- main --------------------------------------

if __name__ == "__main__":
    H, W, B = 40, 40, 2        # 40 -> 18 -> 7 -> 2  => flatten = 2*2*32 = 128
    key = jax.random.PRNGKey(0)
    k_param, k_x = jax.random.split(key)
    params = init_params(k_param, H, W)
    x = jax.random.normal(k_x, (B, 4, H, W), jnp.float32)

    consts, meta = prepare_pg(params, H, W, B)            # one-time weight prep
    out = jax.block_until_ready(pg_forward(consts, meta, x))
    ref = jax.block_until_ready(pg_reference(params, x))

    assert out.shape == (B, 1), out.shape
    err = float(jnp.max(jnp.abs(out - ref)))
    assert err < 1e-4, f"mismatch vs reference: {err}"
    print("KERNEL_OK")
</pallas_src>

<mosaic_0001>
module attributes {stable_mosaic.version = 11 : i64} {
  func.func @kernel(%arg0: memref<80x160xf32, #tpu.memory_space<vmem>>, %arg1: memref<5x36x80xf32, #tpu.memory_space<vmem>>, %arg2: memref<5x160x288xf32, #tpu.memory_space<vmem>>, %arg3: memref<1x288xf32, #tpu.memory_space<vmem>>, %arg4: memref<1x288xf32, #tpu.memory_space<vmem>>, %arg5: memref<5x14x36xf32, #tpu.memory_space<vmem>>, %arg6: memref<5x288x224xf32, #tpu.memory_space<vmem>>, %arg7: memref<1x224xf32, #tpu.memory_space<vmem>>, %arg8: memref<1x224xf32, #tpu.memory_space<vmem>>, %arg9: memref<5x4x14xf32, #tpu.memory_space<vmem>>, %arg10: memref<5x224x64xf32, #tpu.memory_space<vmem>>, %arg11: memref<1x64xf32, #tpu.memory_space<vmem>>, %arg12: memref<1x64xf32, #tpu.memory_space<vmem>>, %arg13: memref<128x16xf32, #tpu.memory_space<vmem>>, %arg14: memref<1x16xf32, #tpu.memory_space<vmem>>, %arg15: memref<16x1xf32, #tpu.memory_space<vmem>>, %arg16: memref<1x1xf32, #tpu.memory_space<vmem>>, %arg17: memref<2x1xf32, #tpu.memory_space<vmem>>) attributes {dimension_semantics = [], scalar_prefetch = 0 : i64, scratch_operands = 0 : i64, tpu.core_type = #tpu.core_type<tc>} {
    %c0 = arith.constant 0 : index
    %c0_0 = arith.constant 0 : index
    %0 = vector.load %arg0[%c0, %c0_0] : memref<80x160xf32, #tpu.memory_space<vmem>>, vector<80x160xf32>
    %c0_1 = arith.constant 0 : index
    %c0_2 = arith.constant 0 : index
    %c0_3 = arith.constant 0 : index
    %1 = vector.load %arg1[%c0_1, %c0_2, %c0_3] : memref<5x36x80xf32, #tpu.memory_space<vmem>>, vector<1x36x80xf32>
    %2 = vector.shape_cast %1 : vector<1x36x80xf32> to vector<36x80xf32>
    %cst = arith.constant dense<0.000000e+00> : vector<36x160xf32>
    %3 = tpu.matmul %2, %0, %cst {dimension_numbers = #tpu.dot_dimension_numbers<[1], [0], [0], [1], [0, 0, 1, 1], [], []>} : vector<36x80xf32>, vector<80x160xf32>, vector<36x160xf32> -> vector<36x160xf32>
    %c0_4 = arith.constant 0 : index
    %c0_5 = arith.constant 0 : index
    %c0_6 = arith.constant 0 : index
    %4 = vector.load %arg2[%c0_4, %c0_5, %c0_6] : memref<5x160x288xf32, #tpu.memory_space<vmem>>, vector<1x160x288xf32>
    %5 = vector.shape_cast %4 : vector<1x160x288xf32> to vector<160x288xf32>
    %cst_7 = arith.constant dense<0.000000e+00> : vector<36x288xf32>
    %6 = tpu.matmul %3, %5, %cst_7 {dimension_numbers = #tpu.dot_dimension_numbers<[1], [0], [0], [1], [0, 0, 1, 1], [], []>} : vector<36x160xf32>, vector<160x288xf32>, vector<36x288xf32> -> vector<36x288xf32>
    %c1 = arith.constant 1 : index
    %c0_8 = arith.constant 0 : index
    %c0_9 = arith.constant 0 : index
    %7 = vector.load %arg1[%c1, %c0_8, %c0_9] : memref<5x36x80xf32, #tpu.memory_space<vmem>>, vector<1x36x80xf32>
    %8 = vector.shape_cast %7 : vector<1x36x80xf32> to vector<36x80xf32>
    %cst_10 = arith.constant dense<0.000000e+00> : vector<36x160xf32>
    %9 = tpu.matmul %8, %0, %cst_10 {dimension_numbers = #tpu.dot_dimension_numbers<[1], [0], [0], [1], [0, 0, 1, 1], [], []>} : vector<36x80xf32>, vector<80x160xf32>, vector<36x160xf32> -> vector<36x160xf32>
    %c1_11 = arith.constant 1 : index
    %c0_12 = arith.constant 0 : index
    %c0_13 = arith.constant 0 : index
    %10 = vector.load %arg2[%c1_11, %c0_12, %c0_13] : memref<5x160x288xf32, #tpu.memory_space<vmem>>, vector<1x160x288xf32>
    %11 = vector.shape_cast %10 : vector<1x160x288xf32> to vector<160x288xf32>
    %cst_14 = arith.constant dense<0.000000e+00> : vector<36x288xf32>
    %12 = tpu.matmul %9, %11, %cst_14 {dimension_numbers = #tpu.dot_dimension_numbers<[1], [0], [0], [1], [0, 0, 1, 1], [], []>} : vector<36x160xf32>, vector<160x288xf32>, vector<36x288xf32> -> vector<36x288xf32>
    %13 = arith.addf %6, %12 : vector<36x288xf32>
    %c2 = arith.constant 2 : index
    %c0_15 = arith.constant 0 : index
    %c0_16 = arith.constant 0 : index
    %14 = vector.load %arg1[%c2, %c0_15, %c0_16] : memref<5x36x80xf32, #tpu.memory_space<vmem>>, vector<1x36x80xf32>
    %15 = vector.shape_cast %14 : vector<1x36x80xf32> to vector<36x80xf32>
    %cst_17 = arith.constant dense<0.000000e+00> : vector<36x160xf32>
    %16 = tpu.matmul %15, %0, %cst_17 {dimension_numbers = #tpu.dot_dimension_numbers<[1], [0], [0], [1], [0, 0, 1, 1], [], []>} : vector<36x80xf32>, vector<80x160xf32>, vector<36x160xf32> -> vector<36x160xf32>
    %c2_18 = arith.constant 2 : index
    %c0_19 = arith.constant 0 : index
    %c0_20 = arith.constant 0 : index
    %17 = vector.load %arg2[%c2_18, %c0_19, %c0_20] : memref<5x160x288xf32, #tpu.memory_space<vmem>>, vector<1x160x288xf32>
    %18 = vector.shape_cast %17 : vector<1x160x288xf32> to vector<160x288xf32>
    %cst_21 = arith.constant dense<0.000000e+00> : vector<36x288xf32>
    %19 = tpu.matmul %16, %18, %cst_21 {dimension_numbers = #tpu.dot_dimension_numbers<[1], [0], [0], [1], [0, 0, 1, 1], [], []>} : vector<36x160xf32>, vector<160x288xf32>, vector<36x288xf32> -> vector<36x288xf32>
    %20 = arith.addf %13, %19 : vector<36x288xf32>
    %c3 = arith.constant 3 : index
    %c0_22 = arith.constant 0 : index
    %c0_23 = arith.constant 0 : index
    %21 = vector.load %arg1[%c3, %c0_22, %c0_23] : memref<5x36x80xf32, #tpu.memory_space<vmem>>, vector<1x36x80xf32>
    %22 = vector.shape_cast %21 : vector<1x36x80xf32> to vector<36x80xf32>
    %cst_24 = arith.constant dense<0.000000e+00> : vector<36x160xf32>
    %23 = tpu.matmul %22, %0, %cst_24 {dimension_numbers = #tpu.dot_dimension_numbers<[1], [0], [0], [1], [0, 0, 1, 1], [], []>} : vector<36x80xf32>, vector<80x160xf32>, vector<36x160xf32> -> vector<36x160xf32>
    %c3_25 = arith.constant 3 : index
    %c0_26 = arith.constant 0 : index
    %c0_27 = arith.constant 0 : index
    %24 = vector.load %arg2[%c3_25, %c0_26, %c0_27] : memref<5x160x288xf32, #tpu.memory_space<vmem>>, vector<1x160x288xf32>
    %25 = vector.shape_cast %24 : vector<1x160x288xf32> to vector<160x288xf32>
    %cst_28 = arith.constant dense<0.000000e+00> : vector<36x288xf32>
    %26 = tpu.matmul %23, %25, %cst_28 {dimension_numbers = #tpu.dot_dimension_numbers<[1], [0], [0], [1], [0, 0, 1, 1], [], []>} : vector<36x160xf32>, vector<160x288xf32>, vector<36x288xf32> -> vector<36x288xf32>
    %27 = arith.addf %20, %26 : vector<36x288xf32>
    %c4 = arith.constant 4 : index
    %c0_29 = arith.constant 0 : index
    %c0_30 = arith.constant 0 : index
    %28 = vector.load %arg1[%c4, %c0_29, %c0_30] : memref<5x36x80xf32, #tpu.memory_space<vmem>>, vector<1x36x80xf32>
    %29 = vector.shape_cast %28 : vector<1x36x80xf32> to vector<36x80xf32>
    %cst_31 = arith.constant dense<0.000000e+00> : vector<36x160xf32>
    %30 = tpu.matmul %29, %0, %cst_31 {dimension_numbers = #tpu.dot_dimension_numbers<[1], [0], [0], [1], [0, 0, 1, 1], [], []>} : vector<36x80xf32>, vector<80x160xf32>, vector<36x160xf32> -> vector<36x160xf32>
    %c4_32 = arith.constant 4 : index
    %c0_33 = arith.constant 0 : index
    %c0_34 = arith.constant 0 : index
    %31 = vector.load %arg2[%c4_32, %c0_33, %c0_34] : memref<5x160x288xf32, #tpu.memory_space<vmem>>, vector<1x160x288xf32>
    %32 = vector.shape_cast %31 : vector<1x160x288xf32> to vector<160x288xf32>
    %cst_35 = arith.constant dense<0.000000e+00> : vector<36x288xf32>
    %33 = tpu.matmul %30, %32, %cst_35 {dimension_numbers = #tpu.dot_dimension_numbers<[1], [0], [0], [1], [0, 0, 1, 1], [], []>} : vector<36x160xf32>, vector<160x288xf32>, vector<36x288xf32> -> vector<36x288xf32>
    %34 = arith.addf %27, %33 : vector<36x288xf32>
    %c0_36 = arith.constant 0 : index
    %c0_37 = arith.constant 0 : index
    %35 = vector.load %arg3[%c0_36, %c0_37] : memref<1x288xf32, #tpu.memory_space<vmem>>, vector<1x288xf32>
    %36 = vector.broadcast %35 : vector<1x288xf32> to vector<36x288xf32>
    %37 = arith.mulf %34, %36 : vector<36x288xf32>
    %c0_38 = arith.constant 0 : index
    %c0_39 = arith.constant 0 : index
    %38 = vector.load %arg4[%c0_38, %c0_39] : memref<1x288xf32, #tpu.memory_space<vmem>>, vector<1x288xf32>
    %39 = vector.broadcast %38 : vector<1x288xf32> to vector<36x288xf32>
    %40 = arith.addf %37, %39 : vector<36x288xf32>
    %cst_40 = arith.constant 0.000000e+00 : f32
    %41 = vector.broadcast %cst_40 : f32 to vector<36x288xf32>
    %42 = arith.maximumf %40, %41 : vector<36x288xf32>
    %c0_41 = arith.constant 0 : index
    %c0_42 = arith.constant 0 : index
    %c0_43 = arith.constant 0 : index
    %43 = vector.load %arg5[%c0_41, %c0_42, %c0_43] : memref<5x14x36xf32, #tpu.memory_space<vmem>>, vector<1x14x36xf32>
    %44 = vector.shape_cast %43 : vector<1x14x36xf32> to vector<14x36xf32>
    %cst_44 = arith.constant dense<0.000000e+00> : vector<14x288xf32>
    %45 = tpu.matmul %44, %42, %cst_44 {dimension_numbers = #tpu.dot_dimension_numbers<[1], [0], [0], [1], [0, 0, 1, 1], [], []>} : vector<14x36xf32>, vector<36x288xf32>, vector<14x288xf32> -> vector<14x288xf32>
    %c0_45 = arith.constant 0 : index
    %c0_46 = arith.constant 0 : index
    %c0_47 = arith.constant 0 : index
    %46 = vector.load %arg6[%c0_45, %c0_46, %c0_47] : memref<5x288x224xf32, #tpu.memory_space<vmem>>, vector<1x288x224xf32>
    %47 = vector.shape_cast %46 : vector<1x288x224xf32> to vector<288x224xf32>
    %cst_48 = arith.constant dense<0.000000e+00> : vector<14x224xf32>
    %48 = tpu.matmul %45, %47, %cst_48 {dimension_numbers = #tpu.dot_dimension_numbers<[1], [0], [0], [1], [0, 0, 1, 1], [], []>} : vector<14x288xf32>, vector<288x224xf32>, vector<14x224xf32> -> vector<14x224xf32>
    %c1_49 = arith.constant 1 : index
    %c0_50 = arith.constant 0 : index
    %c0_51 = arith.constant 0 : index
    %49 = vector.load %arg5[%c1_49, %c0_50, %c0_51] : memref<5x14x36xf32, #tpu.memory_space<vmem>>, vector<1x14x36xf32>
    %50 = vector.shape_cast %49 : vector<1x14x36xf32> to vector<14x36xf32>
    %cst_52 = arith.constant dense<0.000000e+00> : vector<14x288xf32>
    %51 = tpu.matmul %50, %42, %cst_52 {dimension_numbers = #tpu.dot_dimension_numbers<[1], [0], [0], [1], [0, 0, 1, 1], [], []>} : vector<14x36xf32>, vector<36x288xf32>, vector<14x288xf32> -> vector<14x288xf32>
    %c1_53 = arith.constant 1 : index
    %c0_54 = arith.constant 0 : index
    %c0_55 = arith.constant 0 : index
    %52 = vector.load %arg6[%c1_53, %c0_54, %c0_55] : memref<5x288x224xf32, #tpu.memory_space<vmem>>, vector<1x288x224xf32>
    %53 = vector.shape_cast %52 : vector<1x288x224xf32> to vector<288x224xf32>
    %cst_56 = arith.constant dense<0.000000e+00> : vector<14x224xf32>
    %54 = tpu.matmul %51, %53, %cst_56 {dimension_numbers = #tpu.dot_dimension_numbers<[1], [0], [0], [1], [0, 0, 1, 1], [], []>} : vector<14x288xf32>, vector<288x224xf32>, vector<14x224xf32> -> vector<14x224xf32>
    %55 = arith.addf %48, %54 : vector<14x224xf32>
    %c2_57 = arith.constant 2 : index
    %c0_58 = arith.constant 0 : index
    %c0_59 = arith.constant 0 : index
    %56 = vector.load %arg5[%c2_57, %c0_58, %c0_59] : memref<5x14x36xf32, #tpu.memory_space<vmem>>, vector<1x14x36xf32>
    %57 = vector.shape_cast %56 : vector<1x14x36xf32> to vector<14x36xf32>
    %cst_60 = arith.constant dense<0.000000e+00> : vector<14x288xf32>
    %58 = tpu.matmul %57, %42, %cst_60 {dimension_numbers = #tpu.dot_dimension_numbers<[1], [0], [0], [1], [0, 0, 1, 1], [], []>} : vector<14x36xf32>, vector<36x288xf32>, vector<14x288xf32> -> vector<14x288xf32>
    %c2_61 = arith.constant 2 : index
    %c0_62 = arith.constant 0 : index
    %c0_63 = arith.constant 0 : index
    %59 = vector.load %arg6[%c2_61, %c0_62, %c0_63] : memref<5x288x224xf32, #tpu.memory_space<vmem>>, vector<1x288x224xf32>
    %60 = vector.shape_cast %59 : vector<1x288x224xf32> to vector<288x224xf32>
    %cst_64 = arith.constant dense<0.000000e+00> : vector<14x224xf32>
    %61 = tpu.matmul %58, %60, %cst_64 {dimension_numbers = #tpu.dot_dimension_numbers<[1], [0], [0], [1], [0, 0, 1, 1], [], []>} : vector<14x288xf32>, vector<288x224xf32>, vector<14x224xf32> -> vector<14x224xf32>
    %62 = arith.addf %55, %61 : vector<14x224xf32>
    %c3_65 = arith.constant 3 : index
    %c0_66 = arith.constant 0 : index
    %c0_67 = arith.constant 0 : index
    %63 = vector.load %arg5[%c3_65, %c0_66, %c0_67] : memref<5x14x36xf32, #tpu.memory_space<vmem>>, vector<1x14x36xf32>
    %64 = vector.shape_cast %63 : vector<1x14x36xf32> to vector<14x36xf32>
    %cst_68 = arith.constant dense<0.000000e+00> : vector<14x288xf32>
    %65 = tpu.matmul %64, %42, %cst_68 {dimension_numbers = #tpu.dot_dimension_numbers<[1], [0], [0], [1], [0, 0, 1, 1], [], []>} : vector<14x36xf32>, vector<36x288xf32>, vector<14x288xf32> -> vector<14x288xf32>
    %c3_69 = arith.constant 3 : index
    %c0_70 = arith.constant 0 : index
    %c0_71 = arith.constant 0 : index
    %66 = vector.load %arg6[%c3_69, %c0_70, %c0_71] : memref<5x288x224xf32, #tpu.memory_space<vmem>>, vector<1x288x224xf32>
    %67 = vector.shape_cast %66 : vector<1x288x224xf32> to vector<288x224xf32>
    %cst_72 = arith.constant dense<0.000000e+00> : vector<14x224xf32>
    %68 = tpu.matmul %65, %67, %cst_72 {dimension_numbers = #tpu.dot_dimension_numbers<[1], [0], [0], [1], [0, 0, 1, 1], [], []>} : vector<14x288xf32>, vector<288x224xf32>, vector<14x224xf32> -> vector<14x224xf32>
    %69 = arith.addf %62, %68 : vector<14x224xf32>
    %c4_73 = arith.constant 4 : index
    %c0_74 = arith.constant 0 : index
    %c0_75 = arith.constant 0 : index
    %70 = vector.load %arg5[%c4_73, %c0_74, %c0_75] : memref<5x14x36xf32, #tpu.memory_space<vmem>>, vector<1x14x36xf32>
    %71 = vector.shape_cast %70 : vector<1x14x36xf32> to vector<14x36xf32>
    %cst_76 = arith.constant dense<0.000000e+00> : vector<14x288xf32>
    %72 = tpu.matmul %71, %42, %cst_76 {dimension_numbers = #tpu.dot_dimension_numbers<[1], [0], [0], [1], [0, 0, 1, 1], [], []>} : vector<14x36xf32>, vector<36x288xf32>, vector<14x288xf32> -> vector<14x288xf32>
    %c4_77 = arith.constant 4 : index
    %c0_78 = arith.constant 0 : index
    %c0_79 = arith.constant 0 : index
    %73 = vector.load %arg6[%c4_77, %c0_78, %c0_79] : memref<5x288x224xf32, #tpu.memory_space<vmem>>, vector<1x288x224xf32>
    %74 = vector.shape_cast %73 : vector<1x288x224xf32> to vector<288x224xf32>
    %cst_80 = arith.constant dense<0.000000e+00> : vector<14x224xf32>
    %75 = tpu.matmul %72, %74, %cst_80 {dimension_numbers = #tpu.dot_dimension_numbers<[1], [0], [0], [1], [0, 0, 1, 1], [], []>} : vector<14x288xf32>, vector<288x224xf32>, vector<14x224xf32> -> vector<14x224xf32>
    %76 = arith.addf %69, %75 : vector<14x224xf32>
    %c0_81 = arith.constant 0 : index
    %c0_82 = arith.constant 0 : index
    %77 = vector.load %arg7[%c0_81, %c0_82] : memref<1x224xf32, #tpu.memory_space<vmem>>, vector<1x224xf32>
    %78 = vector.broadcast %77 : vector<1x224xf32> to vector<14x224xf32>
    %79 = arith.mulf %76, %78 : vector<14x224xf32>
    %c0_83 = arith.constant 0 : index
    %c0_84 = arith.constant 0 : index
    %80 = vector.load %arg8[%c0_83, %c0_84] : memref<1x224xf32, #tpu.memory_space<vmem>>, vector<1x224xf32>
    %81 = vector.broadcast %80 : vector<1x224xf32> to vector<14x224xf32>
    %82 = arith.addf %79, %81 : vector<14x224xf32>
    %cst_85 = arith.constant 0.000000e+00 : f32
    %83 = vector.broadcast %cst_85 : f32 to vector<14x224xf32>
    %84 = arith.maximumf %82, %83 : vector<14x224xf32>
    %c0_86 = arith.constant 0 : index
    %c0_87 = arith.constant 0 : index
    %c0_88 = arith.constant 0 : index
    %85 = vector.load %arg9[%c0_86, %c0_87, %c0_88] : memref<5x4x14xf32, #tpu.memory_space<vmem>>, vector<1x4x14xf32>
    %86 = vector.shape_cast %85 : vector<1x4x14xf32> to vector<4x14xf32>
    %cst_89 = arith.constant dense<0.000000e+00> : vector<4x224xf32>
    %87 = tpu.matmul %86, %84, %cst_89 {dimension_numbers = #tpu.dot_dimension_numbers<[1], [0], [0], [1], [0, 0, 1, 1], [], []>} : vector<4x14xf32>, vector<14x224xf32>, vector<4x224xf32> -> vector<4x224xf32>
    %c0_90 = arith.constant 0 : index
    %c0_91 = arith.constant 0 : index
    %c0_92 = arith.constant 0 : index
    %88 = vector.load %arg10[%c0_90, %c0_91, %c0_92] : memref<5x224x64xf32, #tpu.memory_space<vmem>>, vector<1x224x64xf32>
    %89 = vector.shape_cast %88 : vector<1x224x64xf32> to vector<224x64xf32>
    %cst_93 = arith.constant dense<0.000000e+00> : vector<4x64xf32>
    %90 = tpu.matmul %87, %89, %cst_93 {dimension_numbers = #tpu.dot_dimension_numbers<[1], [0], [0], [1], [0, 0, 1, 1], [], []>} : vector<4x224xf32>, vector<224x64xf32>, vector<4x64xf32> -> vector<4x64xf32>
    %c1_94 = arith.constant 1 : index
    %c0_95 = arith.constant 0 : index
    %c0_96 = arith.constant 0 : index
    %91 = vector.load %arg9[%c1_94, %c0_95, %c0_96] : memref<5x4x14xf32, #tpu.memory_space<vmem>>, vector<1x4x14xf32>
    %92 = vector.shape_cast %91 : vector<1x4x14xf32> to vector<4x14xf32>
    %cst_97 = arith.constant dense<0.000000e+00> : vector<4x224xf32>
    %93 = tpu.matmul %92, %84, %cst_97 {dimension_numbers = #tpu.dot_dimension_numbers<[1], [0], [0], [1], [0, 0, 1, 1], [], []>} : vector<4x14xf32>, vector<14x224xf32>, vector<4x224xf32> -> vector<4x224xf32>
    %c1_98 = arith.constant 1 : index
    %c0_99 = arith.constant 0 : index
    %c0_100 = arith.constant 0 : index
    %94 = vector.load %arg10[%c1_98, %c0_99, %c0_100] : memref<5x224x64xf32, #tpu.memory_space<vmem>>, vector<1x224x64xf32>
    %95 = vector.shape_cast %94 : vector<1x224x64xf32> to vector<224x64xf32>
    %cst_101 = arith.constant dense<0.000000e+00> : vector<4x64xf32>
    %96 = tpu.matmul %93, %95, %cst_101 {dimension_numbers = #tpu.dot_dimension_numbers<[1], [0], [0], [1], [0, 0, 1, 1], [], []>} : vector<4x224xf32>, vector<224x64xf32>, vector<4x64xf32> -> vector<4x64xf32>
    %97 = arith.addf %90, %96 : vector<4x64xf32>
    %c2_102 = arith.constant 2 : index
    %c0_103 = arith.constant 0 : index
    %c0_104 = arith.constant 0 : index
    %98 = vector.load %arg9[%c2_102, %c0_103, %c0_104] : memref<5x4x14xf32, #tpu.memory_space<vmem>>, vector<1x4x14xf32>
    %99 = vector.shape_cast %98 : vector<1x4x14xf32> to vector<4x14xf32>
    %cst_105 = arith.constant dense<0.000000e+00> : vector<4x224xf32>
    %100 = tpu.matmul %99, %84, %cst_105 {dimension_numbers = #tpu.dot_dimension_numbers<[1], [0], [0], [1], [0, 0, 1, 1], [], []>} : vector<4x14xf32>, vector<14x224xf32>, vector<4x224xf32> -> vector<4x224xf32>
    %c2_106 = arith.constant 2 : index
    %c0_107 = arith.constant 0 : index
    %c0_108 = arith.constant 0 : index
    %101 = vector.load %arg10[%c2_106, %c0_107, %c0_108] : memref<5x224x64xf32, #tpu.memory_space<vmem>>, vector<1x224x64xf32>
    %102 = vector.shape_cast %101 : vector<1x224x64xf32> to vector<224x64xf32>
    %cst_109 = arith.constant dense<0.000000e+00> : vector<4x64xf32>
    %103 = tpu.matmul %100, %102, %cst_109 {dimension_numbers = #tpu.dot_dimension_numbers<[1], [0], [0], [1], [0, 0, 1, 1], [], []>} : vector<4x224xf32>, vector<224x64xf32>, vector<4x64xf32> -> vector<4x64xf32>
    %104 = arith.addf %97, %103 : vector<4x64xf32>
    %c3_110 = arith.constant 3 : index
    %c0_111 = arith.constant 0 : index
    %c0_112 = arith.constant 0 : index
    %105 = vector.load %arg9[%c3_110, %c0_111, %c0_112] : memref<5x4x14xf32, #tpu.memory_space<vmem>>, vector<1x4x14xf32>
    %106 = vector.shape_cast %105 : vector<1x4x14xf32> to vector<4x14xf32>
    %cst_113 = arith.constant dense<0.000000e+00> : vector<4x224xf32>
    %107 = tpu.matmul %106, %84, %cst_113 {dimension_numbers = #tpu.dot_dimension_numbers<[1], [0], [0], [1], [0, 0, 1, 1], [], []>} : vector<4x14xf32>, vector<14x224xf32>, vector<4x224xf32> -> vector<4x224xf32>
    %c3_114 = arith.constant 3 : index
    %c0_115 = arith.constant 0 : index
    %c0_116 = arith.constant 0 : index
    %108 = vector.load %arg10[%c3_114, %c0_115, %c0_116] : memref<5x224x64xf32, #tpu.memory_space<vmem>>, vector<1x224x64xf32>
    %109 = vector.shape_cast %108 : vector<1x224x64xf32> to vector<224x64xf32>
    %cst_117 = arith.constant dense<0.000000e+00> : vector<4x64xf32>
    %110 = tpu.matmul %107, %109, %cst_117 {dimension_numbers = #tpu.dot_dimension_numbers<[1], [0], [0], [1], [0, 0, 1, 1], [], []>} : vector<4x224xf32>, vector<224x64xf32>, vector<4x64xf32> -> vector<4x64xf32>
    %111 = arith.addf %104, %110 : vector<4x64xf32>
    %c4_118 = arith.constant 4 : index
    %c0_119 = arith.constant 0 : index
    %c0_120 = arith.constant 0 : index
    %112 = vector.load %arg9[%c4_118, %c0_119, %c0_120] : memref<5x4x14xf32, #tpu.memory_space<vmem>>, vector<1x4x14xf32>
    %113 = vector.shape_cast %112 : vector<1x4x14xf32> to vector<4x14xf32>
    %cst_121 = arith.constant dense<0.000000e+00> : vector<4x224xf32>
    %114 = tpu.matmul %113, %84, %cst_121 {dimension_numbers = #tpu.dot_dimension_numbers<[1], [0], [0], [1], [0, 0, 1, 1], [], []>} : vector<4x14xf32>, vector<14x224xf32>, vector<4x224xf32> -> vector<4x224xf32>
    %c4_122 = arith.constant 4 : index
    %c0_123 = arith.constant 0 : index
    %c0_124 = arith.constant 0 : index
    %115 = vector.load %arg10[%c4_122, %c0_123, %c0_124] : memref<5x224x64xf32, #tpu.memory_space<vmem>>, vector<1x224x64xf32>
    %116 = vector.shape_cast %115 : vector<1x224x64xf32> to vector<224x64xf32>
    %cst_125 = arith.constant dense<0.000000e+00> : vector<4x64xf32>
    %117 = tpu.matmul %114, %116, %cst_125 {dimension_numbers = #tpu.dot_dimension_numbers<[1], [0], [0], [1], [0, 0, 1, 1], [], []>} : vector<4x224xf32>, vector<224x64xf32>, vector<4x64xf32> -> vector<4x64xf32>
    %118 = arith.addf %111, %117 : vector<4x64xf32>
    %c0_126 = arith.constant 0 : index
    %c0_127 = arith.constant 0 : index
    %119 = vector.load %arg11[%c0_126, %c0_127] : memref<1x64xf32, #tpu.memory_space<vmem>>, vector<1x64xf32>
    %120 = vector.broadcast %119 : vector<1x64xf32> to vector<4x64xf32>
    %121 = arith.mulf %118, %120 : vector<4x64xf32>
    %c0_128 = arith.constant 0 : index
    %c0_129 = arith.constant 0 : index
    %122 = vector.load %arg12[%c0_128, %c0_129] : memref<1x64xf32, #tpu.memory_space<vmem>>, vector<1x64xf32>
    %123 = vector.broadcast %122 : vector<1x64xf32> to vector<4x64xf32>
    %124 = arith.addf %121, %123 : vector<4x64xf32>
    %cst_130 = arith.constant 0.000000e+00 : f32
    %125 = vector.broadcast %cst_130 : f32 to vector<4x64xf32>
    %126 = arith.maximumf %124, %125 : vector<4x64xf32>
    %c0_131 = arith.constant 0 : index
    %c0_132 = arith.constant 0 : index
    %127 = vector.load %arg14[%c0_131, %c0_132] : memref<1x16xf32, #tpu.memory_space<vmem>>, vector<1x16xf32>
    %128 = vector.extract_strided_slice %126 {offsets = [0, 0], sizes = [1, 64], strides = [1, 1]} : vector<4x64xf32> to vector<1x64xf32>
    %c0_133 = arith.constant 0 : index
    %c0_134 = arith.constant 0 : index
    %129 = vector.load %arg13[%c0_133, %c0_134] : memref<128x16xf32, #tpu.memory_space<vmem>>, vector<64x16xf32>
    %cst_135 = arith.constant dense<0.000000e+00> : vector<1x16xf32>
    %130 = tpu.matmul %128, %129, %cst_135 {dimension_numbers = #tpu.dot_dimension_numbers<[1], [0], [0], [1], [0, 0, 1, 1], [], []>} : vector<1x64xf32>, vector<64x16xf32>, vector<1x16xf32> -> vector<1x16xf32>
    %131 = arith.addf %127, %130 : vector<1x16xf32>
    %132 = vector.extract_strided_slice %126 {offsets = [1, 0], sizes = [1, 64], strides = [1, 1]} : vector<4x64xf32> to vector<1x64xf32>
    %c64 = arith.constant 64 : index
    %c0_136 = arith.constant 0 : index
    %133 = vector.load %arg13[%c64, %c0_136] : memref<128x16xf32, #tpu.memory_space<vmem>>, vector<64x16xf32>
    %cst_137 = arith.constant dense<0.000000e+00> : vector<1x16xf32>
    %134 = tpu.matmul %132, %133, %cst_137 {dimension_numbers = #tpu.dot_dimension_numbers<[1], [0], [0], [1], [0, 0, 1, 1], [], []>} : vector<1x64xf32>, vector<64x16xf32>, vector<1x16xf32> -> vector<1x16xf32>
    %135 = arith.addf %131, %134 : vector<1x16xf32>
    %cst_138 = arith.constant 0.000000e+00 : f32
    %136 = vector.broadcast %cst_138 : f32 to vector<1x16xf32>
    %137 = arith.maximumf %135, %136 : vector<1x16xf32>
    %c0_139 = arith.constant 0 : index
    %c0_140 = arith.constant 0 : index
    %138 = vector.load %arg15[%c0_139, %c0_140] : memref<16x1xf32, #tpu.memory_space<vmem>>, vector<16x1xf32>
    %cst_141 = arith.constant dense<0.000000e+00> : vector<1x1xf32>
    %139 = tpu.matmul %137, %138, %cst_141 {dimension_numbers = #tpu.dot_dimension_numbers<[1], [0], [0], [1], [0, 0, 1, 1], [], []>} : vector<1x16xf32>, vector<16x1xf32>, vector<1x1xf32> -> vector<1x1xf32>
    %c0_142 = arith.constant 0 : index
    %c0_143 = arith.constant 0 : index
    %140 = vector.load %arg16[%c0_142, %c0_143] : memref<1x1xf32, #tpu.memory_space<vmem>>, vector<1x1xf32>
    %141 = arith.addf %139, %140 : vector<1x1xf32>
    %cst_144 = arith.constant 0.000000e+00 : f32
    %142 = vector.broadcast %cst_144 : f32 to vector<1x1xf32>
    %143 = arith.subf %142, %141 : vector<1x1xf32>
    %144 = math.exp %143 : vector<1x1xf32>
    %cst_145 = arith.constant 1.000000e+00 : f32
    %145 = vector.broadcast %cst_145 : f32 to vector<1x1xf32>
    %146 = arith.addf %145, %144 : vector<1x1xf32>
    %cst_146 = arith.constant 1.000000e+00 : f32
    %147 = vector.broadcast %cst_146 : f32 to vector<1x1xf32>
    %148 = arith.divf %147, %146 : vector<1x1xf32>
    %c0_147 = arith.constant 0 : index
    %c0_148 = arith.constant 0 : index
    %149 = vector.load %arg17[%c0_147, %c0_148] : memref<2x1xf32, #tpu.memory_space<vmem>>, vector<1x1xf32>
    tpu.vector_store %arg17[%c0_147, %c0_148], %148 {strides = array<i32>} : memref<2x1xf32, #tpu.memory_space<vmem>>, vector<1x1xf32>,
    %c0_149 = arith.constant 0 : index
    %c0_150 = arith.constant 0 : index
    %150 = vector.load %arg14[%c0_149, %c0_150] : memref<1x16xf32, #tpu.memory_space<vmem>>, vector<1x16xf32>
    %151 = vector.extract_strided_slice %126 {offsets = [2, 0], sizes = [1, 64], strides = [1, 1]} : vector<4x64xf32> to vector<1x64xf32>
    %c0_151 = arith.constant 0 : index
    %c0_152 = arith.constant 0 : index
    %152 = vector.load %arg13[%c0_151, %c0_152] : memref<128x16xf32, #tpu.memory_space<vmem>>, vector<64x16xf32>
    %cst_153 = arith.constant dense<0.000000e+00> : vector<1x16xf32>
    %153 = tpu.matmul %151, %152, %cst_153 {dimension_numbers = #tpu.dot_dimension_numbers<[1], [0], [0], [1], [0, 0, 1, 1], [], []>} : vector<1x64xf32>, vector<64x16xf32>, vector<1x16xf32> -> vector<1x16xf32>
    %154 = arith.addf %150, %153 : vector<1x16xf32>
    %155 = vector.extract_strided_slice %126 {offsets = [3, 0], sizes = [1, 64], strides = [1, 1]} : vector<4x64xf32> to vector<1x64xf32>
    %c64_154 = arith.constant 64 : index
    %c0_155 = arith.constant 0 : index
    %156 = vector.load %arg13[%c64_154, %c0_155] : memref<128x16xf32, #tpu.memory_space<vmem>>, vector<64x16xf32>
    %cst_156 = arith.constant dense<0.000000e+00> : vector<1x16xf32>
    %157 = tpu.matmul %155, %156, %cst_156 {dimension_numbers = #tpu.dot_dimension_numbers<[1], [0], [0], [1], [0, 0, 1, 1], [], []>} : vector<1x64xf32>, vector<64x16xf32>, vector<1x16xf32> -> vector<1x16xf32>
    %158 = arith.addf %154, %157 : vector<1x16xf32>
    %cst_157 = arith.constant 0.000000e+00 : f32
    %159 = vector.broadcast %cst_157 : f32 to vector<1x16xf32>
    %160 = arith.maximumf %158, %159 : vector<1x16xf32>
    %c0_158 = arith.constant 0 : index
    %c0_159 = arith.constant 0 : index
    %161 = vector.load %arg15[%c0_158, %c0_159] : memref<16x1xf32, #tpu.memory_space<vmem>>, vector<16x1xf32>
    %cst_160 = arith.constant dense<0.000000e+00> : vector<1x1xf32>
    %162 = tpu.matmul %160, %161, %cst_160 {dimension_numbers = #tpu.dot_dimension_numbers<[1], [0], [0], [1], [0, 0, 1, 1], [], []>} : vector<1x16xf32>, vector<16x1xf32>, vector<1x1xf32> -> vector<1x1xf32>
    %c0_161 = arith.constant 0 : index
    %c0_162 = arith.constant 0 : index
    %163 = vector.load %arg16[%c0_161, %c0_162] : memref<1x1xf32, #tpu.memory_space<vmem>>, vector<1x1xf32>
    %164 = arith.addf %162, %163 : vector<1x1xf32>
    %cst_163 = arith.constant 0.000000e+00 : f32
    %165 = vector.broadcast %cst_163 : f32 to vector<1x1xf32>
    %166 = arith.subf %165, %164 : vector<1x1xf32>
    %167 = math.exp %166 : vector<1x1xf32>
    %cst_164 = arith.constant 1.000000e+00 : f32
    %168 = vector.broadcast %cst_164 : f32 to vector<1x1xf32>
    %169 = arith.addf %168, %167 : vector<1x1xf32>
    %cst_165 = arith.constant 1.000000e+00 : f32
    %170 = vector.broadcast %cst_165 : f32 to vector<1x1xf32>
    %171 = arith.divf %170, %169 : vector<1x1xf32>
    %c1_166 = arith.constant 1 : index
    %c0_167 = arith.constant 0 : index
    %172 = vector.load %arg17[%c1_166, %c0_167] : memref<2x1xf32, #tpu.memory_space<vmem>>, vector<1x1xf32>
    tpu.vector_store %arg17[%c1_166, %c0_167], %171 {strides = array<i32>} : memref<2x1xf32, #tpu.memory_space<vmem>>, vector<1x1xf32>,
    return
  }
}

</mosaic_0001>

<llo_original>
// kernel: tpu_custom_call.1
$region0: #{tpu_custom_call.1}
  #allocation0 [shape = 'u32[]', space=smem, size = 0x4, offset = 0x4, fixed_abs, tag = 'smem constant byte address 0x4 - core index']
  #allocation1 [shape = 'u32[144,128]{1,0:T(1,128)}', space=vmem, size = 0x12000, scoped, tag = 'internal scratch']
  #allocation2 [shape = 'f32[1,1]{1,0:T(1,128)S(1)}', space=vmem, size = 0x200, scoped, tag = 'scoped memory for tpu_custom_call.1']
  %s0 = inlined_call_operand.hbm [shape: f32[80,160], index: 0, kind: input, shape index: {}]
  %s1 = inlined_call_operand.hbm [shape: f32[5,36,80], index: 1, kind: input, shape index: {}]
  %s2 = inlined_call_operand.hbm [shape: f32[5,160,288], index: 2, kind: input, shape index: {}]
  %s3 = inlined_call_operand.hbm [shape: f32[1,288], index: 3, kind: input, shape index: {}]
  %s4 = inlined_call_operand.hbm [shape: f32[1,288], index: 4, kind: input, shape index: {}]
  %s5 = inlined_call_operand.hbm [shape: f32[5,14,36], index: 5, kind: input, shape index: {}]
  %s6 = inlined_call_operand.hbm [shape: f32[5,288,224], index: 6, kind: input, shape index: {}]
  %s7 = inlined_call_operand.hbm [shape: f32[1,224], index: 7, kind: input, shape index: {}]
  %s8 = inlined_call_operand.hbm [shape: f32[1,224], index: 8, kind: input, shape index: {}]
  %s9 = inlined_call_operand.hbm [shape: f32[5,4,14], index: 9, kind: input, shape index: {}]
  %s10 = inlined_call_operand.vmem [shape: f32[5,224,64], index: 10, kind: input, shape index: {}]
  %s11 = inlined_call_operand.hbm [shape: f32[1,64], index: 11, kind: input, shape index: {}]
  %s12 = inlined_call_operand.hbm [shape: f32[1,64], index: 12, kind: input, shape index: {}]
  %s13 = inlined_call_operand.vmem [shape: f32[128,16], index: 13, kind: input, shape index: {}]
  %s14 = inlined_call_operand.hbm [shape: f32[1,16], index: 14, kind: input, shape index: {}]
  %s15 = inlined_call_operand.vmem [shape: f32[16,1], index: 15, kind: input, shape index: {}]
  %s16 = inlined_call_operand.<no memory space> [shape: f32[1,1], index: 16, kind: input, shape index: {}]
  %s17 = inlined_call_operand.vmem [shape: f32[2,1], index: 17, kind: output, shape index: {}]
  %s18 = sld [smem:[#allocation0]]
  $region130: #{tpu_custom_call.1} parent=0
    _
  %s20 = ssub.s32 1, %s18
  %s21 = scalar_select 0, %s20, %s18
  %v22 = vstv %s16
  %23 = vst [vmem:[#allocation2] sm:$0x1] %v22
  $region1: #{tpu_custom_call.1} parent=0
    #allocation3 [shape = 'u8[81920]{0}', space=vmem, size = 0x14000, scoped, tag = 'input window, operand 0, single buffered']
    #allocation4 [shape = 's32[1]{0}', space=sflag, size = 0x4, scoped, tag = 'scoped memory for tpu_custom_call.1']
    #allocation5 [shape = 'u8[102400]{0}', space=vmem, size = 0x19000, scoped, tag = 'input window, operand 1, single buffered']
    #allocation6 [shape = 's32[1]{0}', space=sflag, size = 0x4, scoped, tag = 'scoped memory for tpu_custom_call.1']
    #allocation7 [shape = 'u8[1228800]{0}', space=vmem, size = 0x12c000, scoped, tag = 'input window, operand 2, single buffered']
    #allocation8 [shape = 'u8[1536]{0}', space=vmem, size = 0x800, scoped, tag = 'input window, operand 3, single buffered']
    #allocation9 [shape = 's32[1]{0}', space=sflag, size = 0x4, scoped, tag = 'scoped memory for tpu_custom_call.1']
    #allocation10 [shape = 'u8[1536]{0}', space=vmem, size = 0x800, scoped, tag = 'input window, operand 4, single buffered']
    #allocation11 [shape = 'u8[40960]{0}', space=vmem, size = 0xa000, scoped, tag = 'input window, operand 5, single buffered']
    #allocation12 [shape = 's32[1]{0}', space=sflag, size = 0x4, scoped, tag = 'scoped memory for tpu_custom_call.1']
    #allocation13 [shape = 'u8[1474560]{0}', space=vmem, size = 0x168000, scoped, tag = 'input window, operand 6, single buffered']
    #allocation14 [shape = 'u8[1024]{0}', space=vmem, size = 0x400, scoped, tag = 'input window, operand 7, single buffered']
    #allocation15 [shape = 's32[1]{0}', space=sflag, size = 0x4, scoped, tag = 'scoped memory for tpu_custom_call.1']
    #allocation16 [shape = 'u8[1024]{0}', space=vmem, size = 0x400, scoped, tag = 'input window, operand 8, single buffered']
    #allocation17 [shape = 'u8[10240]{0}', space=vmem, size = 0x2800, scoped, tag = 'input window, operand 9, single buffered']
    #allocation18 [shape = 's32[1]{0}', space=sflag, size = 0x4, scoped, tag = 'scoped memory for tpu_custom_call.1']
    #allocation19 [shape = 'u8[512]{0}', space=vmem, size = 0x400, scoped, tag = 'input window, operand 11, single buffered']
    #allocation20 [shape = 'u8[512]{0}', space=vmem, size = 0x400, scoped, tag = 'input window, operand 12, single buffered']
    #allocation21 [shape = 's32[1]{0}', space=sflag, size = 0x4, scoped, tag = 'scoped memory for tpu_custom_call.1']
    #allocation22 [shape = 'u8[512]{0}', space=vmem, size = 0x400, scoped, tag = 'input window, operand 14, single buffered']
    %24 = vsyncpa [#allocation4], 0
    %25 = vsyncpa [#allocation6], 0
    %26 = vsyncpa [#allocation9], 0
    %27 = vsyncpa [#allocation12], 0
    %28 = vsyncpa [#allocation15], 0
    %29 = vsyncpa [#allocation18], 0
    %30 = vsyncpa [#allocation21], 0
    // Predicated region
    $region2: #{tpu_custom_call.1} parent=1 // pred_check
      _
    $region3: #{tpu_custom_call.1} parent=1 // pred_check_branch
      %32 = sbr.rel (0) target = $region5
    $region4: #{tpu_custom_call.1} parent=1 // pred_region
      %s34 = ssub.s32 2560, 2560
      %35 = vsyncadd [#allocation4], %s34
      %s36 = sshll.u32 [#allocation3], 4
      %s37 = int_to_ptr.vmem [resolvable:$true] %s36
      %42 = dma.hbm_to_vmem [thread:$0]  %s0, 2560, %s37, [#allocation4], 256, 256, 16
    $region5: #{tpu_custom_call.1} parent=1 // pred_fallthru
      _
    // Predicated region
    $region6: #{tpu_custom_call.1} parent=1 // pred_check
      _
    $region7: #{tpu_custom_call.1} parent=1 // pred_check_branch
      %44 = sbr.rel (0) target = $region9
    $region8: #{tpu_custom_call.1} parent=1 // pred_region
      %s46 = ssub.s32 3200, 3200
      %47 = vsyncadd [#allocation6], %s46
      %s48 = sshll.u32 [#allocation5], 4
      %s49 = int_to_ptr.vmem [resolvable:$true] %s48
      %54 = dma.hbm_to_vmem [thread:$0]  %s1, 3200, %s49, [#allocation6], 128, 128, 8
    $region9: #{tpu_custom_call.1} parent=1 // pred_fallthru
      _
    // Predicated region
    $region10: #{tpu_custom_call.1} parent=1 // pred_check
      _
    $region11: #{tpu_custom_call.1} parent=1 // pred_check_branch
      %56 = sbr.rel (0) target = $region13
    $region12: #{tpu_custom_call.1} parent=1 // pred_region
      %s58 = ssub.s32 38400, 38400
      %59 = vsyncadd [#allocation6], %s58
      %s60 = sshll.u32 [#allocation7], 4
      %s61 = int_to_ptr.vmem [resolvable:$true] %s60
      %66 = dma.hbm_to_vmem [thread:$0]  %s2, 38400, %s61, [#allocation6], 384, 384, 24
    $region13: #{tpu_custom_call.1} parent=1 // pred_fallthru
      _
    // Predicated region
    $region14: #{tpu_custom_call.1} parent=1 // pred_check
      _
    $region15: #{tpu_custom_call.1} parent=1 // pred_check_branch
      %68 = sbr.rel (0) target = $region17
    $region16: #{tpu_custom_call.1} parent=1 // pred_region
      %s70 = ssub.s32 48, 48
      %71 = vsyncadd [#allocation9], %s70
      %s73 = sshll.u32 [#allocation8], 4
      %s74 = int_to_ptr.vmem [resolvable:$true] %s73
      %76 = dma.hbm_to_vmem [thread:$0]  %s3, 48, %s74, [#allocation9]
    $region17: #{tpu_custom_call.1} parent=1 // pred_fallthru
      _
    // Predicated region
    $region18: #{tpu_custom_call.1} parent=1 // pred_check
      _
    $region19: #{tpu_custom_call.1} parent=1 // pred_check_branch
      %78 = sbr.rel (0) target = $region21
    $region20: #{tpu_custom_call.1} parent=1 // pred_region
      %s80 = ssub.s32 48, 48
      %81 = vsyncadd [#allocation9], %s80
      %s83 = sshll.u32 [#allocation10], 4
      %s84 = int_to_ptr.vmem [resolvable:$true] %s83
      %86 = dma.hbm_to_vmem [thread:$0]  %s4, 48, %s84, [#allocation9]
    $region21: #{tpu_custom_call.1} parent=1 // pred_fallthru
      _
    // Predicated region
    $region22: #{tpu_custom_call.1} parent=1 // pred_check
      _
    $region23: #{tpu_custom_call.1} parent=1 // pred_check_branch
      %88 = sbr.rel (0) target = $region25
    $region24: #{tpu_custom_call.1} parent=1 // pred_region
      %s90 = ssub.s32 1280, 1280
      %91 = vsyncadd [#allocation12], %s90
      %s92 = sshll.u32 [#allocation11], 4
      %s93 = int_to_ptr.vmem [resolvable:$true] %s92
      %98 = dma.hbm_to_vmem [thread:$0]  %s5, 1280, %s93, [#allocation12], 128, 128, 8
    $region25: #{tpu_custom_call.1} parent=1 // pred_fallthru
      _
    // Predicated region
    $region26: #{tpu_custom_call.1} parent=1 // pred_check
      _
    $region27: #{tpu_custom_call.1} parent=1 // pred_check_branch
      %100 = sbr.rel (0) target = $region29
    $region28: #{tpu_custom_call.1} parent=1 // pred_region
      %s102 = ssub.s32 46080, 46080
      %103 = vsyncadd [#allocation12], %s102
      %s104 = sshll.u32 [#allocation13], 4
      %s105 = int_to_ptr.vmem [resolvable:$true] %s104
      %110 = dma.hbm_to_vmem [thread:$0]  %s6, 46080, %s105, [#allocation12], 256, 256, 16
    $region29: #{tpu_custom_call.1} parent=1 // pred_fallthru
      _
    // Predicated region
    $region30: #{tpu_custom_call.1} parent=1 // pred_check
      _
    $region31: #{tpu_custom_call.1} parent=1 // pred_check_branch
      %112 = sbr.rel (0) target = $region33
    $region32: #{tpu_custom_call.1} parent=1 // pred_region
      %s114 = ssub.s32 32, 32
      %115 = vsyncadd [#allocation15], %s114
      %s117 = sshll.u32 [#allocation14], 4
      %s118 = int_to_ptr.vmem [resolvable:$true] %s117
      %120 = dma.hbm_to_vmem [thread:$0]  %s7, 32, %s118, [#allocation15]
    $region33: #{tpu_custom_call.1} parent=1 // pred_fallthru
      _
    // Predicated region
    $region34: #{tpu_custom_call.1} parent=1 // pred_check
      _
    $region35: #{tpu_custom_call.1} parent=1 // pred_check_branch
      %122 = sbr.rel (0) target = $region37
    $region36: #{tpu_custom_call.1} parent=1 // pred_region
      %s124 = ssub.s32 32, 32
      %125 = vsyncadd [#allocation15], %s124
      %s127 = sshll.u32 [#allocation16], 4
      %s128 = int_to_ptr.vmem [resolvable:$true] %s127
      %130 = dma.hbm_to_vmem [thread:$0]  %s8, 32, %s128, [#allocation15]
    $region37: #{tpu_custom_call.1} parent=1 // pred_fallthru
      _
    // Predicated region
    $region38: #{tpu_custom_call.1} parent=1 // pred_check
      _
    $region39: #{tpu_custom_call.1} parent=1 // pred_check_branch
      %132 = sbr.rel (0) target = $region41
    $region40: #{tpu_custom_call.1} parent=1 // pred_region
      %s134 = ssub.s32 320, 320
      %135 = vsyncadd [#allocation18], %s134
      %s136 = sshll.u32 [#allocation17], 4
      %s137 = int_to_ptr.vmem [resolvable:$true] %s136
      %142 = dma.hbm_to_vmem [thread:$0]  %s9, 320, %s137, [#allocation18], 64, 64, 4
    $region41: #{tpu_custom_call.1} parent=1 // pred_fallthru
      _
    // Predicated region
    $region42: #{tpu_custom_call.1} parent=1 // pred_check
      _
    $region43: #{tpu_custom_call.1} parent=1 // pred_check_branch
      %144 = sbr.rel (0) target = $region45
    $region44: #{tpu_custom_call.1} parent=1 // pred_region
      _
    $region45: #{tpu_custom_call.1} parent=1 // pred_fallthru
      _
    // Predicated region
    $region46: #{tpu_custom_call.1} parent=1 // pred_check
      _
    $region47: #{tpu_custom_call.1} parent=1 // pred_check_branch
      %146 = sbr.rel (0) target = $region49
    $region48: #{tpu_custom_call.1} parent=1 // pred_region
      %s148 = ssub.s32 16, 16
      %149 = vsyncadd [#allocation18], %s148
      %s151 = sshll.u32 [#allocation19], 4
      %s152 = int_to_ptr.vmem [resolvable:$true] %s151
      %154 = dma.hbm_to_vmem [thread:$0]  %s11, 16, %s152, [#allocation18]
    $region49: #{tpu_custom_call.1} parent=1 // pred_fallthru
      _
    // Predicated region
    $region50: #{tpu_custom_call.1} parent=1 // pred_check
      _
    $region51: #{tpu_custom_call.1} parent=1 // pred_check_branch
      %156 = sbr.rel (0) target = $region53
    $region52: #{tpu_custom_call.1} parent=1 // pred_region
      %s158 = ssub.s32 16, 16
      %159 = vsyncadd [#allocation21], %s158
      %s161 = sshll.u32 [#allocation20], 4
      %s162 = int_to_ptr.vmem [resolvable:$true] %s161
      %164 = dma.hbm_to_vmem [thread:$0]  %s12, 16, %s162, [#allocation21]
    $region53: #{tpu_custom_call.1} parent=1 // pred_fallthru
      _
    // Predicated region
    $region54: #{tpu_custom_call.1} parent=1 // pred_check
      _
    $region55: #{tpu_custom_call.1} parent=1 // pred_check_branch
      %166 = sbr.rel (0) target = $region57
    $region56: #{tpu_custom_call.1} parent=1 // pred_region
      _
    $region57: #{tpu_custom_call.1} parent=1 // pred_fallthru
      _
    // Predicated region
    $region58: #{tpu_custom_call.1} parent=1 // pred_check
      _
    $region59: #{tpu_custom_call.1} parent=1 // pred_check_branch
      %168 = sbr.rel (0) target = $region61
    $region60: #{tpu_custom_call.1} parent=1 // pred_region
      %s170 = ssub.s32 16, 16
      %171 = vsyncadd [#allocation21], %s170
      %s173 = sshll.u32 [#allocation22], 4
      %s174 = int_to_ptr.vmem [resolvable:$true] %s173
      %176 = dma.hbm_to_vmem [thread:$0]  %s14, 16, %s174, [#allocation21]
    $region61: #{tpu_custom_call.1} parent=1 // pred_fallthru
      _
    // Predicated region
    $region62: #{tpu_custom_call.1} parent=1 // pred_check
      _
    $region63: #{tpu_custom_call.1} parent=1 // pred_check_branch
      %178 = sbr.rel (0) target = $region65
    $region64: #{tpu_custom_call.1} parent=1 // pred_region
      _
    $region65: #{tpu_custom_call.1} parent=1 // pred_fallthru
      _
    // Predicated region
    $region66: #{tpu_custom_call.1} parent=1 // pred_check
      _
    $region67: #{tpu_custom_call.1} parent=1 // pred_check_branch
      %180 = sbr.rel (0) target = $region69
    $region68: #{tpu_custom_call.1} parent=1 // pred_region
      _
    $region69: #{tpu_custom_call.1} parent=1 // pred_fallthru
      _
    // Predicated region
    $region70: #{tpu_custom_call.1} parent=1 // pred_check
      _
    $region71: #{tpu_custom_call.1} parent=1 // pred_check_branch
      %182 = sbr.rel (0) target = $region73
    $region72: #{tpu_custom_call.1} parent=1 // pred_region
      %183 = dma.done [#allocation4], 2560
    $region73: #{tpu_custom_call.1} parent=1 // pred_fallthru
      _
    // Predicated region
    $region74: #{tpu_custom_call.1} parent=1 // pred_check
      _
    $region75: #{tpu_custom_call.1} parent=1 // pred_check_branch
      %185 = sbr.rel (0) target = $region77
    $region76: #{tpu_custom_call.1} parent=1 // pred_region
      %186 = dma.done [#allocation6], 3200
    $region77: #{tpu_custom_call.1} parent=1 // pred_fallthru
      _
    // Predicated region
    $region78: #{tpu_custom_call.1} parent=1 // pred_check
      _
    $region79: #{tpu_custom_call.1} parent=1 // pred_check_branch
      %188 = sbr.rel (0) target = $region81
    $region80: #{tpu_custom_call.1} parent=1 // pred_region
      %189 = dma.done [#allocation6], 38400
    $region81: #{tpu_custom_call.1} parent=1 // pred_fallthru
      _
    // Predicated region
    $region82: #{tpu_custom_call.1} parent=1 // pred_check
      _
    $region83: #{tpu_custom_call.1} parent=1 // pred_check_branch
      %191 = sbr.rel (0) target = $region85
    $region84: #{tpu_custom_call.1} parent=1 // pred_region
      %192 = dma.done [#allocation9], 48
    $region85: #{tpu_custom_call.1} parent=1 // pred_fallthru
      _
    // Predicated region
    $region86: #{tpu_custom_call.1} parent=1 // pred_check
      _
    $region87: #{tpu_custom_call.1} parent=1 // pred_check_branch
      %194 = sbr.rel (0) target = $region89
    $region88: #{tpu_custom_call.1} parent=1 // pred_region
      %195 = dma.done [#allocation9], 48
    $region89: #{tpu_custom_call.1} parent=1 // pred_fallthru
      _
    // Predicated region
    $region90: #{tpu_custom_call.1} parent=1 // pred_check
      _
    $region91: #{tpu_custom_call.1} parent=1 // pred_check_branch
      %197 = sbr.rel (0) target = $region93
    $region92: #{tpu_custom_call.1} parent=1 // pred_region
      %198 = dma.done [#allocation12], 1280
    $region93: #{tpu_custom_call.1} parent=1 // pred_fallthru
      _
    // Predicated region
    $region94: #{tpu_custom_call.1} parent=1 // pred_check
      _
    $region95: #{tpu_custom_call.1} parent=1 // pred_check_branch
      %200 = sbr.rel (0) target = $region97
    $region96: #{tpu_custom_call.1} parent=1 // pred_region
      %201 = dma.done [#allocation12], 46080
    $region97: #{tpu_custom_call.1} parent=1 // pred_fallthru
      _
    // Predicated region
    $region98: #{tpu_custom_call.1} parent=1 // pred_check
      _
    $region99: #{tpu_custom_call.1} parent=1 // pred_check_branch
      %203 = sbr.rel (0) target = $region101
    $region100: #{tpu_custom_call.1} parent=1 // pred_region
      %204 = dma.done [#allocation15], 32
    $region101: #{tpu_custom_call.1} parent=1 // pred_fallthru
      _
    // Predicated region
    $region102: #{tpu_custom_call.1} parent=1 // pred_check
      _
    $region103: #{tpu_custom_call.1} parent=1 // pred_check_branch
      %206 = sbr.rel (0) target = $region105
    $region104: #{tpu_custom_call.1} parent=1 // pred_region
      %207 = dma.done [#allocation15], 32
    $region105: #{tpu_custom_call.1} parent=1 // pred_fallthru
      _
    // Predicated region
    $region106: #{tpu_custom_call.1} parent=1 // pred_check
      _
    $region107: #{tpu_custom_call.1} parent=1 // pred_check_branch
      %209 = sbr.rel (0) target = $region109
    $region108: #{tpu_custom_call.1} parent=1 // pred_region
      %210 = dma.done [#allocation18], 320
    $region109: #{tpu_custom_call.1} parent=1 // pred_fallthru
      _
    // Predicated region
    $region110: #{tpu_custom_call.1} parent=1 // pred_check
      _
    $region111: #{tpu_custom_call.1} parent=1 // pred_check_branch
      %212 = sbr.rel (0) target = $region113
    $region112: #{tpu_custom_call.1} parent=1 // pred_region
      %213 = dma.done [#allocation18], 16
    $region113: #{tpu_custom_call.1} parent=1 // pred_fallthru
      _
    // Predicated region
    $region114: #{tpu_custom_call.1} parent=1 // pred_check
      _
    $region115: #{tpu_custom_call.1} parent=1 // pred_check_branch
      %215 = sbr.rel (0) target = $region117
    $region116: #{tpu_custom_call.1} parent=1 // pred_region
      %216 = dma.done [#allocation21], 16
    $region117: #{tpu_custom_call.1} parent=1 // pred_fallthru
      _
    // Predicated region
    $region118: #{tpu_custom_call.1} parent=1 // pred_check
      _
    $region119: #{tpu_custom_call.1} parent=1 // pred_check_branch
      %218 = sbr.rel (0) target = $region121
    $region120: #{tpu_custom_call.1} parent=1 // pred_region
      %219 = dma.done [#allocation21], 16
    $region121: #{tpu_custom_call.1} parent=1 // pred_fallthru
      _
    %v220 = vld [vmem:[#allocation3] sm:$0xff]
    %v221 = vld [vmem:[#allocation3 + $0x8] sm:$0xff]
    %v222 = vld [vmem:[#allocation3 + $0x10] sm:$0xff]
    %v223 = vld [vmem:[#allocation3 + $0x18] sm:$0xff]
    %v224 = vld [vmem:[#allocation3 + $0x20] sm:$0xff]
    %v225 = vld [vmem:[#allocation3 + $0x28] sm:$0xff]
    %v226 = vld [vmem:[#allocation3 + $0x30] sm:$0xff]
    %v227 = vld [vmem:[#allocation3 + $0x38] sm:$0xff]
    %v228 = vld [vmem:[#allocation3 + $0x40] sm:$0xff]
    %v229 = vld [vmem:[#allocation3 + $0x48] sm:$0xff]
    %v230 = vld [vmem:[#allocation3 + $0x50] sm:$0xff]
    %v231 = vld [vmem:[#allocation3 + $0x58] sm:$0xff]
    %v232 = vld [vmem:[#allocation3 + $0x60] sm:$0xff]
    %v233 = vld [vmem:[#allocation3 + $0x68] sm:$0xff]
    %v234 = vld [vmem:[#allocation3 + $0x70] sm:$0xff]
    %v235 = vld [vmem:[#allocation3 + $0x78] sm:$0xff]
    %v236 = vld [vmem:[#allocation3 + $0x80] sm:$0xff]
    %v237 = vld [vmem:[#allocation3 + $0x88] sm:$0xff]
    %v238 = vld [vmem:[#allocation3 + $0x90] sm:$0xff]
    %v239 = vld [vmem:[#allocation3 + $0x98] sm:$0xff]
    %v240 = vld [vmem:[#allocation5] sm:$0xff]
    %v241 = vld [vmem:[#allocation5 + $0x8] sm:$0xff]
    %v242 = vld [vmem:[#allocation5 + $0x10] sm:$0xff]
    %v243 = vld [vmem:[#allocation5 + $0x18] sm:$0xff]
    %v244 = vld [vmem:[#allocation5 + $0x20] sm:$0xf]
    %vm245 = vcmask 654336
    %v247 = vsel %vm245, %v240, 0
    %v250 = vsel %vm245, %v241, 0
    %v253 = vsel %vm245, %v242, 0
    %v256 = vsel %vm245, %v243, 0
    %v259 = vsel %vm245, %v244, 0
    %261 = vmatprep.subr.mxu0 0.0
    %262 = vmatpush1.msra.mxu0 0.0
    %263 = vmatprep.subr.mxu0 0.0
    %264 = vmatpush1.msra.mxu0 0.0
    %265 = vmatprep.subr.mxu0 0.0
    %266 = vmatpush1.msra.mxu0 0.0
    %267 = vmatprep.subr.mxu0 0.0
    %268 = vmatpush1.msra.mxu0 0.0
    %269 = vmatprep.subr.mxu0 0.0
    %270 = vmatpush1.msra.mxu0 0.0
    %271 = vmatprep.subr.mxu0 0.0
    %272 = vmatpush1.msra.mxu0 0.0
    %273 = vmatprep.subr.mxu0 %v239
    %274 = vmatpush1.msra.mxu0 %v238
    %275 = vmatprep.subr.mxu0 %v237
    %276 = vmatpush1.msra.mxu0 %v236
    %277 = vmatprep.subr.mxu0 %v235
    %278 = vmatpush1.msra.mxu0 %v234
    %279 = vmatprep.subr.mxu0 %v233
    %280 = vmatpush1.msra.mxu0 %v232
    %281 = vmatprep.subr.mxu0 %v231
    %282 = vmatpush1.msra.mxu0 %v230
    %283 = vmatprep.subr.mxu0 %v229
    %284 = vmatpush1.msra.mxu0 %v228
    %285 = vmatprep.subr.mxu0 %v227
    %286 = vmatpush1.msra.mxu0 %v226
    %287 = vmatprep.subr.mxu0 %v225
    %288 = vmatpush1.msra.mxu0 %v224
    %289 = vmatprep.subr.mxu0 %v223
    %290 = vmatpush1.msra.mxu0 %v222
    %291 = vmatprep.subr.mxu0 %v221
    %292 = vmatpush1.msra.mxu0 %v220
    %293 = vmatprep.subr.mxu0 0.0
    %294 = vmatpush2.msra.mxu0 0.0
    %295 = vmatprep.subr.mxu0 0.0
    %296 = vmatpush2.msra.mxu0 0.0
    %297 = vmatprep.subr.mxu0 0.0
    %298 = vmatpush2.msra.mxu0 0.0
    %299 = vmatprep.subr.mxu0 0.0
    %300 = vmatpush2.msra.mxu0 0.0
    %301 = vmatprep.subr.mxu0 0.0
    %302 = vmatpush2.msra.mxu0 0.0
    %303 = vmatprep.subr.mxu0 0.0
    %304 = vmatpush2.msra.mxu0 0.0
    %305 = vmatprep.subr.mxu0 0.0
    %306 = vmatpush2.msra.mxu0 0.0
    %307 = vmatprep.subr.mxu0 0.0
    %308 = vmatpush2.msra.mxu0 0.0
    %309 = vmatprep.subr.mxu0 0.0
    %310 = vmatpush2.msra.mxu0 0.0
    %311 = vmatprep.subr.mxu0 0.0
    %312 = vmatpush2.msra.mxu0 0.0
    %313 = vmatprep.subr.mxu0 0.0
    %314 = vmatpush2.msra.mxu0 0.0
    %315 = vmatprep.subr.mxu0 0.0
    %316 = vmatpush2.msra.mxu0 0.0
    %317 = vmatprep.subr.mxu0 0.0
    %318 = vmatpush2.msra.mxu0 0.0
    %319 = vmatprep.subr.mxu0 0.0
    %320 = vmatpush2.msra.mxu0 0.0
    %321 = vmatprep.subr.mxu0 0.0
    %322 = vmatpush2.msra.mxu0 0.0
    %323 = vmatprep.subr.mxu0 0.0
    %324 = vmatpush2.msra.mxu0 0.0
    %325 = vmatprep.mubr.f32.mxu0 0.0
    %326 = vmatmul.mubr.f32.gmra.mxu0 %v247
    %v327 = vpop.f32.mrf.mxu0
    %v328 = vadd.f32 0.0, %v327
    %v329 = vpop.f32.mrf.mxu0
    %v330 = vadd.f32 0.0, %v329
    %331 = vmatprep.mubr.f32.mxu0 0.0
    %332 = vmatmul.mubr.f32.gmra.mxu0 %v250
    %v333 = vpop.f32.mrf.mxu0
    %v334 = vadd.f32 0.0, %v333
    %v335 = vpop.f32.mrf.mxu0
    %v336 = vadd.f32 0.0, %v335
    %337 = vmatprep.mubr.f32.mxu0 0.0
    %338 = vmatmul.mubr.f32.gmra.mxu0 %v253
    %v339 = vpop.f32.mrf.mxu0
    %v340 = vadd.f32 0.0, %v339
    %v341 = vpop.f32.mrf.mxu0
    %v342 = vadd.f32 0.0, %v341
    %343 = vmatprep.mubr.f32.mxu0 0.0
    %344 = vmatmul.mubr.f32.gmra.mxu0 %v256
    %v345 = vpop.f32.mrf.mxu0
    %v346 = vadd.f32 0.0, %v345
    %v347 = vpop.f32.mrf.mxu0
    %v348 = vadd.f32 0.0, %v347
    %349 = vmatprep.mubr.f32.mxu0 0.0
    %350 = vmatmul.mubr.f32.gmra.mxu0 %v259
    %v351 = vpop.f32.mrf.mxu0
    %v352 = vadd.f32 0.0, %v351
    %v353 = vpop.f32.mrf.mxu0
    %v354 = vadd.f32 0.0, %v353
    %355 = vdwg.mxu0
    %v356 = vld [vmem:[#allocation7] sm:$0xff]
    %v357 = vld [vmem:[#allocation7 + $0x8] sm:$0xff]
    %v358 = vld [vmem:[#allocation7 + $0x10] sm:$0xff]
    %v359 = vld [vmem:[#allocation7 + $0x18] sm:$0xff]
    %v360 = vld [vmem:[#allocation7 + $0x20] sm:$0xff]
    %v361 = vld [vmem:[#allocation7 + $0x28] sm:$0xff]
    %v362 = vld [vmem:[#allocation7 + $0x30] sm:$0xff]
    %v363 = vld [vmem:[#allocation7 + $0x38] sm:$0xff]
    %v364 = vld [vmem:[#allocation7 + $0x40] sm:$0xff]
    %v365 = vld [vmem:[#allocation7 + $0x48] sm:$0xff]
    %v366 = vld [vmem:[#allocation7 + $0x50] sm:$0xff]
    %v367 = vld [vmem:[#allocation7 + $0x58] sm:$0xff]
    %v368 = vld [vmem:[#allocation7 + $0x60] sm:$0xff]
    %v369 = vld [vmem:[#allocation7 + $0x68] sm:$0xff]
    %v370 = vld [vmem:[#allocation7 + $0x70] sm:$0xff]
    %v371 = vld [vmem:[#allocation7 + $0x78] sm:$0xff]
    %v372 = vld [vmem:[#allocation7 + $0x80] sm:$0xff]
    %v373 = vld [vmem:[#allocation7 + $0x88] sm:$0xff]
    %v374 = vld [vmem:[#allocation7 + $0x90] sm:$0xff]
    %v375 = vld [vmem:[#allocation7 + $0x98] sm:$0xff]
    %v376 = vld [vmem:[#allocation7 + $0xa0] sm:$0xff]
    %v377 = vld [vmem:[#allocation7 + $0xa8] sm:$0xff]
    %v378 = vld [vmem:[#allocation7 + $0xb0] sm:$0xff]
    %v379 = vld [vmem:[#allocation7 + $0xb8] sm:$0xff]
    %v380 = vld [vmem:[#allocation7 + $0xc0] sm:$0xff]
    %v381 = vld [vmem:[#allocation7 + $0xc8] sm:$0xff]
    %v382 = vld [vmem:[#allocation7 + $0xd0] sm:$0xff]
    %v383 = vld [vmem:[#allocation7 + $0xd8] sm:$0xff]
    %v384 = vld [vmem:[#allocation7 + $0xe0] sm:$0xff]
    %v385 = vld [vmem:[#allocation7 + $0xe8] sm:$0xff]
    %v386 = vld [vmem:[#allocation7 + $0xf0] sm:$0xff]
    %v387 = vld [vmem:[#allocation7 + $0xf8] sm:$0xff]
    %v388 = vld [vmem:[#allocation7 + $0x100] sm:$0xff]
    %v389 = vld [vmem:[#allocation7 + $0x108] sm:$0xff]
    %v390 = vld [vmem:[#allocation7 + $0x110] sm:$0xff]
    %v391 = vld [vmem:[#allocation7 + $0x118] sm:$0xff]
    %v392 = vld [vmem:[#allocation7 + $0x120] sm:$0xff]
    %v393 = vld [vmem:[#allocation7 + $0x128] sm:$0xff]
    %v394 = vld [vmem:[#allocation7 + $0x130] sm:$0xff]
    %v395 = vld [vmem:[#allocation7 + $0x138] sm:$0xff]
    %v396 = vld [vmem:[#allocation7 + $0x140] sm:$0xff]
    %v397 = vld [vmem:[#allocation7 + $0x148] sm:$0xff]
    %v398 = vld [vmem:[#allocation7 + $0x150] sm:$0xff]
    %v399 = vld [vmem:[#allocation7 + $0x158] sm:$0xff]
    %v400 = vld [vmem:[#allocation7 + $0x160] sm:$0xff]
    %v401 = vld [vmem:[#allocation7 + $0x168] sm:$0xff]
    %v402 = vld [vmem:[#allocation7 + $0x170] sm:$0xff]
    %v403 = vld [vmem:[#allocation7 + $0x178] sm:$0xff]
    %v404 = vld [vmem:[#allocation7 + $0x180] sm:$0xff]
    %v405 = vld [vmem:[#allocation7 + $0x188] sm:$0xff]
    %v406 = vld [vmem:[#allocation7 + $0x190] sm:$0xff]
    %v407 = vld [vmem:[#allocation7 + $0x198] sm:$0xff]
    %v408 = vld [vmem:[#allocation7 + $0x1a0] sm:$0xff]
    %v409 = vld [vmem:[#allocation7 + $0x1a8] sm:$0xff]
    %v410 = vld [vmem:[#allocation7 + $0x1b0] sm:$0xff]
    %v411 = vld [vmem:[#allocation7 + $0x1b8] sm:$0xff]
    %v412 = vld [vmem:[#allocation7 + $0x1c0] sm:$0xff]
    %v413 = vld [vmem:[#allocation7 + $0x1c8] sm:$0xff]
    %v414 = vld [vmem:[#allocation7 + $0x1d0] sm:$0xff]
    %v415 = vld [vmem:[#allocation7 + $0x1d8] sm:$0xff]
    %s416 = scalar_lea.vmem [#allocation5], 40
    %v417 = vld [vmem:[%s416] sm:$0xff]
    %v418 = vld [vmem:[%s416 + $0x8] sm:$0xff]
    %v419 = vld [vmem:[%s416 + $0x10] sm:$0xff]
    %v420 = vld [vmem:[%s416 + $0x18] sm:$0xff]
    %v421 = vld [vmem:[%s416 + $0x20] sm:$0xf]
    %v423 = vsel %vm245, %v417, 0
    %v426 = vsel %vm245, %v418, 0
    %v429 = vsel %vm245, %v419, 0
    %v432 = vsel %vm245, %v420, 0
    %v435 = vsel %vm245, %v421, 0
    %437 = vmatprep.subr.mxu0 0.0
    %438 = vmatpush1.msra.mxu0 0.0
    %439 = vmatprep.subr.mxu0 0.0
    %440 = vmatpush1.msra.mxu0 0.0
    %441 = vmatprep.subr.mxu0 0.0
    %442 = vmatpush1.msra.mxu0 0.0
    %443 = vmatprep.subr.mxu0 0.0
    %444 = vmatpush1.msra.mxu0 0.0
    %445 = vmatprep.subr.mxu0 0.0
    %446 = vmatpush1.msra.mxu0 0.0
    %447 = vmatprep.subr.mxu0 0.0
    %448 = vmatpush1.msra.mxu0 0.0
    %449 = vmatprep.subr.mxu0 %v239
    %450 = vmatpush1.msra.mxu0 %v238
    %451 = vmatprep.subr.mxu0 %v237
    %452 = vmatpush1.msra.mxu0 %v236
    %453 = vmatprep.subr.mxu0 %v235
    %454 = vmatpush1.msra.mxu0 %v234
    %455 = vmatprep.subr.mxu0 %v233
    %456 = vmatpush1.msra.mxu0 %v232
    %457 = vmatprep.subr.mxu0 %v231
    %458 = vmatpush1.msra.mxu0 %v230
    %459 = vmatprep.subr.mxu0 %v229
    %460 = vmatpush1.msra.mxu0 %v228
    %461 = vmatprep.subr.mxu0 %v227
    %462 = vmatpush1.msra.mxu0 %v226
    %463 = vmatprep.subr.mxu0 %v225
    %464 = vmatpush1.msra.mxu0 %v224
    %465 = vmatprep.subr.mxu0 %v223
    %466 = vmatpush1.msra.mxu0 %v222
    %467 = vmatprep.subr.mxu0 %v221
    %468 = vmatpush1.msra.mxu0 %v220
    %469 = vmatprep.subr.mxu0 0.0
    %470 = vmatpush2.msra.mxu0 0.0
    %471 = vmatprep.subr.mxu0 0.0
    %472 = vmatpush2.msra.mxu0 0.0
    %473 = vmatprep.subr.mxu0 0.0
    %474 = vmatpush2.msra.mxu0 0.0
    %475 = vmatprep.subr.mxu0 0.0
    %476 = vmatpush2.msra.mxu0 0.0
    %477 = vmatprep.subr.mxu0 0.0
    %478 = vmatpush2.msra.mxu0 0.0
    %479 = vmatprep.subr.mxu0 0.0
    %480 = vmatpush2.msra.mxu0 0.0
    %481 = vmatprep.subr.mxu0 0.0
    %482 = vmatpush2.msra.mxu0 0.0
    %483 = vmatprep.subr.mxu0 0.0
    %484 = vmatpush2.msra.mxu0 0.0
    %485 = vmatprep.subr.mxu0 0.0
    %486 = vmatpush2.msra.mxu0 0.0
    %487 = vmatprep.subr.mxu0 0.0
    %488 = vmatpush2.msra.mxu0 0.0
    %489 = vmatprep.subr.mxu0 0.0
    %490 = vmatpush2.msra.mxu0 0.0
    %491 = vmatprep.subr.mxu0 0.0
    %492 = vmatpush2.msra.mxu0 0.0
    %493 = vmatprep.subr.mxu0 0.0
    %494 = vmatpush2.msra.mxu0 0.0
    %495 = vmatprep.subr.mxu0 0.0
    %496 = vmatpush2.msra.mxu0 0.0
    %497 = vmatprep.subr.mxu0 0.0
    %498 = vmatpush2.msra.mxu0 0.0
    %499 = vmatprep.subr.mxu0 0.0
    %500 = vmatpush2.msra.mxu0 0.0
    %501 = vmatprep.mubr.f32.mxu0 0.0
    %502 = vmatmul.mubr.f32.gmra.mxu0 %v423
    %v503 = vpop.f32.mrf.mxu0
    %v504 = vadd.f32 0.0, %v503
    %v505 = vpop.f32.mrf.mxu0
    %v506 = vadd.f32 0.0, %v505
    %507 = vmatprep.mubr.f32.mxu0 0.0
    %508 = vmatmul.mubr.f32.gmra.mxu0 %v426
    %v509 = vpop.f32.mrf.mxu0
    %v510 = vadd.f32 0.0, %v509
    %v511 = vpop.f32.mrf.mxu0
    %v512 = vadd.f32 0.0, %v511
    %513 = vmatprep.mubr.f32.mxu0 0.0
    %514 = vmatmul.mubr.f32.gmra.mxu0 %v429
    %v515 = vpop.f32.mrf.mxu0
    %v516 = vadd.f32 0.0, %v515
    %v517 = vpop.f32.mrf.mxu0
    %v518 = vadd.f32 0.0, %v517
    %519 = vmatprep.mubr.f32.mxu0 0.0
    %520 = vmatmul.mubr.f32.gmra.mxu0 %v432
    %v521 = vpop.f32.mrf.mxu0
    %v522 = vadd.f32 0.0, %v521
    %v523 = vpop.f32.mrf.mxu0
    %v524 = vadd.f32 0.0, %v523
    %525 = vmatprep.mubr.f32.mxu0 0.0
    %526 = vmatmul.mubr.f32.gmra.mxu0 %v435
    %v527 = vpop.f32.mrf.mxu0
    %v528 = vadd.f32 0.0, %v527
    %v529 = vpop.f32.mrf.mxu0
    %v530 = vadd.f32 0.0, %v529
    %531 = vdwg.mxu0
    %s532 = scalar_lea.vmem [#allocation7], 480
    %v533 = vld [vmem:[%s532] sm:$0xff]
    %v534 = vld [vmem:[%s532 + $0x8] sm:$0xff]
    %v535 = vld [vmem:[%s532 + $0x10] sm:$0xff]
    %v536 = vld [vmem:[%s532 + $0x18] sm:$0xff]
    %v537 = vld [vmem:[%s532 + $0x20] sm:$0xff]
    %v538 = vld [vmem:[%s532 + $0x28] sm:$0xff]
    %v539 = vld [vmem:[%s532 + $0x30] sm:$0xff]
    %v540 = vld [vmem:[%s532 + $0x38] sm:$0xff]
    %v541 = vld [vmem:[%s532 + $0x40] sm:$0xff]
    %v542 = vld [vmem:[%s532 + $0x48] sm:$0xff]
    %v543 = vld [vmem:[%s532 + $0x50] sm:$0xff]
    %v544 = vld [vmem:[%s532 + $0x58] sm:$0xff]
    %v545 = vld [vmem:[%s532 + $0x60] sm:$0xff]
    %v546 = vld [vmem:[%s532 + $0x68] sm:$0xff]
    %v547 = vld [vmem:[%s532 + $0x70] sm:$0xff]
    %v548 = vld [vmem:[%s532 + $0x78] sm:$0xff]
    %v549 = vld [vmem:[%s532 + $0x80] sm:$0xff]
    %v550 = vld [vmem:[%s532 + $0x88] sm:$0xff]
    %v551 = vld [vmem:[%s532 + $0x90] sm:$0xff]
    %v552 = vld [vmem:[%s532 + $0x98] sm:$0xff]
    %v553 = vld [vmem:[%s532 + $0xa0] sm:$0xff]
    %v554 = vld [vmem:[%s532 + $0xa8] sm:$0xff]
    %v555 = vld [vmem:[%s532 + $0xb0] sm:$0xff]
    %v556 = vld [vmem:[%s532 + $0xb8] sm:$0xff]
    %v557 = vld [vmem:[%s532 + $0xc0] sm:$0xff]
    %v558 = vld [vmem:[%s532 + $0xc8] sm:$0xff]
    %v559 = vld [vmem:[%s532 + $0xd0] sm:$0xff]
    %v560 = vld [vmem:[%s532 + $0xd8] sm:$0xff]
    %v561 = vld [vmem:[%s532 + $0xe0] sm:$0xff]
    %v562 = vld [vmem:[%s532 + $0xe8] sm:$0xff]
    %v563 = vld [vmem:[%s532 + $0xf0] sm:$0xff]
    %v564 = vld [vmem:[%s532 + $0xf8] sm:$0xff]
    %v565 = vld [vmem:[%s532 + $0x100] sm:$0xff]
    %v566 = vld [vmem:[%s532 + $0x108] sm:$0xff]
    %v567 = vld [vmem:[%s532 + $0x110] sm:$0xff]
    %v568 = vld [vmem:[%s532 + $0x118] sm:$0xff]
    %v569 = vld [vmem:[%s532 + $0x120] sm:$0xff]
    %v570 = vld [vmem:[%s532 + $0x128] sm:$0xff]
    %v571 = vld [vmem:[%s532 + $0x130] sm:$0xff]
    %v572 = vld [vmem:[%s532 + $0x138] sm:$0xff]
    %v573 = vld [vmem:[%s532 + $0x140] sm:$0xff]
    %v574 = vld [vmem:[%s532 + $0x148] sm:$0xff]
    %v575 = vld [vmem:[%s532 + $0x150] sm:$0xff]
    %v576 = vld [vmem:[%s532 + $0x158] sm:$0xff]
    %v577 = vld [vmem:[%s532 + $0x160] sm:$0xff]
    %v578 = vld [vmem:[%s532 + $0x168] sm:$0xff]
    %v579 = vld [vmem:[%s532 + $0x170] sm:$0xff]
    %v580 = vld [vmem:[%s532 + $0x178] sm:$0xff]
    %v581 = vld [vmem:[%s532 + $0x180] sm:$0xff]
    %v582 = vld [vmem:[%s532 + $0x188] sm:$0xff]
    %v583 = vld [vmem:[%s532 + $0x190] sm:$0xff]
    %v584 = vld [vmem:[%s532 + $0x198] sm:$0xff]
    %v585 = vld [vmem:[%s532 + $0x1a0] sm:$0xff]
    %v586 = vld [vmem:[%s532 + $0x1a8] sm:$0xff]
    %v587 = vld [vmem:[%s532 + $0x1b0] sm:$0xff]
    %v588 = vld [vmem:[%s532 + $0x1b8] sm:$0xff]
    %v589 = vld [vmem:[%s532 + $0x1c0] sm:$0xff]
    %v590 = vld [vmem:[%s532 + $0x1c8] sm:$0xff]
    %v591 = vld [vmem:[%s532 + $0x1d0] sm:$0xff]
    %v592 = vld [vmem:[%s532 + $0x1d8] sm:$0xff]
    %vm593 = vcmask 261120
    %v595 = vsel %vm593, %v506, 0
    %v598 = vsel %vm593, %v512, 0
    %v601 = vsel %vm593, %v518, 0
    %v604 = vsel %vm593, %v524, 0
    %v607 = vsel %vm593, %v530, 0
    %609 = vmatprep.subr.mxu0 %v579
    %610 = vmatpush1.msra.mxu0 %v578
    %611 = vmatprep.subr.mxu0 %v576
    %612 = vmatpush1.msra.mxu0 %v575
    %613 = vmatprep.subr.mxu0 %v573
    %614 = vmatpush1.msra.mxu0 %v572
    %615 = vmatprep.subr.mxu0 %v570
    %616 = vmatpush1.msra.mxu0 %v569
    %617 = vmatprep.subr.mxu0 %v567
    %618 = vmatpush1.msra.mxu0 %v566
    %619 = vmatprep.subr.mxu0 %v564
    %620 = vmatpush1.msra.mxu0 %v563
    %621 = vmatprep.subr.mxu0 %v561
    %622 = vmatpush1.msra.mxu0 %v560
    %623 = vmatprep.subr.mxu0 %v558
    %624 = vmatpush1.msra.mxu0 %v557
    %625 = vmatprep.subr.mxu0 %v555
    %626 = vmatpush1.msra.mxu0 %v554
    %627 = vmatprep.subr.mxu0 %v552
    %628 = vmatpush1.msra.mxu0 %v551
    %629 = vmatprep.subr.mxu0 %v549
    %630 = vmatpush1.msra.mxu0 %v548
    %631 = vmatprep.subr.mxu0 %v546
    %632 = vmatpush1.msra.mxu0 %v545
    %633 = vmatprep.subr.mxu0 %v543
    %634 = vmatpush1.msra.mxu0 %v542
    %635 = vmatprep.subr.mxu0 %v540
    %636 = vmatpush1.msra.mxu0 %v539
    %637 = vmatprep.subr.mxu0 %v537
    %638 = vmatpush1.msra.mxu0 %v536
    %639 = vmatprep.subr.mxu0 %v534
    %640 = vmatpush1.msra.mxu0 %v533
    %641 = vmatprep.subr.mxu0 0.0
    %642 = vmatpush2.msra.mxu0 0.0
    %643 = vmatprep.subr.mxu0 0.0
    %644 = vmatpush2.msra.mxu0 0.0
    %645 = vmatprep.subr.mxu0 0.0
    %646 = vmatpush2.msra.mxu0 0.0
    %647 = vmatprep.subr.mxu0 0.0
    %648 = vmatpush2.msra.mxu0 0.0
    %649 = vmatprep.subr.mxu0 0.0
    %650 = vmatpush2.msra.mxu0 0.0
    %651 = vmatprep.subr.mxu0 0.0
    %652 = vmatpush2.msra.mxu0 0.0
    %653 = vmatprep.subr.mxu0 0.0
    %654 = vmatpush2.msra.mxu0 0.0
    %655 = vmatprep.subr.mxu0 0.0
    %656 = vmatpush2.msra.mxu0 0.0
    %657 = vmatprep.subr.mxu0 0.0
    %658 = vmatpush2.msra.mxu0 0.0
    %659 = vmatprep.subr.mxu0 0.0
    %660 = vmatpush2.msra.mxu0 0.0
    %661 = vmatprep.subr.mxu0 0.0
    %662 = vmatpush2.msra.mxu0 0.0
    %663 = vmatprep.subr.mxu0 0.0
    %664 = vmatpush2.msra.mxu0 0.0
    %665 = vmatprep.subr.mxu0 %v591
    %666 = vmatpush2.msra.mxu0 %v590
    %667 = vmatprep.subr.mxu0 %v588
    %668 = vmatpush2.msra.mxu0 %v587
    %669 = vmatprep.subr.mxu0 %v585
    %670 = vmatpush2.msra.mxu0 %v584
    %671 = vmatprep.subr.mxu0 %v582
    %672 = vmatpush2.msra.mxu0 %v581
    %673 = vmatprep.mubr.f32.mxu0 %v595
    %674 = vmatmul.mubr.f32.gmra.mxu0 %v504
    %v675 = vpop.f32.mrf.mxu0
    %v676 = vadd.f32 0.0, %v675
    %v677 = vpop.f32.mrf.mxu0
    %v678 = vadd.f32 0.0, %v677
    %679 = vmatprep.mubr.f32.mxu0 %v598
    %680 = vmatmul.mubr.f32.gmra.mxu0 %v510
    %v681 = vpop.f32.mrf.mxu0
    %v682 = vadd.f32 0.0, %v681
    %v683 = vpop.f32.mrf.mxu0
    %v684 = vadd.f32 0.0, %v683
    %685 = vmatprep.mubr.f32.mxu0 %v601
    %686 = vmatmul.mubr.f32.gmra.mxu0 %v516
    %v687 = vpop.f32.mrf.mxu0
    %v688 = vadd.f32 0.0, %v687
    %v689 = vpop.f32.mrf.mxu0
    %v690 = vadd.f32 0.0, %v689
    %691 = vmatprep.mubr.f32.mxu0 %v604
    %692 = vmatmul.mubr.f32.gmra.mxu0 %v522
    %v693 = vpop.f32.mrf.mxu0
    %v694 = vadd.f32 0.0, %v693
    %v695 = vpop.f32.mrf.mxu0
    %v696 = vadd.f32 0.0, %v695
    %697 = vmatprep.mubr.f32.mxu0 %v607
    %698 = vmatmul.mubr.f32.gmra.mxu0 %v528
    %v699 = vpop.f32.mrf.mxu0
    %v700 = vadd.f32 0.0, %v699
    %v701 = vpop.f32.mrf.mxu0
    %v702 = vadd.f32 0.0, %v701
    %703 = vdwg.mxu0
    %704 = vmatprep.subr.mxu0 0.0
    %705 = vmatpush1.msra.mxu0 %v580
    %706 = vmatprep.subr.mxu0 0.0
    %707 = vmatpush1.msra.mxu0 %v577
    %708 = vmatprep.subr.mxu0 0.0
    %709 = vmatpush1.msra.mxu0 %v574
    %710 = vmatprep.subr.mxu0 0.0
    %711 = vmatpush1.msra.mxu0 %v571
    %712 = vmatprep.subr.mxu0 0.0
    %713 = vmatpush1.msra.mxu0 %v568
    %714 = vmatprep.subr.mxu0 0.0
    %715 = vmatpush1.msra.mxu0 %v565
    %716 = vmatprep.subr.mxu0 0.0
    %717 = vmatpush1.msra.mxu0 %v562
    %718 = vmatprep.subr.mxu0 0.0
    %719 = vmatpush1.msra.mxu0 %v559
    %720 = vmatprep.subr.mxu0 0.0
    %721 = vmatpush1.msra.mxu0 %v556
    %722 = vmatprep.subr.mxu0 0.0
    %723 = vmatpush1.msra.mxu0 %v553
    %724 = vmatprep.subr.mxu0 0.0
    %725 = vmatpush1.msra.mxu0 %v550
    %726 = vmatprep.subr.mxu0 0.0
    %727 = vmatpush1.msra.mxu0 %v547
    %728 = vmatprep.subr.mxu0 0.0
    %729 = vmatpush1.msra.mxu0 %v544
    %730 = vmatprep.subr.mxu0 0.0
    %731 = vmatpush1.msra.mxu0 %v541
    %732 = vmatprep.subr.mxu0 0.0
    %733 = vmatpush1.msra.mxu0 %v538
    %734 = vmatprep.subr.mxu0 0.0
    %735 = vmatpush1.msra.mxu0 %v535
    %736 = vmatprep.subr.mxu0 0.0
    %737 = vmatpush2.msra.mxu0 0.0
    %738 = vmatprep.subr.mxu0 0.0
    %739 = vmatpush2.msra.mxu0 0.0
    %740 = vmatprep.subr.mxu0 0.0
    %741 = vmatpush2.msra.mxu0 0.0
    %742 = vmatprep.subr.mxu0 0.0
    %743 = vmatpush2.msra.mxu0 0.0
    %744 = vmatprep.subr.mxu0 0.0
    %745 = vmatpush2.msra.mxu0 0.0
    %746 = vmatprep.subr.mxu0 0.0
    %747 = vmatpush2.msra.mxu0 0.0
    %748 = vmatprep.subr.mxu0 0.0
    %749 = vmatpush2.msra.mxu0 0.0
    %750 = vmatprep.subr.mxu0 0.0
    %751 = vmatpush2.msra.mxu0 0.0
    %752 = vmatprep.subr.mxu0 0.0
    %753 = vmatpush2.msra.mxu0 0.0
    %754 = vmatprep.subr.mxu0 0.0
    %755 = vmatpush2.msra.mxu0 0.0
    %756 = vmatprep.subr.mxu0 0.0
    %757 = vmatpush2.msra.mxu0 0.0
    %758 = vmatprep.subr.mxu0 0.0
    %759 = vmatpush2.msra.mxu0 0.0
    %760 = vmatprep.subr.mxu0 0.0
    %761 = vmatpush2.msra.mxu0 %v592
    %762 = vmatprep.subr.mxu0 0.0
    %763 = vmatpush2.msra.mxu0 %v589
    %764 = vmatprep.subr.mxu0 0.0
    %765 = vmatpush2.msra.mxu0 %v586
    %766 = vmatprep.subr.mxu0 0.0
    %767 = vmatpush2.msra.mxu0 %v583
    %768 = vmatprep.mubr.f32.mxu0 %v595
    %769 = vmatmul.mubr.f32.gmra.mxu0 %v504
    %v770 = vpop.f32.mrf.mxu0
    %v771 = vadd.f32 0.0, %v770
    %v772 = vpop.f32.mrf.mxu0
    %773 = vmatprep.mubr.f32.mxu0 %v598
    %774 = vmatmul.mubr.f32.gmra.mxu0 %v510
    %v775 = vpop.f32.mrf.mxu0
    %v776 = vadd.f32 0.0, %v775
    %v777 = vpop.f32.mrf.mxu0
    %778 = vmatprep.mubr.f32.mxu0 %v601
    %779 = vmatmul.mubr.f32.gmra.mxu0 %v516
    %v780 = vpop.f32.mrf.mxu0
    %v781 = vadd.f32 0.0, %v780
    %v782 = vpop.f32.mrf.mxu0
    %783 = vmatprep.mubr.f32.mxu0 %v604
    %784 = vmatmul.mubr.f32.gmra.mxu0 %v522
    %v785 = vpop.f32.mrf.mxu0
    %v786 = vadd.f32 0.0, %v785
    %v787 = vpop.f32.mrf.mxu0
    %788 = vmatprep.mubr.f32.mxu0 %v607
    %789 = vmatmul.mubr.f32.gmra.mxu0 %v528
    %v790 = vpop.f32.mrf.mxu0
    %v791 = vadd.f32 0.0, %v790
    %v792 = vpop.f32.mrf.mxu0
    %793 = vdwg.mxu0
    %v795 = vsel %vm593, %v330, 0
    %v798 = vsel %vm593, %v336, 0
    %v801 = vsel %vm593, %v342, 0
    %v804 = vsel %vm593, %v348, 0
    %v807 = vsel %vm593, %v354, 0
    %809 = vmatprep.subr.mxu0 %v402
    %810 = vmatpush1.msra.mxu0 %v401
    %811 = vmatprep.subr.mxu0 %v399
    %812 = vmatpush1.msra.mxu0 %v398
    %813 = vmatprep.subr.mxu0 %v396
    %814 = vmatpush1.msra.mxu0 %v395
    %815 = vmatprep.subr.mxu0 %v393
    %816 = vmatpush1.msra.mxu0 %v392
    %817 = vmatprep.subr.mxu0 %v390
    %818 = vmatpush1.msra.mxu0 %v389
    %819 = vmatprep.subr.mxu0 %v387
    %820 = vmatpush1.msra.mxu0 %v386
    %821 = vmatprep.subr.mxu0 %v384
    %822 = vmatpush1.msra.mxu0 %v383
    %823 = vmatprep.subr.mxu0 %v381
    %824 = vmatpush1.msra.mxu0 %v380
    %825 = vmatprep.subr.mxu0 %v378
    %826 = vmatpush1.msra.mxu0 %v377
    %827 = vmatprep.subr.mxu0 %v375
    %828 = vmatpush1.msra.mxu0 %v374
    %829 = vmatprep.subr.mxu0 %v372
    %830 = vmatpush1.msra.mxu0 %v371
    %831 = vmatprep.subr.mxu0 %v369
    %832 = vmatpush1.msra.mxu0 %v368
    %833 = vmatprep.subr.mxu0 %v366
    %834 = vmatpush1.msra.mxu0 %v365
    %835 = vmatprep.subr.mxu0 %v363
    %836 = vmatpush1.msra.mxu0 %v362
    %837 = vmatprep.subr.mxu0 %v360
    %838 = vmatpush1.msra.mxu0 %v359
    %839 = vmatprep.subr.mxu0 %v357
    %840 = vmatpush1.msra.mxu0 %v356
    %841 = vmatprep.subr.mxu0 0.0
    %842 = vmatpush2.msra.mxu0 0.0
    %843 = vmatprep.subr.mxu0 0.0
    %844 = vmatpush2.msra.mxu0 0.0
    %845 = vmatprep.subr.mxu0 0.0
    %846 = vmatpush2.msra.mxu0 0.0
    %847 = vmatprep.subr.mxu0 0.0
    %848 = vmatpush2.msra.mxu0 0.0
    %849 = vmatprep.subr.mxu0 0.0
    %850 = vmatpush2.msra.mxu0 0.0
    %851 = vmatprep.subr.mxu0 0.0
    %852 = vmatpush2.msra.mxu0 0.0
    %853 = vmatprep.subr.mxu0 0.0
    %854 = vmatpush2.msra.mxu0 0.0
    %855 = vmatprep.subr.mxu0 0.0
    %856 = vmatpush2.msra.mxu0 0.0
    %857 = vmatprep.subr.mxu0 0.0
    %858 = vmatpush2.msra.mxu0 0.0
    %859 = vmatprep.subr.mxu0 0.0
    %860 = vmatpush2.msra.mxu0 0.0
    %861 = vmatprep.subr.mxu0 0.0
    %862 = vmatpush2.msra.mxu0 0.0
    %863 = vmatprep.subr.mxu0 0.0
    %864 = vmatpush2.msra.mxu0 0.0
    %865 = vmatprep.subr.mxu0 %v414
    %866 = vmatpush2.msra.mxu0 %v413
    %867 = vmatprep.subr.mxu0 %v411
    %868 = vmatpush2.msra.mxu0 %v410
    %869 = vmatprep.subr.mxu0 %v408
    %870 = vmatpush2.msra.mxu0 %v407
    %871 = vmatprep.subr.mxu0 %v405
    %872 = vmatpush2.msra.mxu0 %v404
    %873 = vmatprep.mubr.f32.mxu0 %v795
    %874 = vmatmul.mubr.f32.gmra.mxu0 %v328
    %v875 = vpop.f32.mrf.mxu0
    %v876 = vadd.f32 %v676, %v875
    %v877 = vpop.f32.mrf.mxu0
    %v878 = vadd.f32 %v678, %v877
    %879 = vmatprep.mubr.f32.mxu0 %v798
    %880 = vmatmul.mubr.f32.gmra.mxu0 %v334
    %v881 = vpop.f32.mrf.mxu0
    %v882 = vadd.f32 %v682, %v881
    %v883 = vpop.f32.mrf.mxu0
    %v884 = vadd.f32 %v684, %v883
    %885 = vmatprep.mubr.f32.mxu0 %v801
    %886 = vmatmul.mubr.f32.gmra.mxu0 %v340
    %v887 = vpop.f32.mrf.mxu0
    %v888 = vadd.f32 %v688, %v887
    %v889 = vpop.f32.mrf.mxu0
    %v890 = vadd.f32 %v690, %v889
    %891 = vmatprep.mubr.f32.mxu0 %v804
    %892 = vmatmul.mubr.f32.gmra.mxu0 %v346
    %v893 = vpop.f32.mrf.mxu0
    %v894 = vadd.f32 %v694, %v893
    %v895 = vpop.f32.mrf.mxu0
    %v896 = vadd.f32 %v696, %v895
    %897 = vmatprep.mubr.f32.mxu0 %v807
    %898 = vmatmul.mubr.f32.gmra.mxu0 %v352
    %v899 = vpop.f32.mrf.mxu0
    %v900 = vadd.f32 %v700, %v899
    %v901 = vpop.f32.mrf.mxu0
    %v902 = vadd.f32 %v702, %v901
    %903 = vdwg.mxu0
    %904 = vmatprep.subr.mxu0 0.0
    %905 = vmatpush1.msra.mxu0 %v403
    %906 = vmatprep.subr.mxu0 0.0
    %907 = vmatpush1.msra.mxu0 %v400
    %908 = vmatprep.subr.mxu0 0.0
    %909 = vmatpush1.msra.mxu0 %v397
    %910 = vmatprep.subr.mxu0 0.0
    %911 = vmatpush1.msra.mxu0 %v394
    %912 = vmatprep.subr.mxu0 0.0
    %913 = vmatpush1.msra.mxu0 %v391
    %914 = vmatprep.subr.mxu0 0.0
    %915 = vmatpush1.msra.mxu0 %v388
    %916 = vmatprep.subr.mxu0 0.0
    %917 = vmatpush1.msra.mxu0 %v385
    %918 = vmatprep.subr.mxu0 0.0
    %919 = vmatpush1.msra.mxu0 %v382
    %920 = vmatprep.subr.mxu0 0.0
    %921 = vmatpush1.msra.mxu0 %v379
    %922 = vmatprep.subr.mxu0 0.0
    %923 = vmatpush1.msra.mxu0 %v376
    %924 = vmatprep.subr.mxu0 0.0
    %925 = vmatpush1.msra.mxu0 %v373
    %926 = vmatprep.subr.mxu0 0.0
    %927 = vmatpush1.msra.mxu0 %v370
    %928 = vmatprep.subr.mxu0 0.0
    %929 = vmatpush1.msra.mxu0 %v367
    %930 = vmatprep.subr.mxu0 0.0
    %931 = vmatpush1.msra.mxu0 %v364
    %932 = vmatprep.subr.mxu0 0.0
    %933 = vmatpush1.msra.mxu0 %v361
    %934 = vmatprep.subr.mxu0 0.0
    %935 = vmatpush1.msra.mxu0 %v358
    %936 = vmatprep.subr.mxu0 0.0
    %937 = vmatpush2.msra.mxu0 0.0
    %938 = vmatprep.subr.mxu0 0.0
    %939 = vmatpush2.msra.mxu0 0.0
    %940 = vmatprep.subr.mxu0 0.0
    %941 = vmatpush2.msra.mxu0 0.0
    %942 = vmatprep.subr.mxu0 0.0
    %943 = vmatpush2.msra.mxu0 0.0
    %944 = vmatprep.subr.mxu0 0.0
    %945 = vmatpush2.msra.mxu0 0.0
    %946 = vmatprep.subr.mxu0 0.0
    %947 = vmatpush2.msra.mxu0 0.0
    %948 = vmatprep.subr.mxu0 0.0
    %949 = vmatpush2.msra.mxu0 0.0
    %950 = vmatprep.subr.mxu0 0.0
    %951 = vmatpush2.msra.mxu0 0.0
    %952 = vmatprep.subr.mxu0 0.0
    %953 = vmatpush2.msra.mxu0 0.0
    %954 = vmatprep.subr.mxu0 0.0
    %955 = vmatpush2.msra.mxu0 0.0
    %956 = vmatprep.subr.mxu0 0.0
    %957 = vmatpush2.msra.mxu0 0.0
    %958 = vmatprep.subr.mxu0 0.0
    %959 = vmatpush2.msra.mxu0 0.0
    %960 = vmatprep.subr.mxu0 0.0
    %961 = vmatpush2.msra.mxu0 %v415
    %962 = vmatprep.subr.mxu0 0.0
    %963 = vmatpush2.msra.mxu0 %v412
    %964 = vmatprep.subr.mxu0 0.0
    %965 = vmatpush2.msra.mxu0 %v409
    %966 = vmatprep.subr.mxu0 0.0
    %967 = vmatpush2.msra.mxu0 %v406
    %968 = vmatprep.mubr.f32.mxu0 %v795
    %969 = vmatmul.mubr.f32.gmra.mxu0 %v328
    %v970 = vpop.f32.mrf.mxu0
    %v971 = vadd.f32 %v771, %v970
    %v972 = vpop.f32.mrf.mxu0
    %973 = vmatprep.mubr.f32.mxu0 %v798
    %974 = vmatmul.mubr.f32.gmra.mxu0 %v334
    %v975 = vpop.f32.mrf.mxu0
    %v976 = vadd.f32 %v776, %v975
    %v977 = vpop.f32.mrf.mxu0
    %978 = vmatprep.mubr.f32.mxu0 %v801
    %979 = vmatmul.mubr.f32.gmra.mxu0 %v340
    %v980 = vpop.f32.mrf.mxu0
    %v981 = vadd.f32 %v781, %v980
    %v982 = vpop.f32.mrf.mxu0
    %983 = vmatprep.mubr.f32.mxu0 %v804
    %984 = vmatmul.mubr.f32.gmra.mxu0 %v346
    %v985 = vpop.f32.mrf.mxu0
    %v986 = vadd.f32 %v786, %v985
    %v987 = vpop.f32.mrf.mxu0
    %988 = vmatprep.mubr.f32.mxu0 %v807
    %989 = vmatmul.mubr.f32.gmra.mxu0 %v352
    %v990 = vpop.f32.mrf.mxu0
    %v991 = vadd.f32 %v791, %v990
    %v992 = vpop.f32.mrf.mxu0
    %993 = vdwg.mxu0
    %s994 = scalar_lea.vmem [#allocation5], 80
    %v995 = vld [vmem:[%s994] sm:$0xff]
    %v996 = vld [vmem:[%s994 + $0x8] sm:$0xff]
    %v997 = vld [vmem:[%s994 + $0x10] sm:$0xff]
    %v998 = vld [vmem:[%s994 + $0x18] sm:$0xff]
    %v999 = vld [vmem:[%s994 + $0x20] sm:$0xf]
    %v1001 = vsel %vm245, %v995, 0
    %v1004 = vsel %vm245, %v996, 0
    %v1007 = vsel %vm245, %v997, 0
    %v1010 = vsel %vm245, %v998, 0
    %v1013 = vsel %vm245, %v999, 0
    %1015 = vmatprep.subr.mxu0 0.0
    %1016 = vmatpush1.msra.mxu0 0.0
    %1017 = vmatprep.subr.mxu0 0.0
    %1018 = vmatpush1.msra.mxu0 0.0
    %1019 = vmatprep.subr.mxu0 0.0
    %1020 = vmatpush1.msra.mxu0 0.0
    %1021 = vmatprep.subr.mxu0 0.0
    %1022 = vmatpush1.msra.mxu0 0.0
    %1023 = vmatprep.subr.mxu0 0.0
    %1024 = vmatpush1.msra.mxu0 0.0
    %1025 = vmatprep.subr.mxu0 0.0
    %1026 = vmatpush1.msra.mxu0 0.0
    %1027 = vmatprep.subr.mxu0 %v239
    %1028 = vmatpush1.msra.mxu0 %v238
    %1029 = vmatprep.subr.mxu0 %v237
    %1030 = vmatpush1.msra.mxu0 %v236
    %1031 = vmatprep.subr.mxu0 %v235
    %1032 = vmatpush1.msra.mxu0 %v234
    %1033 = vmatprep.subr.mxu0 %v233
    %1034 = vmatpush1.msra.mxu0 %v232
    %1035 = vmatprep.subr.mxu0 %v231
    %1036 = vmatpush1.msra.mxu0 %v230
    %1037 = vmatprep.subr.mxu0 %v229
    %1038 = vmatpush1.msra.mxu0 %v228
    %1039 = vmatprep.subr.mxu0 %v227
    %1040 = vmatpush1.msra.mxu0 %v226
    %1041 = vmatprep.subr.mxu0 %v225
    %1042 = vmatpush1.msra.mxu0 %v224
    %1043 = vmatprep.subr.mxu0 %v223
    %1044 = vmatpush1.msra.mxu0 %v222
    %1045 = vmatprep.subr.mxu0 %v221
    %1046 = vmatpush1.msra.mxu0 %v220
    %1047 = vmatprep.subr.mxu0 0.0
    %1048 = vmatpush2.msra.mxu0 0.0
    %1049 = vmatprep.subr.mxu0 0.0
    %1050 = vmatpush2.msra.mxu0 0.0
    %1051 = vmatprep.subr.mxu0 0.0
    %1052 = vmatpush2.msra.mxu0 0.0
    %1053 = vmatprep.subr.mxu0 0.0
    %1054 = vmatpush2.msra.mxu0 0.0
    %1055 = vmatprep.subr.mxu0 0.0
    %1056 = vmatpush2.msra.mxu0 0.0
    %1057 = vmatprep.subr.mxu0 0.0
    %1058 = vmatpush2.msra.mxu0 0.0
    %1059 = vmatprep.subr.mxu0 0.0
    %1060 = vmatpush2.msra.mxu0 0.0
    %1061 = vmatprep.subr.mxu0 0.0
    %1062 = vmatpush2.msra.mxu0 0.0
    %1063 = vmatprep.subr.mxu0 0.0
    %1064 = vmatpush2.msra.mxu0 0.0
    %1065 = vmatprep.subr.mxu0 0.0
    %1066 = vmatpush2.msra.mxu0 0.0
    %1067 = vmatprep.subr.mxu0 0.0
    %1068 = vmatpush2.msra.mxu0 0.0
    %1069 = vmatprep.subr.mxu0 0.0
    %1070 = vmatpush2.msra.mxu0 0.0
    %1071 = vmatprep.subr.mxu0 0.0
    %1072 = vmatpush2.msra.mxu0 0.0
    %1073 = vmatprep.subr.mxu0 0.0
    %1074 = vmatpush2.msra.mxu0 0.0
    %1075 = vmatprep.subr.mxu0 0.0
    %1076 = vmatpush2.msra.mxu0 0.0
    %1077 = vmatprep.subr.mxu0 0.0
    %1078 = vmatpush2.msra.mxu0 0.0
    %1079 = vmatprep.mubr.f32.mxu0 0.0
    %1080 = vmatmul.mubr.f32.gmra.mxu0 %v1001
    %v1081 = vpop.f32.mrf.mxu0
    %v1082 = vadd.f32 0.0, %v1081
    %v1083 = vpop.f32.mrf.mxu0
    %v1084 = vadd.f32 0.0, %v1083
    %1085 = vmatprep.mubr.f32.mxu0 0.0
    %1086 = vmatmul.mubr.f32.gmra.mxu0 %v1004
    %v1087 = vpop.f32.mrf.mxu0
    %v1088 = vadd.f32 0.0, %v1087
    %v1089 = vpop.f32.mrf.mxu0
    %v1090 = vadd.f32 0.0, %v1089
    %1091 = vmatprep.mubr.f32.mxu0 0.0
    %1092 = vmatmul.mubr.f32.gmra.mxu0 %v1007
    %v1093 = vpop.f32.mrf.mxu0
    %v1094 = vadd.f32 0.0, %v1093
    %v1095 = vpop.f32.mrf.mxu0
    %v1096 = vadd.f32 0.0, %v1095
    %1097 = vmatprep.mubr.f32.mxu0 0.0
    %1098 = vmatmul.mubr.f32.gmra.mxu0 %v1010
    %v1099 = vpop.f32.mrf.mxu0
    %v1100 = vadd.f32 0.0, %v1099
    %v1101 = vpop.f32.mrf.mxu0
    %v1102 = vadd.f32 0.0, %v1101
    %1103 = vmatprep.mubr.f32.mxu0 0.0
    %1104 = vmatmul.mubr.f32.gmra.mxu0 %v1013
    %v1105 = vpop.f32.mrf.mxu0
    %v1106 = vadd.f32 0.0, %v1105
    %v1107 = vpop.f32.mrf.mxu0
    %v1108 = vadd.f32 0.0, %v1107
    %1109 = vdwg.mxu0
    %s1110 = scalar_lea.vmem [#allocation7], 960
    %v1111 = vld [vmem:[%s1110] sm:$0xff]
    %v1112 = vld [vmem:[%s1110 + $0x8] sm:$0xff]
    %v1113 = vld [vmem:[%s1110 + $0x10] sm:$0xff]
    %v1114 = vld [vmem:[%s1110 + $0x18] sm:$0xff]
    %v1115 = vld [vmem:[%s1110 + $0x20] sm:$0xff]
    %v1116 = vld [vmem:[%s1110 + $0x28] sm:$0xff]
    %v1117 = vld [vmem:[%s1110 + $0x30] sm:$0xff]
    %v1118 = vld [vmem:[%s1110 + $0x38] sm:$0xff]
    %v1119 = vld [vmem:[%s1110 + $0x40] sm:$0xff]
    %v1120 = vld [vmem:[%s1110 + $0x48] sm:$0xff]
    %v1121 = vld [vmem:[%s1110 + $0x50] sm:$0xff]
    %v1122 = vld [vmem:[%s1110 + $0x58] sm:$0xff]
    %v1123 = vld [vmem:[%s1110 + $0x60] sm:$0xff]
    %v1124 = vld [vmem:[%s1110 + $0x68] sm:$0xff]
    %v1125 = vld [vmem:[%s1110 + $0x70] sm:$0xff]
    %v1126 = vld [vmem:[%s1110 + $0x78] sm:$0xff]
    %v1127 = vld [vmem:[%s1110 + $0x80] sm:$0xff]
    %v1128 = vld [vmem:[%s1110 + $0x88] sm:$0xff]
    %v1129 = vld [vmem:[%s1110 + $0x90] sm:$0xff]
    %v1130 = vld [vmem:[%s1110 + $0x98] sm:$0xff]
    %v1131 = vld [vmem:[%s1110 + $0xa0] sm:$0xff]
    %v1132 = vld [vmem:[%s1110 + $0xa8] sm:$0xff]
    %v1133 = vld [vmem:[%s1110 + $0xb0] sm:$0xff]
    %v1134 = vld [vmem:[%s1110 + $0xb8] sm:$0xff]
    %v1135 = vld [vmem:[%s1110 + $0xc0] sm:$0xff]
    %v1136 = vld [vmem:[%s1110 + $0xc8] sm:$0xff]
    %v1137 = vld [vmem:[%s1110 + $0xd0] sm:$0xff]
    %v1138 = vld [vmem:[%s1110 + $0xd8] sm:$0xff]
    %v1139 = vld [vmem:[%s1110 + $0xe0] sm:$0xff]
    %v1140 = vld [vmem:[%s1110 + $0xe8] sm:$0xff]
    %v1141 = vld [vmem:[%s1110 + $0xf0] sm:$0xff]
    %v1142 = vld [vmem:[%s1110 + $0xf8] sm:$0xff]
    %v1143 = vld [vmem:[%s1110 + $0x100] sm:$0xff]
    %v1144 = vld [vmem:[%s1110 + $0x108] sm:$0xff]
    %v1145 = vld [vmem:[%s1110 + $0x110] sm:$0xff]
    %v1146 = vld [vmem:[%s1110 + $0x118] sm:$0xff]
    %v1147 = vld [vmem:[%s1110 + $0x120] sm:$0xff]
    %v1148 = vld [vmem:[%s1110 + $0x128] sm:$0xff]
    %v1149 = vld [vmem:[%s1110 + $0x130] sm:$0xff]
    %v1150 = vld [vmem:[%s1110 + $0x138] sm:$0xff]
    %v1151 = vld [vmem:[%s1110 + $0x140] sm:$0xff]
    %v1152 = vld [vmem:[%s1110 + $0x148] sm:$0xff]
    %v1153 = vld [vmem:[%s1110 + $0x150] sm:$0xff]
    %v1154 = vld [vmem:[%s1110 + $0x158] sm:$0xff]
    %v1155 = vld [vmem:[%s1110 + $0x160] sm:$0xff]
    %v1156 = vld [vmem:[%s1110 + $0x168] sm:$0xff]
    %v1157 = vld [vmem:[%s1110 + $0x170] sm:$0xff]
    %v1158 = vld [vmem:[%s1110 + $0x178] sm:$0xff]
    %v1159 = vld [vmem:[%s1110 + $0x180] sm:$0xff]
    %v1160 = vld [vmem:[%s1110 + $0x188] sm:$0xff]
    %v1161 = vld [vmem:[%s1110 + $0x190] sm:$0xff]
    %v1162 = vld [vmem:[%s1110 + $0x198] sm:$0xff]
    %v1163 = vld [vmem:[%s1110 + $0x1a0] sm:$0xff]
    %v1164 = vld [vmem:[%s1110 + $0x1a8] sm:$0xff]
    %v1165 = vld [vmem:[%s1110 + $0x1b0] sm:$0xff]
    %v1166 = vld [vmem:[%s1110 + $0x1b8] sm:$0xff]
    %v1167 = vld [vmem:[%s1110 + $0x1c0] sm:$0xff]
    %v1168 = vld [vmem:[%s1110 + $0x1c8] sm:$0xff]
    %v1169 = vld [vmem:[%s1110 + $0x1d0] sm:$0xff]
    %v1170 = vld [vmem:[%s1110 + $0x1d8] sm:$0xff]
    %v1172 = vsel %vm593, %v1084, 0
    %v1175 = vsel %vm593, %v1090, 0
    %v1178 = vsel %vm593, %v1096, 0
    %v1181 = vsel %vm593, %v1102, 0
    %v1184 = vsel %vm593, %v1108, 0
    %1186 = vmatprep.subr.mxu0 %v1157
    %1187 = vmatpush1.msra.mxu0 %v1156
    %1188 = vmatprep.subr.mxu0 %v1154
    %1189 = vmatpush1.msra.mxu0 %v1153
    %1190 = vmatprep.subr.mxu0 %v1151
    %1191 = vmatpush1.msra.mxu0 %v1150
    %1192 = vmatprep.subr.mxu0 %v1148
    %1193 = vmatpush1.msra.mxu0 %v1147
    %1194 = vmatprep.subr.mxu0 %v1145
    %1195 = vmatpush1.msra.mxu0 %v1144
    %1196 = vmatprep.subr.mxu0 %v1142
    %1197 = vmatpush1.msra.mxu0 %v1141
    %1198 = vmatprep.subr.mxu0 %v1139
    %1199 = vmatpush1.msra.mxu0 %v1138
    %1200 = vmatprep.subr.mxu0 %v1136
    %1201 = vmatpush1.msra.mxu0 %v1135
    %1202 = vmatprep.subr.mxu0 %v1133
    %1203 = vmatpush1.msra.mxu0 %v1132
    %1204 = vmatprep.subr.mxu0 %v1130
    %1205 = vmatpush1.msra.mxu0 %v1129
    %1206 = vmatprep.subr.mxu0 %v1127
    %1207 = vmatpush1.msra.mxu0 %v1126
    %1208 = vmatprep.subr.mxu0 %v1124
    %1209 = vmatpush1.msra.mxu0 %v1123
    %1210 = vmatprep.subr.mxu0 %v1121
    %1211 = vmatpush1.msra.mxu0 %v1120
    %1212 = vmatprep.subr.mxu0 %v1118
    %1213 = vmatpush1.msra.mxu0 %v1117
    %1214 = vmatprep.subr.mxu0 %v1115
    %1215 = vmatpush1.msra.mxu0 %v1114
    %1216 = vmatprep.subr.mxu0 %v1112
    %1217 = vmatpush1.msra.mxu0 %v1111
    %1218 = vmatprep.subr.mxu0 0.0
    %1219 = vmatpush2.msra.mxu0 0.0
    %1220 = vmatprep.subr.mxu0 0.0
    %1221 = vmatpush2.msra.mxu0 0.0
    %1222 = vmatprep.subr.mxu0 0.0
    %1223 = vmatpush2.msra.mxu0 0.0
    %1224 = vmatprep.subr.mxu0 0.0
    %1225 = vmatpush2.msra.mxu0 0.0
    %1226 = vmatprep.subr.mxu0 0.0
    %1227 = vmatpush2.msra.mxu0 0.0
    %1228 = vmatprep.subr.mxu0 0.0
    %1229 = vmatpush2.msra.mxu0 0.0
    %1230 = vmatprep.subr.mxu0 0.0
    %1231 = vmatpush2.msra.mxu0 0.0
    %1232 = vmatprep.subr.mxu0 0.0
    %1233 = vmatpush2.msra.mxu0 0.0
    %1234 = vmatprep.subr.mxu0 0.0
    %1235 = vmatpush2.msra.mxu0 0.0
    %1236 = vmatprep.subr.mxu0 0.0
    %1237 = vmatpush2.msra.mxu0 0.0
    %1238 = vmatprep.subr.mxu0 0.0
    %1239 = vmatpush2.msra.mxu0 0.0
    %1240 = vmatprep.subr.mxu0 0.0
    %1241 = vmatpush2.msra.mxu0 0.0
    %1242 = vmatprep.subr.mxu0 %v1169
    %1243 = vmatpush2.msra.mxu0 %v1168
    %1244 = vmatprep.subr.mxu0 %v1166
    %1245 = vmatpush2.msra.mxu0 %v1165
    %1246 = vmatprep.subr.mxu0 %v1163
    %1247 = vmatpush2.msra.mxu0 %v1162
    %1248 = vmatprep.subr.mxu0 %v1160
    %1249 = vmatpush2.msra.mxu0 %v1159
    %1250 = vmatprep.mubr.f32.mxu0 %v1172
    %1251 = vmatmul.mubr.f32.gmra.mxu0 %v1082
    %v1252 = vpop.f32.mrf.mxu0
    %v1253 = vadd.f32 0.0, %v1252
    %v1254 = vpop.f32.mrf.mxu0
    %v1255 = vadd.f32 0.0, %v1254
    %1256 = vmatprep.mubr.f32.mxu0 %v1175
    %1257 = vmatmul.mubr.f32.gmra.mxu0 %v1088
    %v1258 = vpop.f32.mrf.mxu0
    %v1259 = vadd.f32 0.0, %v1258
    %v1260 = vpop.f32.mrf.mxu0
    %v1261 = vadd.f32 0.0, %v1260
    %1262 = vmatprep.mubr.f32.mxu0 %v1178
    %1263 = vmatmul.mubr.f32.gmra.mxu0 %v1094
    %v1264 = vpop.f32.mrf.mxu0
    %v1265 = vadd.f32 0.0, %v1264
    %v1266 = vpop.f32.mrf.mxu0
    %v1267 = vadd.f32 0.0, %v1266
    %1268 = vmatprep.mubr.f32.mxu0 %v1181
    %1269 = vmatmul.mubr.f32.gmra.mxu0 %v1100
    %v1270 = vpop.f32.mrf.mxu0
    %v1271 = vadd.f32 0.0, %v1270
    %v1272 = vpop.f32.mrf.mxu0
    %v1273 = vadd.f32 0.0, %v1272
    %1274 = vmatprep.mubr.f32.mxu0 %v1184
    %1275 = vmatmul.mubr.f32.gmra.mxu0 %v1106
    %v1276 = vpop.f32.mrf.mxu0
    %v1277 = vadd.f32 0.0, %v1276
    %v1278 = vpop.f32.mrf.mxu0
    %v1279 = vadd.f32 0.0, %v1278
    %1280 = vdwg.mxu0
    %1281 = vmatprep.subr.mxu0 0.0
    %1282 = vmatpush1.msra.mxu0 %v1158
    %1283 = vmatprep.subr.mxu0 0.0
    %1284 = vmatpush1.msra.mxu0 %v1155
    %1285 = vmatprep.subr.mxu0 0.0
    %1286 = vmatpush1.msra.mxu0 %v1152
    %1287 = vmatprep.subr.mxu0 0.0
    %1288 = vmatpush1.msra.mxu0 %v1149
    %1289 = vmatprep.subr.mxu0 0.0
    %1290 = vmatpush1.msra.mxu0 %v1146
    %1291 = vmatprep.subr.mxu0 0.0
    %1292 = vmatpush1.msra.mxu0 %v1143
    %1293 = vmatprep.subr.mxu0 0.0
    %1294 = vmatpush1.msra.mxu0 %v1140
    %1295 = vmatprep.subr.mxu0 0.0
    %1296 = vmatpush1.msra.mxu0 %v1137
    %1297 = vmatprep.subr.mxu0 0.0
    %1298 = vmatpush1.msra.mxu0 %v1134
    %1299 = vmatprep.subr.mxu0 0.0
    %1300 = vmatpush1.msra.mxu0 %v1131
    %1301 = vmatprep.subr.mxu0 0.0
    %1302 = vmatpush1.msra.mxu0 %v1128
    %1303 = vmatprep.subr.mxu0 0.0
    %1304 = vmatpush1.msra.mxu0 %v1125
    %1305 = vmatprep.subr.mxu0 0.0
    %1306 = vmatpush1.msra.mxu0 %v1122
    %1307 = vmatprep.subr.mxu0 0.0
    %1308 = vmatpush1.msra.mxu0 %v1119
    %1309 = vmatprep.subr.mxu0 0.0
    %1310 = vmatpush1.msra.mxu0 %v1116
    %1311 = vmatprep.subr.mxu0 0.0
    %1312 = vmatpush1.msra.mxu0 %v1113
    %1313 = vmatprep.subr.mxu0 0.0
    %1314 = vmatpush2.msra.mxu0 0.0
    %1315 = vmatprep.subr.mxu0 0.0
    %1316 = vmatpush2.msra.mxu0 0.0
    %1317 = vmatprep.subr.mxu0 0.0
    %1318 = vmatpush2.msra.mxu0 0.0
    %1319 = vmatprep.subr.mxu0 0.0
    %1320 = vmatpush2.msra.mxu0 0.0
    %1321 = vmatprep.subr.mxu0 0.0
    %1322 = vmatpush2.msra.mxu0 0.0
    %1323 = vmatprep.subr.mxu0 0.0
    %1324 = vmatpush2.msra.mxu0 0.0
    %1325 = vmatprep.subr.mxu0 0.0
    %1326 = vmatpush2.msra.mxu0 0.0
    %1327 = vmatprep.subr.mxu0 0.0
    %1328 = vmatpush2.msra.mxu0 0.0
    %1329 = vmatprep.subr.mxu0 0.0
    %1330 = vmatpush2.msra.mxu0 0.0
    %1331 = vmatprep.subr.mxu0 0.0
    %1332 = vmatpush2.msra.mxu0 0.0
    %1333 = vmatprep.subr.mxu0 0.0
    %1334 = vmatpush2.msra.mxu0 0.0
    %1335 = vmatprep.subr.mxu0 0.0
    %1336 = vmatpush2.msra.mxu0 0.0
    %1337 = vmatprep.subr.mxu0 0.0
    %1338 = vmatpush2.msra.mxu0 %v1170
    %1339 = vmatprep.subr.mxu0 0.0
    %1340 = vmatpush2.msra.mxu0 %v1167
    %1341 = vmatprep.subr.mxu0 0.0
    %1342 = vmatpush2.msra.mxu0 %v1164
    %1343 = vmatprep.subr.mxu0 0.0
    %1344 = vmatpush2.msra.mxu0 %v1161
    %1345 = vmatprep.mubr.f32.mxu0 %v1172
    %1346 = vmatmul.mubr.f32.gmra.mxu0 %v1082
    %v1347 = vpop.f32.mrf.mxu0
    %v1348 = vadd.f32 0.0, %v1347
    %v1349 = vpop.f32.mrf.mxu0
    %1350 = vmatprep.mubr.f32.mxu0 %v1175
    %1351 = vmatmul.mubr.f32.gmra.mxu0 %v1088
    %v1352 = vpop.f32.mrf.mxu0
    %v1353 = vadd.f32 0.0, %v1352
    %v1354 = vpop.f32.mrf.mxu0
    %1355 = vmatprep.mubr.f32.mxu0 %v1178
    %1356 = vmatmul.mubr.f32.gmra.mxu0 %v1094
    %v1357 = vpop.f32.mrf.mxu0
    %v1358 = vadd.f32 0.0, %v1357
    %v1359 = vpop.f32.mrf.mxu0
    %1360 = vmatprep.mubr.f32.mxu0 %v1181
    %1361 = vmatmul.mubr.f32.gmra.mxu0 %v1100
    %v1362 = vpop.f32.mrf.mxu0
    %v1363 = vadd.f32 0.0, %v1362
    %v1364 = vpop.f32.mrf.mxu0
    %1365 = vmatprep.mubr.f32.mxu0 %v1184
    %1366 = vmatmul.mubr.f32.gmra.mxu0 %v1106
    %v1367 = vpop.f32.mrf.mxu0
    %v1368 = vadd.f32 0.0, %v1367
    %v1369 = vpop.f32.mrf.mxu0
    %1370 = vdwg.mxu0
    %v1371 = vadd.f32 %v876, %v1253
    %v1372 = vadd.f32 %v878, %v1255
    %v1373 = vadd.f32 %v971, %v1348
    %v1374 = vadd.f32 %v882, %v1259
    %v1375 = vadd.f32 %v884, %v1261
    %v1376 = vadd.f32 %v976, %v1353
    %v1377 = vadd.f32 %v888, %v1265
    %v1378 = vadd.f32 %v890, %v1267
    %v1379 = vadd.f32 %v981, %v1358
    %v1380 = vadd.f32 %v894, %v1271
    %v1381 = vadd.f32 %v896, %v1273
    %v1382 = vadd.f32 %v986, %v1363
    %v1383 = vadd.f32 %v900, %v1277
    %v1384 = vadd.f32 %v902, %v1279
    %v1385 = vadd.f32 %v991, %v1368
    %s1386 = scalar_lea.vmem [#allocation5], 120
    %v1387 = vld [vmem:[%s1386] sm:$0xff]
    %v1388 = vld [vmem:[%s1386 + $0x8] sm:$0xff]
    %v1389 = vld [vmem:[%s1386 + $0x10] sm:$0xff]
    %v1390 = vld [vmem:[%s1386 + $0x18] sm:$0xff]
    %v1391 = vld [vmem:[%s1386 + $0x20] sm:$0xf]
    %v1393 = vsel %vm245, %v1387, 0
    %v1396 = vsel %vm245, %v1388, 0
    %v1399 = vsel %vm245, %v1389, 0
    %v1402 = vsel %vm245, %v1390, 0
    %v1405 = vsel %vm245, %v1391, 0
    %1407 = vmatprep.subr.mxu0 0.0
    %1408 = vmatpush1.msra.mxu0 0.0
    %1409 = vmatprep.subr.mxu0 0.0
    %1410 = vmatpush1.msra.mxu0 0.0
    %1411 = vmatprep.subr.mxu0 0.0
    %1412 = vmatpush1.msra.mxu0 0.0
    %1413 = vmatprep.subr.mxu0 0.0
    %1414 = vmatpush1.msra.mxu0 0.0
    %1415 = vmatprep.subr.mxu0 0.0
    %1416 = vmatpush1.msra.mxu0 0.0
    %1417 = vmatprep.subr.mxu0 0.0
    %1418 = vmatpush1.msra.mxu0 0.0
    %1419 = vmatprep.subr.mxu0 %v239
    %1420 = vmatpush1.msra.mxu0 %v238
    %1421 = vmatprep.subr.mxu0 %v237
    %1422 = vmatpush1.msra.mxu0 %v236
    %1423 = vmatprep.subr.mxu0 %v235
    %1424 = vmatpush1.msra.mxu0 %v234
    %1425 = vmatprep.subr.mxu0 %v233
    %1426 = vmatpush1.msra.mxu0 %v232
    %1427 = vmatprep.subr.mxu0 %v231
    %1428 = vmatpush1.msra.mxu0 %v230
    %1429 = vmatprep.subr.mxu0 %v229
    %1430 = vmatpush1.msra.mxu0 %v228
    %1431 = vmatprep.subr.mxu0 %v227
    %1432 = vmatpush1.msra.mxu0 %v226
    %1433 = vmatprep.subr.mxu0 %v225
    %1434 = vmatpush1.msra.mxu0 %v224
    %1435 = vmatprep.subr.mxu0 %v223
    %1436 = vmatpush1.msra.mxu0 %v222
    %1437 = vmatprep.subr.mxu0 %v221
    %1438 = vmatpush1.msra.mxu0 %v220
    %1439 = vmatprep.subr.mxu0 0.0
    %1440 = vmatpush2.msra.mxu0 0.0
    %1441 = vmatprep.subr.mxu0 0.0
    %1442 = vmatpush2.msra.mxu0 0.0
    %1443 = vmatprep.subr.mxu0 0.0
    %1444 = vmatpush2.msra.mxu0 0.0
    %1445 = vmatprep.subr.mxu0 0.0
    %1446 = vmatpush2.msra.mxu0 0.0
    %1447 = vmatprep.subr.mxu0 0.0
    %1448 = vmatpush2.msra.mxu0 0.0
    %1449 = vmatprep.subr.mxu0 0.0
    %1450 = vmatpush2.msra.mxu0 0.0
    %1451 = vmatprep.subr.mxu0 0.0
    %1452 = vmatpush2.msra.mxu0 0.0
    %1453 = vmatprep.subr.mxu0 0.0
    %1454 = vmatpush2.msra.mxu0 0.0
    %1455 = vmatprep.subr.mxu0 0.0
    %1456 = vmatpush2.msra.mxu0 0.0
    %1457 = vmatprep.subr.mxu0 0.0
    %1458 = vmatpush2.msra.mxu0 0.0
    %1459 = vmatprep.subr.mxu0 0.0
    %1460 = vmatpush2.msra.mxu0 0.0
    %1461 = vmatprep.subr.mxu0 0.0
    %1462 = vmatpush2.msra.mxu0 0.0
    %1463 = vmatprep.subr.mxu0 0.0
    %1464 = vmatpush2.msra.mxu0 0.0
    %1465 = vmatprep.subr.mxu0 0.0
    %1466 = vmatpush2.msra.mxu0 0.0
    %1467 = vmatprep.subr.mxu0 0.0
    %1468 = vmatpush2.msra.mxu0 0.0
    %1469 = vmatprep.subr.mxu0 0.0
    %1470 = vmatpush2.msra.mxu0 0.0
    %1471 = vmatprep.mubr.f32.mxu0 0.0
    %1472 = vmatmul.mubr.f32.gmra.mxu0 %v1393
    %v1473 = vpop.f32.mrf.mxu0
    %v1474 = vadd.f32 0.0, %v1473
    %v1475 = vpop.f32.mrf.mxu0
    %v1476 = vadd.f32 0.0, %v1475
    %1477 = vmatprep.mubr.f32.mxu0 0.0
    %1478 = vmatmul.mubr.f32.gmra.mxu0 %v1396
    %v1479 = vpop.f32.mrf.mxu0
    %v1480 = vadd.f32 0.0, %v1479
    %v1481 = vpop.f32.mrf.mxu0
    %v1482 = vadd.f32 0.0, %v1481
    %1483 = vmatprep.mubr.f32.mxu0 0.0
    %1484 = vmatmul.mubr.f32.gmra.mxu0 %v1399
    %v1485 = vpop.f32.mrf.mxu0
    %v1486 = vadd.f32 0.0, %v1485
    %v1487 = vpop.f32.mrf.mxu0
    %v1488 = vadd.f32 0.0, %v1487
    %1489 = vmatprep.mubr.f32.mxu0 0.0
    %1490 = vmatmul.mubr.f32.gmra.mxu0 %v1402
    %v1491 = vpop.f32.mrf.mxu0
    %v1492 = vadd.f32 0.0, %v1491
    %v1493 = vpop.f32.mrf.mxu0
    %v1494 = vadd.f32 0.0, %v1493
    %1495 = vmatprep.mubr.f32.mxu0 0.0
    %1496 = vmatmul.mubr.f32.gmra.mxu0 %v1405
    %v1497 = vpop.f32.mrf.mxu0
    %v1498 = vadd.f32 0.0, %v1497
    %v1499 = vpop.f32.mrf.mxu0
    %v1500 = vadd.f32 0.0, %v1499
    %1501 = vdwg.mxu0
    %s1502 = scalar_lea.vmem [#allocation7], 1440
    %v1503 = vld [vmem:[%s1502] sm:$0xff]
    %v1504 = vld [vmem:[%s1502 + $0x8] sm:$0xff]
    %v1505 = vld [vmem:[%s1502 + $0x10] sm:$0xff]
    %v1506 = vld [vmem:[%s1502 + $0x18] sm:$0xff]
    %v1507 = vld [vmem:[%s1502 + $0x20] sm:$0xff]
    %v1508 = vld [vmem:[%s1502 + $0x28] sm:$0xff]
    %v1509 = vld [vmem:[%s1502 + $0x30] sm:$0xff]
    %v1510 = vld [vmem:[%s1502 + $0x38] sm:$0xff]
    %v1511 = vld [vmem:[%s1502 + $0x40] sm:$0xff]
    %v1512 = vld [vmem:[%s1502 + $0x48] sm:$0xff]
    %v1513 = vld [vmem:[%s1502 + $0x50] sm:$0xff]
    %v1514 = vld [vmem:[%s1502 + $0x58] sm:$0xff]
    %v1515 = vld [vmem:[%s1502 + $0x60] sm:$0xff]
    %v1516 = vld [vmem:[%s1502 + $0x68] sm:$0xff]
    %v1517 = vld [vmem:[%s1502 + $0x70] sm:$0xff]
    %v1518 = vld [vmem:[%s1502 + $0x78] sm:$0xff]
    %v1519 = vld [vmem:[%s1502 + $0x80] sm:$0xff]
    %v1520 = vld [vmem:[%s1502 + $0x88] sm:$0xff]
    %v1521 = vld [vmem:[%s1502 + $0x90] sm:$0xff]
    %v1522 = vld [vmem:[%s1502 + $0x98] sm:$0xff]
    %v1523 = vld [vmem:[%s1502 + $0xa0] sm:$0xff]
    %v1524 = vld [vmem:[%s1502 + $0xa8] sm:$0xff]
    %v1525 = vld [vmem:[%s1502 + $0xb0] sm:$0xff]
    %v1526 = vld [vmem:[%s1502 + $0xb8] sm:$0xff]
    %v1527 = vld [vmem:[%s1502 + $0xc0] sm:$0xff]
    %v1528 = vld [vmem:[%s1502 + $0xc8] sm:$0xff]
    %v1529 = vld [vmem:[%s1502 + $0xd0] sm:$0xff]
    %v1530 = vld [vmem:[%s1502 + $0xd8] sm:$0xff]
    %v1531 = vld [vmem:[%s1502 + $0xe0] sm:$0xff]
    %v1532 = vld [vmem:[%s1502 + $0xe8] sm:$0xff]
    %v1533 = vld [vmem:[%s1502 + $0xf0] sm:$0xff]
    %v1534 = vld [vmem:[%s1502 + $0xf8] sm:$0xff]
    %v1535 = vld [vmem:[%s1502 + $0x100] sm:$0xff]
    %v1536 = vld [vmem:[%s1502 + $0x108] sm:$0xff]
    %v1537 = vld [vmem:[%s1502 + $0x110] sm:$0xff]
    %v1538 = vld [vmem:[%s1502 + $0x118] sm:$0xff]
    %v1539 = vld [vmem:[%s1502 + $0x120] sm:$0xff]
    %v1540 = vld [vmem:[%s1502 + $0x128] sm:$0xff]
    %v1541 = vld [vmem:[%s1502 + $0x130] sm:$0xff]
    %v1542 = vld [vmem:[%s1502 + $0x138] sm:$0xff]
    %v1543 = vld [vmem:[%s1502 + $0x140] sm:$0xff]
    %v1544 = vld [vmem:[%s1502 + $0x148] sm:$0xff]
    %v1545 = vld [vmem:[%s1502 + $0x150] sm:$0xff]
    %v1546 = vld [vmem:[%s1502 + $0x158] sm:$0xff]
    %v1547 = vld [vmem:[%s1502 + $0x160] sm:$0xff]
    %v1548 = vld [vmem:[%s1502 + $0x168] sm:$0xff]
    %v1549 = vld [vmem:[%s1502 + $0x170] sm:$0xff]
    %v1550 = vld [vmem:[%s1502 + $0x178] sm:$0xff]
    %v1551 = vld [vmem:[%s1502 + $0x180] sm:$0xff]
    %v1552 = vld [vmem:[%s1502 + $0x188] sm:$0xff]
    %v1553 = vld [vmem:[%s1502 + $0x190] sm:$0xff]
    %v1554 = vld [vmem:[%s1502 + $0x198] sm:$0xff]
    %v1555 = vld [vmem:[%s1502 + $0x1a0] sm:$0xff]
    %v1556 = vld [vmem:[%s1502 + $0x1a8] sm:$0xff]
    %v1557 = vld [vmem:[%s1502 + $0x1b0] sm:$0xff]
    %v1558 = vld [vmem:[%s1502 + $0x1b8] sm:$0xff]
    %v1559 = vld [vmem:[%s1502 + $0x1c0] sm:$0xff]
    %v1560 = vld [vmem:[%s1502 + $0x1c8] sm:$0xff]
    %v1561 = vld [vmem:[%s1502 + $0x1d0] sm:$0xff]
    %v1562 = vld [vmem:[%s1502 + $0x1d8] sm:$0xff]
    %v1564 = vsel %vm593, %v1476, 0
    %v1567 = vsel %vm593, %v1482, 0
    %v1570 = vsel %vm593, %v1488, 0
    %v1573 = vsel %vm593, %v1494, 0
    %v1576 = vsel %vm593, %v1500, 0
    %1578 = vmatprep.subr.mxu0 %v1549
    %1579 = vmatpush1.msra.mxu0 %v1548
    %1580 = vmatprep.subr.mxu0 %v1546
    %1581 = vmatpush1.msra.mxu0 %v1545
    %1582 = vmatprep.subr.mxu0 %v1543
    %1583 = vmatpush1.msra.mxu0 %v1542
    %1584 = vmatprep.subr.mxu0 %v1540
    %1585 = vmatpush1.msra.mxu0 %v1539
    %1586 = vmatprep.subr.mxu0 %v1537
    %1587 = vmatpush1.msra.mxu0 %v1536
    %1588 = vmatprep.subr.mxu0 %v1534
    %1589 = vmatpush1.msra.mxu0 %v1533
    %1590 = vmatprep.subr.mxu0 %v1531
    %1591 = vmatpush1.msra.mxu0 %v1530
    %1592 = vmatprep.subr.mxu0 %v1528
    %1593 = vmatpush1.msra.mxu0 %v1527
    %1594 = vmatprep.subr.mxu0 %v1525
    %1595 = vmatpush1.msra.mxu0 %v1524
    %1596 = vmatprep.subr.mxu0 %v1522
    %1597 = vmatpush1.msra.mxu0 %v1521
    %1598 = vmatprep.subr.mxu0 %v1519
    %1599 = vmatpush1.msra.mxu0 %v1518
    %1600 = vmatprep.subr.mxu0 %v1516
    %1601 = vmatpush1.msra.mxu0 %v1515
    %1602 = vmatprep.subr.mxu0 %v1513
    %1603 = vmatpush1.msra.mxu0 %v1512
    %1604 = vmatprep.subr.mxu0 %v1510
    %1605 = vmatpush1.msra.mxu0 %v1509
    %1606 = vmatprep.subr.mxu0 %v1507
    %1607 = vmatpush1.msra.mxu0 %v1506
    %1608 = vmatprep.subr.mxu0 %v1504
    %1609 = vmatpush1.msra.mxu0 %v1503
    %1610 = vmatprep.subr.mxu0 0.0
    %1611 = vmatpush2.msra.mxu0 0.0
    %1612 = vmatprep.subr.mxu0 0.0
    %1613 = vmatpush2.msra.mxu0 0.0
    %1614 = vmatprep.subr.mxu0 0.0
    %1615 = vmatpush2.msra.mxu0 0.0
    %1616 = vmatprep.subr.mxu0 0.0
    %1617 = vmatpush2.msra.mxu0 0.0
    %1618 = vmatprep.subr.mxu0 0.0
    %1619 = vmatpush2.msra.mxu0 0.0
    %1620 = vmatprep.subr.mxu0 0.0
    %1621 = vmatpush2.msra.mxu0 0.0
    %1622 = vmatprep.subr.mxu0 0.0
    %1623 = vmatpush2.msra.mxu0 0.0
    %1624 = vmatprep.subr.mxu0 0.0
    %1625 = vmatpush2.msra.mxu0 0.0
    %1626 = vmatprep.subr.mxu0 0.0
    %1627 = vmatpush2.msra.mxu0 0.0
    %1628 = vmatprep.subr.mxu0 0.0
    %1629 = vmatpush2.msra.mxu0 0.0
    %1630 = vmatprep.subr.mxu0 0.0
    %1631 = vmatpush2.msra.mxu0 0.0
    %1632 = vmatprep.subr.mxu0 0.0
    %1633 = vmatpush2.msra.mxu0 0.0
    %1634 = vmatprep.subr.mxu0 %v1561
    %1635 = vmatpush2.msra.mxu0 %v1560
    %1636 = vmatprep.subr.mxu0 %v1558
    %1637 = vmatpush2.msra.mxu0 %v1557
    %1638 = vmatprep.subr.mxu0 %v1555
    %1639 = vmatpush2.msra.mxu0 %v1554
    %1640 = vmatprep.subr.mxu0 %v1552
    %1641 = vmatpush2.msra.mxu0 %v1551
    %1642 = vmatprep.mubr.f32.mxu0 %v1564
    %1643 = vmatmul.mubr.f32.gmra.mxu0 %v1474
    %v1644 = vpop.f32.mrf.mxu0
    %v1645 = vadd.f32 0.0, %v1644
    %v1646 = vpop.f32.mrf.mxu0
    %v1647 = vadd.f32 0.0, %v1646
    %1648 = vmatprep.mubr.f32.mxu0 %v1567
    %1649 = vmatmul.mubr.f32.gmra.mxu0 %v1480
    %v1650 = vpop.f32.mrf.mxu0
    %v1651 = vadd.f32 0.0, %v1650
    %v1652 = vpop.f32.mrf.mxu0
    %v1653 = vadd.f32 0.0, %v1652
    %1654 = vmatprep.mubr.f32.mxu0 %v1570
    %1655 = vmatmul.mubr.f32.gmra.mxu0 %v1486
    %v1656 = vpop.f32.mrf.mxu0
    %v1657 = vadd.f32 0.0, %v1656
    %v1658 = vpop.f32.mrf.mxu0
    %v1659 = vadd.f32 0.0, %v1658
    %1660 = vmatprep.mubr.f32.mxu0 %v1573
    %1661 = vmatmul.mubr.f32.gmra.mxu0 %v1492
    %v1662 = vpop.f32.mrf.mxu0
    %v1663 = vadd.f32 0.0, %v1662
    %v1664 = vpop.f32.mrf.mxu0
    %v1665 = vadd.f32 0.0, %v1664
    %1666 = vmatprep.mubr.f32.mxu0 %v1576
    %1667 = vmatmul.mubr.f32.gmra.mxu0 %v1498
    %v1668 = vpop.f32.mrf.mxu0
    %v1669 = vadd.f32 0.0, %v1668
    %v1670 = vpop.f32.mrf.mxu0
    %v1671 = vadd.f32 0.0, %v1670
    %1672 = vdwg.mxu0
    %1673 = vmatprep.subr.mxu0 0.0
    %1674 = vmatpush1.msra.mxu0 %v1550
    %1675 = vmatprep.subr.mxu0 0.0
    %1676 = vmatpush1.msra.mxu0 %v1547
    %1677 = vmatprep.subr.mxu0 0.0
    %1678 = vmatpush1.msra.mxu0 %v1544
    %1679 = vmatprep.subr.mxu0 0.0
    %1680 = vmatpush1.msra.mxu0 %v1541
    %1681 = vmatprep.subr.mxu0 0.0
    %1682 = vmatpush1.msra.mxu0 %v1538
    %1683 = vmatprep.subr.mxu0 0.0
    %1684 = vmatpush1.msra.mxu0 %v1535
    %1685 = vmatprep.subr.mxu0 0.0
    %1686 = vmatpush1.msra.mxu0 %v1532
    %1687 = vmatprep.subr.mxu0 0.0
    %1688 = vmatpush1.msra.mxu0 %v1529
    %1689 = vmatprep.subr.mxu0 0.0
    %1690 = vmatpush1.msra.mxu0 %v1526
    %1691 = vmatprep.subr.mxu0 0.0
    %1692 = vmatpush1.msra.mxu0 %v1523
    %1693 = vmatprep.subr.mxu0 0.0
    %1694 = vmatpush1.msra.mxu0 %v1520
    %1695 = vmatprep.subr.mxu0 0.0
    %1696 = vmatpush1.msra.mxu0 %v1517
    %1697 = vmatprep.subr.mxu0 0.0
    %1698 = vmatpush1.msra.mxu0 %v1514
    %1699 = vmatprep.subr.mxu0 0.0
    %1700 = vmatpush1.msra.mxu0 %v1511
    %1701 = vmatprep.subr.mxu0 0.0
    %1702 = vmatpush1.msra.mxu0 %v1508
    %1703 = vmatprep.subr.mxu0 0.0
    %1704 = vmatpush1.msra.mxu0 %v1505
    %1705 = vmatprep.subr.mxu0 0.0
    %1706 = vmatpush2.msra.mxu0 0.0
    %1707 = vmatprep.subr.mxu0 0.0
    %1708 = vmatpush2.msra.mxu0 0.0
    %1709 = vmatprep.subr.mxu0 0.0
    %1710 = vmatpush2.msra.mxu0 0.0
    %1711 = vmatprep.subr.mxu0 0.0
    %1712 = vmatpush2.msra.mxu0 0.0
    %1713 = vmatprep.subr.mxu0 0.0
    %1714 = vmatpush2.msra.mxu0 0.0
    %1715 = vmatprep.subr.mxu0 0.0
    %1716 = vmatpush2.msra.mxu0 0.0
    %1717 = vmatprep.subr.mxu0 0.0
    %1718 = vmatpush2.msra.mxu0 0.0
    %1719 = vmatprep.subr.mxu0 0.0
    %1720 = vmatpush2.msra.mxu0 0.0
    %1721 = vmatprep.subr.mxu0 0.0
    %1722 = vmatpush2.msra.mxu0 0.0
    %1723 = vmatprep.subr.mxu0 0.0
    %1724 = vmatpush2.msra.mxu0 0.0
    %1725 = vmatprep.subr.mxu0 0.0
    %1726 = vmatpush2.msra.mxu0 0.0
    %1727 = vmatprep.subr.mxu0 0.0
    %1728 = vmatpush2.msra.mxu0 0.0
    %1729 = vmatprep.subr.mxu0 0.0
    %1730 = vmatpush2.msra.mxu0 %v1562
    %1731 = vmatprep.subr.mxu0 0.0
    %1732 = vmatpush2.msra.mxu0 %v1559
    %1733 = vmatprep.subr.mxu0 0.0
    %1734 = vmatpush2.msra.mxu0 %v1556
    %1735 = vmatprep.subr.mxu0 0.0
    %1736 = vmatpush2.msra.mxu0 %v1553
    %1737 = vmatprep.mubr.f32.mxu0 %v1564
    %1738 = vmatmul.mubr.f32.gmra.mxu0 %v1474
    %v1739 = vpop.f32.mrf.mxu0
    %v1740 = vadd.f32 0.0, %v1739
    %v1741 = vpop.f32.mrf.mxu0
    %1742 = vmatprep.mubr.f32.mxu0 %v1567
    %1743 = vmatmul.mubr.f32.gmra.mxu0 %v1480
    %v1744 = vpop.f32.mrf.mxu0
    %v1745 = vadd.f32 0.0, %v1744
    %v1746 = vpop.f32.mrf.mxu0
    %1747 = vmatprep.mubr.f32.mxu0 %v1570
    %1748 = vmatmul.mubr.f32.gmra.mxu0 %v1486
    %v1749 = vpop.f32.mrf.mxu0
    %v1750 = vadd.f32 0.0, %v1749
    %v1751 = vpop.f32.mrf.mxu0
    %1752 = vmatprep.mubr.f32.mxu0 %v1573
    %1753 = vmatmul.mubr.f32.gmra.mxu0 %v1492
    %v1754 = vpop.f32.mrf.mxu0
    %v1755 = vadd.f32 0.0, %v1754
    %v1756 = vpop.f32.mrf.mxu0
    %1757 = vmatprep.mubr.f32.mxu0 %v1576
    %1758 = vmatmul.mubr.f32.gmra.mxu0 %v1498
    %v1759 = vpop.f32.mrf.mxu0
    %v1760 = vadd.f32 0.0, %v1759
    %v1761 = vpop.f32.mrf.mxu0
    %1762 = vdwg.mxu0
    %v1763 = vadd.f32 %v1371, %v1645
    %v1764 = vadd.f32 %v1372, %v1647
    %v1765 = vadd.f32 %v1373, %v1740
    %v1766 = vadd.f32 %v1374, %v1651
    %v1767 = vadd.f32 %v1375, %v1653
    %v1768 = vadd.f32 %v1376, %v1745
    %v1769 = vadd.f32 %v1377, %v1657
    %v1770 = vadd.f32 %v1378, %v1659
    %v1771 = vadd.f32 %v1379, %v1750
    %v1772 = vadd.f32 %v1380, %v1663
    %v1773 = vadd.f32 %v1381, %v1665
    %v1774 = vadd.f32 %v1382, %v1755
    %v1775 = vadd.f32 %v1383, %v1669
    %v1776 = vadd.f32 %v1384, %v1671
    %v1777 = vadd.f32 %v1385, %v1760
    %s1778 = scalar_lea.vmem [#allocation5], 160
    %v1779 = vld [vmem:[%s1778] sm:$0xff]
    %v1780 = vld [vmem:[%s1778 + $0x8] sm:$0xff]
    %v1781 = vld [vmem:[%s1778 + $0x10] sm:$0xff]
    %v1782 = vld [vmem:[%s1778 + $0x18] sm:$0xff]
    %v1783 = vld [vmem:[%s1778 + $0x20] sm:$0xf]
    %v1785 = vsel %vm245, %v1779, 0
    %v1788 = vsel %vm245, %v1780, 0
    %v1791 = vsel %vm245, %v1781, 0
    %v1794 = vsel %vm245, %v1782, 0
    %v1797 = vsel %vm245, %v1783, 0
    %1799 = vmatprep.subr.mxu0 0.0
    %1800 = vmatpush1.msra.mxu0 0.0
    %1801 = vmatprep.subr.mxu0 0.0
    %1802 = vmatpush1.msra.mxu0 0.0
    %1803 = vmatprep.subr.mxu0 0.0
    %1804 = vmatpush1.msra.mxu0 0.0
    %1805 = vmatprep.subr.mxu0 0.0
    %1806 = vmatpush1.msra.mxu0 0.0
    %1807 = vmatprep.subr.mxu0 0.0
    %1808 = vmatpush1.msra.mxu0 0.0
    %1809 = vmatprep.subr.mxu0 0.0
    %1810 = vmatpush1.msra.mxu0 0.0
    %1811 = vmatprep.subr.mxu0 %v239
    %1812 = vmatpush1.msra.mxu0 %v238
    %1813 = vmatprep.subr.mxu0 %v237
    %1814 = vmatpush1.msra.mxu0 %v236
    %1815 = vmatprep.subr.mxu0 %v235
    %1816 = vmatpush1.msra.mxu0 %v234
    %1817 = vmatprep.subr.mxu0 %v233
    %1818 = vmatpush1.msra.mxu0 %v232
    %1819 = vmatprep.subr.mxu0 %v231
    %1820 = vmatpush1.msra.mxu0 %v230
    %1821 = vmatprep.subr.mxu0 %v229
    %1822 = vmatpush1.msra.mxu0 %v228
    %1823 = vmatprep.subr.mxu0 %v227
    %1824 = vmatpush1.msra.mxu0 %v226
    %1825 = vmatprep.subr.mxu0 %v225
    %1826 = vmatpush1.msra.mxu0 %v224
    %1827 = vmatprep.subr.mxu0 %v223
    %1828 = vmatpush1.msra.mxu0 %v222
    %1829 = vmatprep.subr.mxu0 %v221
    %1830 = vmatpush1.msra.mxu0 %v220
    %1831 = vmatprep.subr.mxu0 0.0
    %1832 = vmatpush2.msra.mxu0 0.0
    %1833 = vmatprep.subr.mxu0 0.0
    %1834 = vmatpush2.msra.mxu0 0.0
    %1835 = vmatprep.subr.mxu0 0.0
    %1836 = vmatpush2.msra.mxu0 0.0
    %1837 = vmatprep.subr.mxu0 0.0
    %1838 = vmatpush2.msra.mxu0 0.0
    %1839 = vmatprep.subr.mxu0 0.0
    %1840 = vmatpush2.msra.mxu0 0.0
    %1841 = vmatprep.subr.mxu0 0.0
    %1842 = vmatpush2.msra.mxu0 0.0
    %1843 = vmatprep.subr.mxu0 0.0
    %1844 = vmatpush2.msra.mxu0 0.0
    %1845 = vmatprep.subr.mxu0 0.0
    %1846 = vmatpush2.msra.mxu0 0.0
    %1847 = vmatprep.subr.mxu0 0.0
    %1848 = vmatpush2.msra.mxu0 0.0
    %1849 = vmatprep.subr.mxu0 0.0
    %1850 = vmatpush2.msra.mxu0 0.0
    %1851 = vmatprep.subr.mxu0 0.0
    %1852 = vmatpush2.msra.mxu0 0.0
    %1853 = vmatprep.subr.mxu0 0.0
    %1854 = vmatpush2.msra.mxu0 0.0
    %1855 = vmatprep.subr.mxu0 0.0
    %1856 = vmatpush2.msra.mxu0 0.0
    %1857 = vmatprep.subr.mxu0 0.0
    %1858 = vmatpush2.msra.mxu0 0.0
    %1859 = vmatprep.subr.mxu0 0.0
    %1860 = vmatpush2.msra.mxu0 0.0
    %1861 = vmatprep.subr.mxu0 0.0
    %1862 = vmatpush2.msra.mxu0 0.0
    %1863 = vmatprep.mubr.f32.mxu0 0.0
    %1864 = vmatmul.mubr.f32.gmra.mxu0 %v1785
    %v1865 = vpop.f32.mrf.mxu0
    %v1866 = vadd.f32 0.0, %v1865
    %v1867 = vpop.f32.mrf.mxu0
    %v1868 = vadd.f32 0.0, %v1867
    %1869 = vmatprep.mubr.f32.mxu0 0.0
    %1870 = vmatmul.mubr.f32.gmra.mxu0 %v1788
    %v1871 = vpop.f32.mrf.mxu0
    %v1872 = vadd.f32 0.0, %v1871
    %v1873 = vpop.f32.mrf.mxu0
    %v1874 = vadd.f32 0.0, %v1873
    %1875 = vmatprep.mubr.f32.mxu0 0.0
    %1876 = vmatmul.mubr.f32.gmra.mxu0 %v1791
    %v1877 = vpop.f32.mrf.mxu0
    %v1878 = vadd.f32 0.0, %v1877
    %v1879 = vpop.f32.mrf.mxu0
    %v1880 = vadd.f32 0.0, %v1879
    %1881 = vmatprep.mubr.f32.mxu0 0.0
    %1882 = vmatmul.mubr.f32.gmra.mxu0 %v1794
    %v1883 = vpop.f32.mrf.mxu0
    %v1884 = vadd.f32 0.0, %v1883
    %v1885 = vpop.f32.mrf.mxu0
    %v1886 = vadd.f32 0.0, %v1885
    %1887 = vmatprep.mubr.f32.mxu0 0.0
    %1888 = vmatmul.mubr.f32.gmra.mxu0 %v1797
    %v1889 = vpop.f32.mrf.mxu0
    %v1890 = vadd.f32 0.0, %v1889
    %v1891 = vpop.f32.mrf.mxu0
    %v1892 = vadd.f32 0.0, %v1891
    %1893 = vdwg.mxu0
    %s1894 = scalar_lea.vmem [#allocation7], 1920
    %v1895 = vld [vmem:[%s1894] sm:$0xff]
    %v1896 = vld [vmem:[%s1894 + $0x8] sm:$0xff]
    %v1897 = vld [vmem:[%s1894 + $0x10] sm:$0xff]
    %v1898 = vld [vmem:[%s1894 + $0x18] sm:$0xff]
    %v1899 = vld [vmem:[%s1894 + $0x20] sm:$0xff]
    %v1900 = vld [vmem:[%s1894 + $0x28] sm:$0xff]
    %v1901 = vld [vmem:[%s1894 + $0x30] sm:$0xff]
    %v1902 = vld [vmem:[%s1894 + $0x38] sm:$0xff]
    %v1903 = vld [vmem:[%s1894 + $0x40] sm:$0xff]
    %v1904 = vld [vmem:[%s1894 + $0x48] sm:$0xff]
    %v1905 = vld [vmem:[%s1894 + $0x50] sm:$0xff]
    %v1906 = vld [vmem:[%s1894 + $0x58] sm:$0xff]
    %v1907 = vld [vmem:[%s1894 + $0x60] sm:$0xff]
    %v1908 = vld [vmem:[%s1894 + $0x68] sm:$0xff]
    %v1909 = vld [vmem:[%s1894 + $0x70] sm:$0xff]
    %v1910 = vld [vmem:[%s1894 + $0x78] sm:$0xff]
    %v1911 = vld [vmem:[%s1894 + $0x80] sm:$0xff]
    %v1912 = vld [vmem:[%s1894 + $0x88] sm:$0xff]
    %v1913 = vld [vmem:[%s1894 + $0x90] sm:$0xff]
    %v1914 = vld [vmem:[%s1894 + $0x98] sm:$0xff]
    %v1915 = vld [vmem:[%s1894 + $0xa0] sm:$0xff]
    %v1916 = vld [vmem:[%s1894 + $0xa8] sm:$0xff]
    %v1917 = vld [vmem:[%s1894 + $0xb0] sm:$0xff]
    %v1918 = vld [vmem:[%s1894 + $0xb8] sm:$0xff]
    %v1919 = vld [vmem:[%s1894 + $0xc0] sm:$0xff]
    %v1920 = vld [vmem:[%s1894 + $0xc8] sm:$0xff]
    %v1921 = vld [vmem:[%s1894 + $0xd0] sm:$0xff]
    %v1922 = vld [vmem:[%s1894 + $0xd8] sm:$0xff]
    %v1923 = vld [vmem:[%s1894 + $0xe0] sm:$0xff]
    %v1924 = vld [vmem:[%s1894 + $0xe8] sm:$0xff]
    %v1925 = vld [vmem:[%s1894 + $0xf0] sm:$0xff]
    %v1926 = vld [vmem:[%s1894 + $0xf8] sm:$0xff]
    %v1927 = vld [vmem:[%s1894 + $0x100] sm:$0xff]
    %v1928 = vld [vmem:[%s1894 + $0x108] sm:$0xff]
    %v1929 = vld [vmem:[%s1894 + $0x110] sm:$0xff]
    %v1930 = vld [vmem:[%s1894 + $0x118] sm:$0xff]
    %v1931 = vld [vmem:[%s1894 + $0x120] sm:$0xff]
    %v1932 = vld [vmem:[%s1894 + $0x128] sm:$0xff]
    %v1933 = vld [vmem:[%s1894 + $0x130] sm:$0xff]
    %v1934 = vld [vmem:[%s1894 + $0x138] sm:$0xff]
    %v1935 = vld [vmem:[%s1894 + $0x140] sm:$0xff]
    %v1936 = vld [vmem:[%s1894 + $0x148] sm:$0xff]
    %v1937 = vld [vmem:[%s1894 + $0x150] sm:$0xff]
    %v1938 = vld [vmem:[%s1894 + $0x158] sm:$0xff]
    %v1939 = vld [vmem:[%s1894 + $0x160] sm:$0xff]
    %v1940 = vld [vmem:[%s1894 + $0x168] sm:$0xff]
    %v1941 = vld [vmem:[%s1894 + $0x170] sm:$0xff]
    %v1942 = vld [vmem:[%s1894 + $0x178] sm:$0xff]
    %v1943 = vld [vmem:[%s1894 + $0x180] sm:$0xff]
    %v1944 = vld [vmem:[%s1894 + $0x188] sm:$0xff]
    %v1945 = vld [vmem:[%s1894 + $0x190] sm:$0xff]
    %v1946 = vld [vmem:[%s1894 + $0x198] sm:$0xff]
    %v1947 = vld [vmem:[%s1894 + $0x1a0] sm:$0xff]
    %v1948 = vld [vmem:[%s1894 + $0x1a8] sm:$0xff]
    %v1949 = vld [vmem:[%s1894 + $0x1b0] sm:$0xff]
    %v1950 = vld [vmem:[%s1894 + $0x1b8] sm:$0xff]
    %v1951 = vld [vmem:[%s1894 + $0x1c0] sm:$0xff]
    %v1952 = vld [vmem:[%s1894 + $0x1c8] sm:$0xff]
    %v1953 = vld [vmem:[%s1894 + $0x1d0] sm:$0xff]
    %v1954 = vld [vmem:[%s1894 + $0x1d8] sm:$0xff]
    %v1956 = vsel %vm593, %v1868, 0
    %v1959 = vsel %vm593, %v1874, 0
    %v1962 = vsel %vm593, %v1880, 0
    %v1965 = vsel %vm593, %v1886, 0
    %v1968 = vsel %vm593, %v1892, 0
    %1970 = vmatprep.subr.mxu0 %v1941
    %1971 = vmatpush1.msra.mxu0 %v1940
    %1972 = vmatprep.subr.mxu0 %v1938
    %1973 = vmatpush1.msra.mxu0 %v1937
    %1974 = vmatprep.subr.mxu0 %v1935
    %1975 = vmatpush1.msra.mxu0 %v1934
    %1976 = vmatprep.subr.mxu0 %v1932
    %1977 = vmatpush1.msra.mxu0 %v1931
    %1978 = vmatprep.subr.mxu0 %v1929
    %1979 = vmatpush1.msra.mxu0 %v1928
    %1980 = vmatprep.subr.mxu0 %v1926
    %1981 = vmatpush1.msra.mxu0 %v1925
    %1982 = vmatprep.subr.mxu0 %v1923
    %1983 = vmatpush1.msra.mxu0 %v1922
    %1984 = vmatprep.subr.mxu0 %v1920
    %1985 = vmatpush1.msra.mxu0 %v1919
    %1986 = vmatprep.subr.mxu0 %v1917
    %1987 = vmatpush1.msra.mxu0 %v1916
    %1988 = vmatprep.subr.mxu0 %v1914
    %1989 = vmatpush1.msra.mxu0 %v1913
    %1990 = vmatprep.subr.mxu0 %v1911
    %1991 = vmatpush1.msra.mxu0 %v1910
    %1992 = vmatprep.subr.mxu0 %v1908
    %1993 = vmatpush1.msra.mxu0 %v1907
    %1994 = vmatprep.subr.mxu0 %v1905
    %1995 = vmatpush1.msra.mxu0 %v1904
    %1996 = vmatprep.subr.mxu0 %v1902
    %1997 = vmatpush1.msra.mxu0 %v1901
    %1998 = vmatprep.subr.mxu0 %v1899
    %1999 = vmatpush1.msra.mxu0 %v1898
    %2000 = vmatprep.subr.mxu0 %v1896
    %2001 = vmatpush1.msra.mxu0 %v1895
    %2002 = vmatprep.subr.mxu0 0.0
    %2003 = vmatpush2.msra.mxu0 0.0
    %2004 = vmatprep.subr.mxu0 0.0
    %2005 = vmatpush2.msra.mxu0 0.0
    %2006 = vmatprep.subr.mxu0 0.0
    %2007 = vmatpush2.msra.mxu0 0.0
    %2008 = vmatprep.subr.mxu0 0.0
    %2009 = vmatpush2.msra.mxu0 0.0
    %2010 = vmatprep.subr.mxu0 0.0
    %2011 = vmatpush2.msra.mxu0 0.0
    %2012 = vmatprep.subr.mxu0 0.0
    %2013 = vmatpush2.msra.mxu0 0.0
    %2014 = vmatprep.subr.mxu0 0.0
    %2015 = vmatpush2.msra.mxu0 0.0
    %2016 = vmatprep.subr.mxu0 0.0
    %2017 = vmatpush2.msra.mxu0 0.0
    %2018 = vmatprep.subr.mxu0 0.0
    %2019 = vmatpush2.msra.mxu0 0.0
    %2020 = vmatprep.subr.mxu0 0.0
    %2021 = vmatpush2.msra.mxu0 0.0
    %2022 = vmatprep.subr.mxu0 0.0
    %2023 = vmatpush2.msra.mxu0 0.0
    %2024 = vmatprep.subr.mxu0 0.0
    %2025 = vmatpush2.msra.mxu0 0.0
    %2026 = vmatprep.subr.mxu0 %v1953
    %2027 = vmatpush2.msra.mxu0 %v1952
    %2028 = vmatprep.subr.mxu0 %v1950
    %2029 = vmatpush2.msra.mxu0 %v1949
    %2030 = vmatprep.subr.mxu0 %v1947
    %2031 = vmatpush2.msra.mxu0 %v1946
    %2032 = vmatprep.subr.mxu0 %v1944
    %2033 = vmatpush2.msra.mxu0 %v1943
    %2034 = vmatprep.mubr.f32.mxu0 %v1956
    %2035 = vmatmul.mubr.f32.gmra.mxu0 %v1866
    %v2036 = vpop.f32.mrf.mxu0
    %v2037 = vadd.f32 0.0, %v2036
    %v2038 = vpop.f32.mrf.mxu0
    %v2039 = vadd.f32 0.0, %v2038
    %2040 = vmatprep.mubr.f32.mxu0 %v1959
    %2041 = vmatmul.mubr.f32.gmra.mxu0 %v1872
    %v2042 = vpop.f32.mrf.mxu0
    %v2043 = vadd.f32 0.0, %v2042
    %v2044 = vpop.f32.mrf.mxu0
    %v2045 = vadd.f32 0.0, %v2044
    %2046 = vmatprep.mubr.f32.mxu0 %v1962
    %2047 = vmatmul.mubr.f32.gmra.mxu0 %v1878
    %v2048 = vpop.f32.mrf.mxu0
    %v2049 = vadd.f32 0.0, %v2048
    %v2050 = vpop.f32.mrf.mxu0
    %v2051 = vadd.f32 0.0, %v2050
    %2052 = vmatprep.mubr.f32.mxu0 %v1965
    %2053 = vmatmul.mubr.f32.gmra.mxu0 %v1884
    %v2054 = vpop.f32.mrf.mxu0
    %v2055 = vadd.f32 0.0, %v2054
    %v2056 = vpop.f32.mrf.mxu0
    %v2057 = vadd.f32 0.0, %v2056
    %2058 = vmatprep.mubr.f32.mxu0 %v1968
    %2059 = vmatmul.mubr.f32.gmra.mxu0 %v1890
    %v2060 = vpop.f32.mrf.mxu0
    %v2061 = vadd.f32 0.0, %v2060
    %v2062 = vpop.f32.mrf.mxu0
    %v2063 = vadd.f32 0.0, %v2062
    %2064 = vdwg.mxu0
    %2065 = vmatprep.subr.mxu0 0.0
    %2066 = vmatpush1.msra.mxu0 %v1942
    %2067 = vmatprep.subr.mxu0 0.0
    %2068 = vmatpush1.msra.mxu0 %v1939
    %2069 = vmatprep.subr.mxu0 0.0
    %2070 = vmatpush1.msra.mxu0 %v1936
    %2071 = vmatprep.subr.mxu0 0.0
    %2072 = vmatpush1.msra.mxu0 %v1933
    %2073 = vmatprep.subr.mxu0 0.0
    %2074 = vmatpush1.msra.mxu0 %v1930
    %2075 = vmatprep.subr.mxu0 0.0
    %2076 = vmatpush1.msra.mxu0 %v1927
    %2077 = vmatprep.subr.mxu0 0.0
    %2078 = vmatpush1.msra.mxu0 %v1924
    %2079 = vmatprep.subr.mxu0 0.0
    %2080 = vmatpush1.msra.mxu0 %v1921
    %2081 = vmatprep.subr.mxu0 0.0
    %2082 = vmatpush1.msra.mxu0 %v1918
    %2083 = vmatprep.subr.mxu0 0.0
    %2084 = vmatpush1.msra.mxu0 %v1915
    %2085 = vmatprep.subr.mxu0 0.0
    %2086 = vmatpush1.msra.mxu0 %v1912
    %2087 = vmatprep.subr.mxu0 0.0
    %2088 = vmatpush1.msra.mxu0 %v1909
    %2089 = vmatprep.subr.mxu0 0.0
    %2090 = vmatpush1.msra.mxu0 %v1906
    %2091 = vmatprep.subr.mxu0 0.0
    %2092 = vmatpush1.msra.mxu0 %v1903
    %2093 = vmatprep.subr.mxu0 0.0
    %2094 = vmatpush1.msra.mxu0 %v1900
    %2095 = vmatprep.subr.mxu0 0.0
    %2096 = vmatpush1.msra.mxu0 %v1897
    %2097 = vmatprep.subr.mxu0 0.0
    %2098 = vmatpush2.msra.mxu0 0.0
    %2099 = vmatprep.subr.mxu0 0.0
    %2100 = vmatpush2.msra.mxu0 0.0
    %2101 = vmatprep.subr.mxu0 0.0
    %2102 = vmatpush2.msra.mxu0 0.0
    %2103 = vmatprep.subr.mxu0 0.0
    %2104 = vmatpush2.msra.mxu0 0.0
    %2105 = vmatprep.subr.mxu0 0.0
    %2106 = vmatpush2.msra.mxu0 0.0
    %2107 = vmatprep.subr.mxu0 0.0
    %2108 = vmatpush2.msra.mxu0 0.0
    %2109 = vmatprep.subr.mxu0 0.0
    %2110 = vmatpush2.msra.mxu0 0.0
    %2111 = vmatprep.subr.mxu0 0.0
    %2112 = vmatpush2.msra.mxu0 0.0
    %2113 = vmatprep.subr.mxu0 0.0
    %2114 = vmatpush2.msra.mxu0 0.0
    %2115 = vmatprep.subr.mxu0 0.0
    %2116 = vmatpush2.msra.mxu0 0.0
    %2117 = vmatprep.subr.mxu0 0.0
    %2118 = vmatpush2.msra.mxu0 0.0
    %2119 = vmatprep.subr.mxu0 0.0
    %2120 = vmatpush2.msra.mxu0 0.0
    %2121 = vmatprep.subr.mxu0 0.0
    %2122 = vmatpush2.msra.mxu0 %v1954
    %2123 = vmatprep.subr.mxu0 0.0
    %2124 = vmatpush2.msra.mxu0 %v1951
    %2125 = vmatprep.subr.mxu0 0.0
    %2126 = vmatpush2.msra.mxu0 %v1948
    %2127 = vmatprep.subr.mxu0 0.0
    %2128 = vmatpush2.msra.mxu0 %v1945
    %2129 = vmatprep.mubr.f32.mxu0 %v1956
    %2130 = vmatmul.mubr.f32.gmra.mxu0 %v1866
    %v2131 = vpop.f32.mrf.mxu0
    %v2132 = vadd.f32 0.0, %v2131
    %v2133 = vpop.f32.mrf.mxu0
    %2134 = vmatprep.mubr.f32.mxu0 %v1959
    %2135 = vmatmul.mubr.f32.gmra.mxu0 %v1872
    %v2136 = vpop.f32.mrf.mxu0
    %v2137 = vadd.f32 0.0, %v2136
    %v2138 = vpop.f32.mrf.mxu0
    %2139 = vmatprep.mubr.f32.mxu0 %v1962
    %2140 = vmatmul.mubr.f32.gmra.mxu0 %v1878
    %v2141 = vpop.f32.mrf.mxu0
    %v2142 = vadd.f32 0.0, %v2141
    %v2143 = vpop.f32.mrf.mxu0
    %2144 = vmatprep.mubr.f32.mxu0 %v1965
    %2145 = vmatmul.mubr.f32.gmra.mxu0 %v1884
    %v2146 = vpop.f32.mrf.mxu0
    %v2147 = vadd.f32 0.0, %v2146
    %v2148 = vpop.f32.mrf.mxu0
    %2149 = vmatprep.mubr.f32.mxu0 %v1968
    %2150 = vmatmul.mubr.f32.gmra.mxu0 %v1890
    %v2151 = vpop.f32.mrf.mxu0
    %v2152 = vadd.f32 0.0, %v2151
    %v2153 = vpop.f32.mrf.mxu0
    %2154 = vdwg.mxu0
    %v2155 = vadd.f32 %v1763, %v2037
    %v2156 = vadd.f32 %v1764, %v2039
    %v2157 = vadd.f32 %v1765, %v2132
    %v2158 = vadd.f32 %v1766, %v2043
    %v2159 = vadd.f32 %v1767, %v2045
    %v2160 = vadd.f32 %v1768, %v2137
    %v2161 = vadd.f32 %v1769, %v2049
    %v2162 = vadd.f32 %v1770, %v2051
    %v2163 = vadd.f32 %v1771, %v2142
    %v2164 = vadd.f32 %v1772, %v2055
    %v2165 = vadd.f32 %v1773, %v2057
    %v2166 = vadd.f32 %v1774, %v2147
    %v2167 = vadd.f32 %v1775, %v2061
    %v2168 = vadd.f32 %v1776, %v2063
    %v2169 = vadd.f32 %v1777, %v2152
    %v2170 = vld [vmem:[#allocation8] sm:$0x7]
    %v2172 = vlaneseq
    %v2173 = vshrl.u32 %v2172, 7
    %v2174 = vsub.s32 0, %v2173
    %v2175 = vrot.slane %v2170, %v2174
    %v2176 = vlaneseq
    %v2177 = vshrl.u32 %v2176, 7
    %v2178 = vsub.s32 1, %v2177
    %v2179 = vrot.slane %v2170, %v2178
    %v2180 = vlaneseq
    %v2181 = vshrl.u32 %v2180, 7
    %v2182 = vsub.s32 2, %v2181
    %v2183 = vrot.slane %v2170, %v2182
    %v2187 = vmul.f32 %v2155, %v2175
    %v2188 = vmul.f32 %v2156, %v2179
    %v2189 = vmul.f32 %v2157, %v2183
    %v2190 = vmul.f32 %v2158, %v2175
    %v2191 = vmul.f32 %v2159, %v2179
    %v2192 = vmul.f32 %v2160, %v2183
    %v2193 = vmul.f32 %v2161, %v2175
    %v2194 = vmul.f32 %v2162, %v2179
    %v2195 = vmul.f32 %v2163, %v2183
    %v2196 = vmul.f32 %v2164, %v2175
    %v2197 = vmul.f32 %v2165, %v2179
    %v2198 = vmul.f32 %v2166, %v2183
    %v2199 = vmul.f32 %v2167, %v2175
    %v2200 = vmul.f32 %v2168, %v2179
    %v2201 = vmul.f32 %v2169, %v2183
    %v2202 = vld [vmem:[#allocation10] sm:$0x7]
    %v2204 = vlaneseq
    %v2205 = vshrl.u32 %v2204, 7
    %v2206 = vsub.s32 0, %v2205
    %v2207 = vrot.slane %v2202, %v2206
    %v2208 = vlaneseq
    %v2209 = vshrl.u32 %v2208, 7
    %v2210 = vsub.s32 1, %v2209
    %v2211 = vrot.slane %v2202, %v2210
    %v2212 = vlaneseq
    %v2213 = vshrl.u32 %v2212, 7
    %v2214 = vsub.s32 2, %v2213
    %v2215 = vrot.slane %v2202, %v2214
    %v2219 = vadd.f32 %v2187, %v2207
    %v2220 = vadd.f32 %v2188, %v2211
    %v2221 = vadd.f32 %v2189, %v2215
    %v2222 = vadd.f32 %v2190, %v2207
    %v2223 = vadd.f32 %v2191, %v2211
    %v2224 = vadd.f32 %v2192, %v2215
    %v2225 = vadd.f32 %v2193, %v2207
    %v2226 = vadd.f32 %v2194, %v2211
    %v2227 = vadd.f32 %v2195, %v2215
    %v2228 = vadd.f32 %v2196, %v2207
    %v2229 = vadd.f32 %v2197, %v2211
    %v2230 = vadd.f32 %v2198, %v2215
    %v2231 = vadd.f32 %v2199, %v2207
    %v2232 = vadd.f32 %v2200, %v2211
    %v2233 = vadd.f32 %v2201, %v2215
    %v2234 = vmax.f32 %v2219, 0.0
    %v2235 = vmax.f32 %v2220, 0.0
    %v2236 = vmax.f32 %v2221, 0.0
    %v2237 = vmax.f32 %v2222, 0.0
    %v2238 = vmax.f32 %v2223, 0.0
    %v2239 = vmax.f32 %v2224, 0.0
    %v2240 = vmax.f32 %v2225, 0.0
    %v2241 = vmax.f32 %v2226, 0.0
    %v2242 = vmax.f32 %v2227, 0.0
    %v2243 = vmax.f32 %v2228, 0.0
    %v2244 = vmax.f32 %v2229, 0.0
    %v2245 = vmax.f32 %v2230, 0.0
    %v2246 = vmax.f32 %v2231, 0.0
    %v2247 = vmax.f32 %v2232, 0.0
    %v2248 = vmax.f32 %v2233, 0.0
    %v2249 = vld [vmem:[#allocation11] sm:$0xff]
    %v2250 = vld [vmem:[#allocation11 + $0x8] sm:$0x3f]
    %vm2251 = vcmask 293888
    %v2253 = vsel %vm2251, %v2249, 0
    %v2256 = vsel %vm2251, %v2250, 0
    %vm2258 = vcmask 1043456
    %v2260 = vsel %vm2258, %v2246, 0
    %v2263 = vsel %vm2258, %v2247, 0
    %v2266 = vsel %vm2258, %v2248, 0
    %2268 = vmatprep.subr.mxu0 0.0
    %2269 = vmatpush1.msra.mxu0 0.0
    %2270 = vmatprep.subr.mxu0 0.0
    %2271 = vmatpush1.msra.mxu0 0.0
    %2272 = vmatprep.subr.mxu0 0.0
    %2273 = vmatpush1.msra.mxu0 0.0
    %2274 = vmatprep.subr.mxu0 0.0
    %2275 = vmatpush1.msra.mxu0 0.0
    %2276 = vmatprep.subr.mxu0 0.0
    %2277 = vmatpush1.msra.mxu0 0.0
    %2278 = vmatprep.subr.mxu0 0.0
    %2279 = vmatpush1.msra.mxu0 0.0
    %2280 = vmatprep.subr.mxu0 0.0
    %2281 = vmatpush1.msra.mxu0 0.0
    %2282 = vmatprep.subr.mxu0 0.0
    %2283 = vmatpush1.msra.mxu0 0.0
    %2284 = vmatprep.subr.mxu0 0.0
    %2285 = vmatpush1.msra.mxu0 0.0
    %2286 = vmatprep.subr.mxu0 0.0
    %2287 = vmatpush1.msra.mxu0 0.0
    %2288 = vmatprep.subr.mxu0 0.0
    %2289 = vmatpush1.msra.mxu0 0.0
    %2290 = vmatprep.subr.mxu0 %v2263
    %2291 = vmatpush1.msra.mxu0 %v2260
    %2292 = vmatprep.subr.mxu0 %v2244
    %2293 = vmatpush1.msra.mxu0 %v2243
    %2294 = vmatprep.subr.mxu0 %v2241
    %2295 = vmatpush1.msra.mxu0 %v2240
    %2296 = vmatprep.subr.mxu0 %v2238
    %2297 = vmatpush1.msra.mxu0 %v2237
    %2298 = vmatprep.subr.mxu0 %v2235
    %2299 = vmatpush1.msra.mxu0 %v2234
    %2300 = vmatprep.subr.mxu0 0.0
    %2301 = vmatpush2.msra.mxu0 0.0
    %2302 = vmatprep.subr.mxu0 0.0
    %2303 = vmatpush2.msra.mxu0 0.0
    %2304 = vmatprep.subr.mxu0 0.0
    %2305 = vmatpush2.msra.mxu0 0.0
    %2306 = vmatprep.subr.mxu0 0.0
    %2307 = vmatpush2.msra.mxu0 0.0
    %2308 = vmatprep.subr.mxu0 0.0
    %2309 = vmatpush2.msra.mxu0 0.0
    %2310 = vmatprep.subr.mxu0 0.0
    %2311 = vmatpush2.msra.mxu0 0.0
    %2312 = vmatprep.subr.mxu0 0.0
    %2313 = vmatpush2.msra.mxu0 0.0
    %2314 = vmatprep.subr.mxu0 0.0
    %2315 = vmatpush2.msra.mxu0 0.0
    %2316 = vmatprep.subr.mxu0 0.0
    %2317 = vmatpush2.msra.mxu0 0.0
    %2318 = vmatprep.subr.mxu0 0.0
    %2319 = vmatpush2.msra.mxu0 0.0
    %2320 = vmatprep.subr.mxu0 0.0
    %2321 = vmatpush2.msra.mxu0 0.0
    %2322 = vmatprep.subr.mxu0 0.0
    %2323 = vmatpush2.msra.mxu0 0.0
    %2324 = vmatprep.subr.mxu0 0.0
    %2325 = vmatpush2.msra.mxu0 0.0
    %2326 = vmatprep.subr.mxu0 0.0
    %2327 = vmatpush2.msra.mxu0 0.0
    %2328 = vmatprep.subr.mxu0 0.0
    %2329 = vmatpush2.msra.mxu0 0.0
    %2330 = vmatprep.subr.mxu0 0.0
    %2331 = vmatpush2.msra.mxu0 0.0
    %2332 = vmatprep.mubr.f32.mxu0 0.0
    %2333 = vmatmul.mubr.f32.gmra.mxu0 %v2253
    %v2334 = vpop.f32.mrf.mxu0
    %v2335 = vadd.f32 0.0, %v2334
    %v2336 = vpop.f32.mrf.mxu0
    %v2337 = vadd.f32 0.0, %v2336
    %2338 = vmatprep.mubr.f32.mxu0 0.0
    %2339 = vmatmul.mubr.f32.gmra.mxu0 %v2256
    %v2340 = vpop.f32.mrf.mxu0
    %v2341 = vadd.f32 0.0, %v2340
    %v2342 = vpop.f32.mrf.mxu0
    %v2343 = vadd.f32 0.0, %v2342
    %2344 = vdwg.mxu0
    %2345 = vmatprep.subr.mxu0 0.0
    %2346 = vmatpush1.msra.mxu0 0.0
    %2347 = vmatprep.subr.mxu0 0.0
    %2348 = vmatpush1.msra.mxu0 0.0
    %2349 = vmatprep.subr.mxu0 0.0
    %2350 = vmatpush1.msra.mxu0 0.0
    %2351 = vmatprep.subr.mxu0 0.0
    %2352 = vmatpush1.msra.mxu0 0.0
    %2353 = vmatprep.subr.mxu0 0.0
    %2354 = vmatpush1.msra.mxu0 0.0
    %2355 = vmatprep.subr.mxu0 0.0
    %2356 = vmatpush1.msra.mxu0 0.0
    %2357 = vmatprep.subr.mxu0 0.0
    %2358 = vmatpush1.msra.mxu0 0.0
    %2359 = vmatprep.subr.mxu0 0.0
    %2360 = vmatpush1.msra.mxu0 0.0
    %2361 = vmatprep.subr.mxu0 0.0
    %2362 = vmatpush1.msra.mxu0 0.0
    %2363 = vmatprep.subr.mxu0 0.0
    %2364 = vmatpush1.msra.mxu0 0.0
    %2365 = vmatprep.subr.mxu0 0.0
    %2366 = vmatpush1.msra.mxu0 0.0
    %2367 = vmatprep.subr.mxu0 0.0
    %2368 = vmatpush1.msra.mxu0 %v2266
    %2369 = vmatprep.subr.mxu0 0.0
    %2370 = vmatpush1.msra.mxu0 %v2245
    %2371 = vmatprep.subr.mxu0 0.0
    %2372 = vmatpush1.msra.mxu0 %v2242
    %2373 = vmatprep.subr.mxu0 0.0
    %2374 = vmatpush1.msra.mxu0 %v2239
    %2375 = vmatprep.subr.mxu0 0.0
    %2376 = vmatpush1.msra.mxu0 %v2236
    %2377 = vmatprep.subr.mxu0 0.0
    %2378 = vmatpush2.msra.mxu0 0.0
    %2379 = vmatprep.subr.mxu0 0.0
    %2380 = vmatpush2.msra.mxu0 0.0
    %2381 = vmatprep.subr.mxu0 0.0
    %2382 = vmatpush2.msra.mxu0 0.0
    %2383 = vmatprep.subr.mxu0 0.0
    %2384 = vmatpush2.msra.mxu0 0.0
    %2385 = vmatprep.subr.mxu0 0.0
    %2386 = vmatpush2.msra.mxu0 0.0
    %2387 = vmatprep.subr.mxu0 0.0
    %2388 = vmatpush2.msra.mxu0 0.0
    %2389 = vmatprep.subr.mxu0 0.0
    %2390 = vmatpush2.msra.mxu0 0.0
    %2391 = vmatprep.subr.mxu0 0.0
    %2392 = vmatpush2.msra.mxu0 0.0
    %2393 = vmatprep.subr.mxu0 0.0
    %2394 = vmatpush2.msra.mxu0 0.0
    %2395 = vmatprep.subr.mxu0 0.0
    %2396 = vmatpush2.msra.mxu0 0.0
    %2397 = vmatprep.subr.mxu0 0.0
    %2398 = vmatpush2.msra.mxu0 0.0
    %2399 = vmatprep.subr.mxu0 0.0
    %2400 = vmatpush2.msra.mxu0 0.0
    %2401 = vmatprep.subr.mxu0 0.0
    %2402 = vmatpush2.msra.mxu0 0.0
    %2403 = vmatprep.subr.mxu0 0.0
    %2404 = vmatpush2.msra.mxu0 0.0
    %2405 = vmatprep.subr.mxu0 0.0
    %2406 = vmatpush2.msra.mxu0 0.0
    %2407 = vmatprep.subr.mxu0 0.0
    %2408 = vmatpush2.msra.mxu0 0.0
    %2409 = vmatprep.mubr.f32.mxu0 0.0
    %2410 = vmatmul.mubr.f32.gmra.mxu0 %v2253
    %v2411 = vpop.f32.mrf.mxu0
    %v2412 = vadd.f32 0.0, %v2411
    %v2413 = vpop.f32.mrf.mxu0
    %2414 = vmatprep.mubr.f32.mxu0 0.0
    %2415 = vmatmul.mubr.f32.gmra.mxu0 %v2256
    %v2416 = vpop.f32.mrf.mxu0
    %v2417 = vadd.f32 0.0, %v2416
    %v2418 = vpop.f32.mrf.mxu0
    %2419 = vdwg.mxu0
    %v2420 = vld [vmem:[#allocation13] sm:$0xff]
    %v2421 = vld [vmem:[#allocation13 + $0x8] sm:$0xff]
    %v2422 = vld [vmem:[#allocation13 + $0x10] sm:$0xff]
    %v2423 = vld [vmem:[#allocation13 + $0x18] sm:$0xff]
    %v2424 = vld [vmem:[#allocation13 + $0x20] sm:$0xff]
    %v2425 = vld [vmem:[#allocation13 + $0x28] sm:$0xff]
    %v2426 = vld [vmem:[#allocation13 + $0x30] sm:$0xff]
    %v2427 = vld [vmem:[#allocation13 + $0x38] sm:$0xff]
    %v2428 = vld [vmem:[#allocation13 + $0x40] sm:$0xff]
    %v2429 = vld [vmem:[#allocation13 + $0x48] sm:$0xff]
    %v2430 = vld [vmem:[#allocation13 + $0x50] sm:$0xff]
    %v2431 = vld [vmem:[#allocation13 + $0x58] sm:$0xff]
    %v2432 = vld [vmem:[#allocation13 + $0x60] sm:$0xff]
    %v2433 = vld [vmem:[#allocation13 + $0x68] sm:$0xff]
    %v2434 = vld [vmem:[#allocation13 + $0x70] sm:$0xff]
    %v2435 = vld [vmem:[#allocation13 + $0x78] sm:$0xff]
    %v2436 = vld [vmem:[#allocation13 + $0x80] sm:$0xff]
    %v2437 = vld [vmem:[#allocation13 + $0x88] sm:$0xff]
    %v2438 = vld [vmem:[#allocation13 + $0x90] sm:$0xff]
    %v2439 = vld [vmem:[#allocation13 + $0x98] sm:$0xff]
    %v2440 = vld [vmem:[#allocation13 + $0xa0] sm:$0xff]
    %v2441 = vld [vmem:[#allocation13 + $0xa8] sm:$0xff]
    %v2442 = vld [vmem:[#allocation13 + $0xb0] sm:$0xff]
    %v2443 = vld [vmem:[#allocation13 + $0xb8] sm:$0xff]
    %v2444 = vld [vmem:[#allocation13 + $0xc0] sm:$0xff]
    %v2445 = vld [vmem:[#allocation13 + $0xc8] sm:$0xff]
    %v2446 = vld [vmem:[#allocation13 + $0xd0] sm:$0xff]
    %v2447 = vld [vmem:[#allocation13 + $0xd8] sm:$0xff]
    %v2448 = vld [vmem:[#allocation13 + $0xe0] sm:$0xff]
    %v2449 = vld [vmem:[#allocation13 + $0xe8] sm:$0xff]
    %v2450 = vld [vmem:[#allocation13 + $0xf0] sm:$0xff]
    %v2451 = vld [vmem:[#allocation13 + $0xf8] sm:$0xff]
    %v2452 = vld [vmem:[#allocation13 + $0x100] sm:$0xff]
    %v2453 = vld [vmem:[#allocation13 + $0x108] sm:$0xff]
    %v2454 = vld [vmem:[#allocation13 + $0x110] sm:$0xff]
    %v2455 = vld [vmem:[#allocation13 + $0x118] sm:$0xff]
    %v2456 = vld [vmem:[#allocation13 + $0x120] sm:$0xff]
    %v2457 = vld [vmem:[#allocation13 + $0x128] sm:$0xff]
    %v2458 = vld [vmem:[#allocation13 + $0x130] sm:$0xff]
    %v2459 = vld [vmem:[#allocation13 + $0x138] sm:$0xff]
    %v2460 = vld [vmem:[#allocation13 + $0x140] sm:$0xff]
    %v2461 = vld [vmem:[#allocation13 + $0x148] sm:$0xff]
    %v2462 = vld [vmem:[#allocation13 + $0x150] sm:$0xff]
    %v2463 = vld [vmem:[#allocation13 + $0x158] sm:$0xff]
    %v2464 = vld [vmem:[#allocation13 + $0x160] sm:$0xff]
    %v2465 = vld [vmem:[#allocation13 + $0x168] sm:$0xff]
    %v2466 = vld [vmem:[#allocation13 + $0x170] sm:$0xff]
    %v2467 = vld [vmem:[#allocation13 + $0x178] sm:$0xff]
    %v2468 = vld [vmem:[#allocation13 + $0x180] sm:$0xff]
    %v2469 = vld [vmem:[#allocation13 + $0x188] sm:$0xff]
    %v2470 = vld [vmem:[#allocation13 + $0x190] sm:$0xff]
    %v2471 = vld [vmem:[#allocation13 + $0x198] sm:$0xff]
    %v2472 = vld [vmem:[#allocation13 + $0x1a0] sm:$0xff]
    %v2473 = vld [vmem:[#allocation13 + $0x1a8] sm:$0xff]
    %v2474 = vld [vmem:[#allocation13 + $0x1b0] sm:$0xff]
    %v2475 = vld [vmem:[#allocation13 + $0x1b8] sm:$0xff]
    %v2476 = vld [vmem:[#allocation13 + $0x1c0] sm:$0xff]
    %v2477 = vld [vmem:[#allocation13 + $0x1c8] sm:$0xff]
    %v2478 = vld [vmem:[#allocation13 + $0x1d0] sm:$0xff]
    %v2479 = vld [vmem:[#allocation13 + $0x1d8] sm:$0xff]
    %v2480 = vld [vmem:[#allocation13 + $0x1e0] sm:$0xff]
    %v2481 = vld [vmem:[#allocation13 + $0x1e8] sm:$0xff]
    %v2482 = vld [vmem:[#allocation13 + $0x1f0] sm:$0xff]
    %v2483 = vld [vmem:[#allocation13 + $0x1f8] sm:$0xff]
    %v2484 = vld [vmem:[#allocation13 + $0x200] sm:$0xff]
    %v2485 = vld [vmem:[#allocation13 + $0x208] sm:$0xff]
    %v2486 = vld [vmem:[#allocation13 + $0x210] sm:$0xff]
    %v2487 = vld [vmem:[#allocation13 + $0x218] sm:$0xff]
    %v2488 = vld [vmem:[#allocation13 + $0x220] sm:$0xff]
    %v2489 = vld [vmem:[#allocation13 + $0x228] sm:$0xff]
    %v2490 = vld [vmem:[#allocation13 + $0x230] sm:$0xff]
    %v2491 = vld [vmem:[#allocation13 + $0x238] sm:$0xff]
    %s2492 = scalar_lea.vmem [#allocation11], 16
    %v2493 = vld [vmem:[%s2492] sm:$0xff]
    %v2494 = vld [vmem:[%s2492 + $0x8] sm:$0x3f]
    %v2496 = vsel %vm2251, %v2493, 0
    %v2499 = vsel %vm2251, %v2494, 0
    %2501 = vmatprep.subr.mxu0 0.0
    %2502 = vmatpush1.msra.mxu0 0.0
    %2503 = vmatprep.subr.mxu0 0.0
    %2504 = vmatpush1.msra.mxu0 0.0
    %2505 = vmatprep.subr.mxu0 0.0
    %2506 = vmatpush1.msra.mxu0 0.0
    %2507 = vmatprep.subr.mxu0 0.0
    %2508 = vmatpush1.msra.mxu0 0.0
    %2509 = vmatprep.subr.mxu0 0.0
    %2510 = vmatpush1.msra.mxu0 0.0
    %2511 = vmatprep.subr.mxu0 0.0
    %2512 = vmatpush1.msra.mxu0 0.0
    %2513 = vmatprep.subr.mxu0 0.0
    %2514 = vmatpush1.msra.mxu0 0.0
    %2515 = vmatprep.subr.mxu0 0.0
    %2516 = vmatpush1.msra.mxu0 0.0
    %2517 = vmatprep.subr.mxu0 0.0
    %2518 = vmatpush1.msra.mxu0 0.0
    %2519 = vmatprep.subr.mxu0 0.0
    %2520 = vmatpush1.msra.mxu0 0.0
    %2521 = vmatprep.subr.mxu0 0.0
    %2522 = vmatpush1.msra.mxu0 0.0
    %2523 = vmatprep.subr.mxu0 %v2263
    %2524 = vmatpush1.msra.mxu0 %v2260
    %2525 = vmatprep.subr.mxu0 %v2244
    %2526 = vmatpush1.msra.mxu0 %v2243
    %2527 = vmatprep.subr.mxu0 %v2241
    %2528 = vmatpush1.msra.mxu0 %v2240
    %2529 = vmatprep.subr.mxu0 %v2238
    %2530 = vmatpush1.msra.mxu0 %v2237
    %2531 = vmatprep.subr.mxu0 %v2235
    %2532 = vmatpush1.msra.mxu0 %v2234
    %2533 = vmatprep.subr.mxu0 0.0
    %2534 = vmatpush2.msra.mxu0 0.0
    %2535 = vmatprep.subr.mxu0 0.0
    %2536 = vmatpush2.msra.mxu0 0.0
    %2537 = vmatprep.subr.mxu0 0.0
    %2538 = vmatpush2.msra.mxu0 0.0
    %2539 = vmatprep.subr.mxu0 0.0
    %2540 = vmatpush2.msra.mxu0 0.0
    %2541 = vmatprep.subr.mxu0 0.0
    %2542 = vmatpush2.msra.mxu0 0.0
    %2543 = vmatprep.subr.mxu0 0.0
    %2544 = vmatpush2.msra.mxu0 0.0
    %2545 = vmatprep.subr.mxu0 0.0
    %2546 = vmatpush2.msra.mxu0 0.0
    %2547 = vmatprep.subr.mxu0 0.0
    %2548 = vmatpush2.msra.mxu0 0.0
    %2549 = vmatprep.subr.mxu0 0.0
    %2550 = vmatpush2.msra.mxu0 0.0
    %2551 = vmatprep.subr.mxu0 0.0
    %2552 = vmatpush2.msra.mxu0 0.0
    %2553 = vmatprep.subr.mxu0 0.0
    %2554 = vmatpush2.msra.mxu0 0.0
    %2555 = vmatprep.subr.mxu0 0.0
    %2556 = vmatpush2.msra.mxu0 0.0
    %2557 = vmatprep.subr.mxu0 0.0
    %2558 = vmatpush2.msra.mxu0 0.0
    %2559 = vmatprep.subr.mxu0 0.0
    %2560 = vmatpush2.msra.mxu0 0.0
    %2561 = vmatprep.subr.mxu0 0.0
    %2562 = vmatpush2.msra.mxu0 0.0
    %2563 = vmatprep.subr.mxu0 0.0
    %2564 = vmatpush2.msra.mxu0 0.0
    %2565 = vmatprep.mubr.f32.mxu0 0.0
    %2566 = vmatmul.mubr.f32.gmra.mxu0 %v2496
    %v2567 = vpop.f32.mrf.mxu0
    %v2568 = vadd.f32 0.0, %v2567
    %v2569 = vpop.f32.mrf.mxu0
    %v2570 = vadd.f32 0.0, %v2569
    %2571 = vmatprep.mubr.f32.mxu0 0.0
    %2572 = vmatmul.mubr.f32.gmra.mxu0 %v2499
    %v2573 = vpop.f32.mrf.mxu0
    %v2574 = vadd.f32 0.0, %v2573
    %v2575 = vpop.f32.mrf.mxu0
    %v2576 = vadd.f32 0.0, %v2575
    %2577 = vdwg.mxu0
    %2578 = vmatprep.subr.mxu0 0.0
    %2579 = vmatpush1.msra.mxu0 0.0
    %2580 = vmatprep.subr.mxu0 0.0
    %2581 = vmatpush1.msra.mxu0 0.0
    %2582 = vmatprep.subr.mxu0 0.0
    %2583 = vmatpush1.msra.mxu0 0.0
    %2584 = vmatprep.subr.mxu0 0.0
    %2585 = vmatpush1.msra.mxu0 0.0
    %2586 = vmatprep.subr.mxu0 0.0
    %2587 = vmatpush1.msra.mxu0 0.0
    %2588 = vmatprep.subr.mxu0 0.0
    %2589 = vmatpush1.msra.mxu0 0.0
    %2590 = vmatprep.subr.mxu0 0.0
    %2591 = vmatpush1.msra.mxu0 0.0
    %2592 = vmatprep.subr.mxu0 0.0
    %2593 = vmatpush1.msra.mxu0 0.0
    %2594 = vmatprep.subr.mxu0 0.0
    %2595 = vmatpush1.msra.mxu0 0.0
    %2596 = vmatprep.subr.mxu0 0.0
    %2597 = vmatpush1.msra.mxu0 0.0
    %2598 = vmatprep.subr.mxu0 0.0
    %2599 = vmatpush1.msra.mxu0 0.0
    %2600 = vmatprep.subr.mxu0 0.0
    %2601 = vmatpush1.msra.mxu0 %v2266
    %2602 = vmatprep.subr.mxu0 0.0
    %2603 = vmatpush1.msra.mxu0 %v2245
    %2604 = vmatprep.subr.mxu0 0.0
    %2605 = vmatpush1.msra.mxu0 %v2242
    %2606 = vmatprep.subr.mxu0 0.0
    %2607 = vmatpush1.msra.mxu0 %v2239
    %2608 = vmatprep.subr.mxu0 0.0
    %2609 = vmatpush1.msra.mxu0 %v2236
    %2610 = vmatprep.subr.mxu0 0.0
    %2611 = vmatpush2.msra.mxu0 0.0
    %2612 = vmatprep.subr.mxu0 0.0
    %2613 = vmatpush2.msra.mxu0 0.0
    %2614 = vmatprep.subr.mxu0 0.0
    %2615 = vmatpush2.msra.mxu0 0.0
    %2616 = vmatprep.subr.mxu0 0.0
    %2617 = vmatpush2.msra.mxu0 0.0
    %2618 = vmatprep.subr.mxu0 0.0
    %2619 = vmatpush2.msra.mxu0 0.0
    %2620 = vmatprep.subr.mxu0 0.0
    %2621 = vmatpush2.msra.mxu0 0.0
    %2622 = vmatprep.subr.mxu0 0.0
    %2623 = vmatpush2.msra.mxu0 0.0
    %2624 = vmatprep.subr.mxu0 0.0
    %2625 = vmatpush2.msra.mxu0 0.0
    %2626 = vmatprep.subr.mxu0 0.0
    %2627 = vmatpush2.msra.mxu0 0.0
    %2628 = vmatprep.subr.mxu0 0.0
    %2629 = vmatpush2.msra.mxu0 0.0
    %2630 = vmatprep.subr.mxu0 0.0
    %2631 = vmatpush2.msra.mxu0 0.0
    %2632 = vmatprep.subr.mxu0 0.0
    %2633 = vmatpush2.msra.mxu0 0.0
    %2634 = vmatprep.subr.mxu0 0.0
    %2635 = vmatpush2.msra.mxu0 0.0
    %2636 = vmatprep.subr.mxu0 0.0
    %2637 = vmatpush2.msra.mxu0 0.0
    %2638 = vmatprep.subr.mxu0 0.0
    %2639 = vmatpush2.msra.mxu0 0.0
    %2640 = vmatprep.subr.mxu0 0.0
    %2641 = vmatpush2.msra.mxu0 0.0
    %2642 = vmatprep.mubr.f32.mxu0 0.0
    %2643 = vmatmul.mubr.f32.gmra.mxu0 %v2496
    %v2644 = vpop.f32.mrf.mxu0
    %v2645 = vadd.f32 0.0, %v2644
    %v2646 = vpop.f32.mrf.mxu0
    %2647 = vmatprep.mubr.f32.mxu0 0.0
    %2648 = vmatmul.mubr.f32.gmra.mxu0 %v2499
    %v2649 = vpop.f32.mrf.mxu0
    %v2650 = vadd.f32 0.0, %v2649
    %v2651 = vpop.f32.mrf.mxu0
    %2652 = vdwg.mxu0
    %s2653 = scalar_lea.vmem [#allocation13], 576
    %v2654 = vld [vmem:[%s2653] sm:$0xff]
    %v2655 = vld [vmem:[%s2653 + $0x8] sm:$0xff]
    %v2656 = vld [vmem:[%s2653 + $0x10] sm:$0xff]
    %v2657 = vld [vmem:[%s2653 + $0x18] sm:$0xff]
    %v2658 = vld [vmem:[%s2653 + $0x20] sm:$0xff]
    %v2659 = vld [vmem:[%s2653 + $0x28] sm:$0xff]
    %v2660 = vld [vmem:[%s2653 + $0x30] sm:$0xff]
    %v2661 = vld [vmem:[%s2653 + $0x38] sm:$0xff]
    %v2662 = vld [vmem:[%s2653 + $0x40] sm:$0xff]
    %v2663 = vld [vmem:[%s2653 + $0x48] sm:$0xff]
    %v2664 = vld [vmem:[%s2653 + $0x50] sm:$0xff]
    %v2665 = vld [vmem:[%s2653 + $0x58] sm:$0xff]
    %v2666 = vld [vmem:[%s2653 + $0x60] sm:$0xff]
    %v2667 = vld [vmem:[%s2653 + $0x68] sm:$0xff]
    %v2668 = vld [vmem:[%s2653 + $0x70] sm:$0xff]
    %v2669 = vld [vmem:[%s2653 + $0x78] sm:$0xff]
    %v2670 = vld [vmem:[%s2653 + $0x80] sm:$0xff]
    %v2671 = vld [vmem:[%s2653 + $0x88] sm:$0xff]
    %v2672 = vld [vmem:[%s2653 + $0x90] sm:$0xff]
    %v2673 = vld [vmem:[%s2653 + $0x98] sm:$0xff]
    %v2674 = vld [vmem:[%s2653 + $0xa0] sm:$0xff]
    %v2675 = vld [vmem:[%s2653 + $0xa8] sm:$0xff]
    %v2676 = vld [vmem:[%s2653 + $0xb0] sm:$0xff]
    %v2677 = vld [vmem:[%s2653 + $0xb8] sm:$0xff]
    %v2678 = vld [vmem:[%s2653 + $0xc0] sm:$0xff]
    %v2679 = vld [vmem:[%s2653 + $0xc8] sm:$0xff]
    %v2680 = vld [vmem:[%s2653 + $0xd0] sm:$0xff]
    %v2681 = vld [vmem:[%s2653 + $0xd8] sm:$0xff]
    %v2682 = vld [vmem:[%s2653 + $0xe0] sm:$0xff]
    %v2683 = vld [vmem:[%s2653 + $0xe8] sm:$0xff]
    %v2684 = vld [vmem:[%s2653 + $0xf0] sm:$0xff]
    %v2685 = vld [vmem:[%s2653 + $0xf8] sm:$0xff]
    %v2686 = vld [vmem:[%s2653 + $0x100] sm:$0xff]
    %v2687 = vld [vmem:[%s2653 + $0x108] sm:$0xff]
    %v2688 = vld [vmem:[%s2653 + $0x110] sm:$0xff]
    %v2689 = vld [vmem:[%s2653 + $0x118] sm:$0xff]
    %v2690 = vld [vmem:[%s2653 + $0x120] sm:$0xff]
    %v2691 = vld [vmem:[%s2653 + $0x128] sm:$0xff]
    %v2692 = vld [vmem:[%s2653 + $0x130] sm:$0xff]
    %v2693 = vld [vmem:[%s2653 + $0x138] sm:$0xff]
    %v2694 = vld [vmem:[%s2653 + $0x140] sm:$0xff]
    %v2695 = vld [vmem:[%s2653 + $0x148] sm:$0xff]
    %v2696 = vld [vmem:[%s2653 + $0x150] sm:$0xff]
    %v2697 = vld [vmem:[%s2653 + $0x158] sm:$0xff]
    %v2698 = vld [vmem:[%s2653 + $0x160] sm:$0xff]
    %v2699 = vld [vmem:[%s2653 + $0x168] sm:$0xff]
    %v2700 = vld [vmem:[%s2653 + $0x170] sm:$0xff]
    %v2701 = vld [vmem:[%s2653 + $0x178] sm:$0xff]
    %v2702 = vld [vmem:[%s2653 + $0x180] sm:$0xff]
    %v2703 = vld [vmem:[%s2653 + $0x188] sm:$0xff]
    %v2704 = vld [vmem:[%s2653 + $0x190] sm:$0xff]
    %v2705 = vld [vmem:[%s2653 + $0x198] sm:$0xff]
    %v2706 = vld [vmem:[%s2653 + $0x1a0] sm:$0xff]
    %v2707 = vld [vmem:[%s2653 + $0x1a8] sm:$0xff]
    %v2708 = vld [vmem:[%s2653 + $0x1b0] sm:$0xff]
    %v2709 = vld [vmem:[%s2653 + $0x1b8] sm:$0xff]
    %v2710 = vld [vmem:[%s2653 + $0x1c0] sm:$0xff]
    %v2711 = vld [vmem:[%s2653 + $0x1c8] sm:$0xff]
    %v2712 = vld [vmem:[%s2653 + $0x1d0] sm:$0xff]
    %v2713 = vld [vmem:[%s2653 + $0x1d8] sm:$0xff]
    %v2714 = vld [vmem:[%s2653 + $0x1e0] sm:$0xff]
    %v2715 = vld [vmem:[%s2653 + $0x1e8] sm:$0xff]
    %v2716 = vld [vmem:[%s2653 + $0x1f0] sm:$0xff]
    %v2717 = vld [vmem:[%s2653 + $0x1f8] sm:$0xff]
    %v2718 = vld [vmem:[%s2653 + $0x200] sm:$0xff]
    %v2719 = vld [vmem:[%s2653 + $0x208] sm:$0xff]
    %v2720 = vld [vmem:[%s2653 + $0x210] sm:$0xff]
    %v2721 = vld [vmem:[%s2653 + $0x218] sm:$0xff]
    %v2722 = vld [vmem:[%s2653 + $0x220] sm:$0xff]
    %v2723 = vld [vmem:[%s2653 + $0x228] sm:$0xff]
    %v2724 = vld [vmem:[%s2653 + $0x230] sm:$0xff]
    %v2725 = vld [vmem:[%s2653 + $0x238] sm:$0xff]
    %v2727 = vsel %vm593, %v2645, 0
    %v2730 = vsel %vm593, %v2650, 0
    %2732 = vmatprep.subr.mxu0 %v2685
    %2733 = vmatpush1.msra.mxu0 %v2684
    %2734 = vmatprep.subr.mxu0 %v2683
    %2735 = vmatpush1.msra.mxu0 %v2682
    %2736 = vmatprep.subr.mxu0 %v2681
    %2737 = vmatpush1.msra.mxu0 %v2680
    %2738 = vmatprep.subr.mxu0 %v2679
    %2739 = vmatpush1.msra.mxu0 %v2678
    %2740 = vmatprep.subr.mxu0 %v2677
    %2741 = vmatpush1.msra.mxu0 %v2676
    %2742 = vmatprep.subr.mxu0 %v2675
    %2743 = vmatpush1.msra.mxu0 %v2674
    %2744 = vmatprep.subr.mxu0 %v2673
    %2745 = vmatpush1.msra.mxu0 %v2672
    %2746 = vmatprep.subr.mxu0 %v2671
    %2747 = vmatpush1.msra.mxu0 %v2670
    %2748 = vmatprep.subr.mxu0 %v2669
    %2749 = vmatpush1.msra.mxu0 %v2668
    %2750 = vmatprep.subr.mxu0 %v2667
    %2751 = vmatpush1.msra.mxu0 %v2666
    %2752 = vmatprep.subr.mxu0 %v2665
    %2753 = vmatpush1.msra.mxu0 %v2664
    %2754 = vmatprep.subr.mxu0 %v2663
    %2755 = vmatpush1.msra.mxu0 %v2662
    %2756 = vmatprep.subr.mxu0 %v2661
    %2757 = vmatpush1.msra.mxu0 %v2660
    %2758 = vmatprep.subr.mxu0 %v2659
    %2759 = vmatpush1.msra.mxu0 %v2658
    %2760 = vmatprep.subr.mxu0 %v2657
    %2761 = vmatpush1.msra.mxu0 %v2656
    %2762 = vmatprep.subr.mxu0 %v2655
    %2763 = vmatpush1.msra.mxu0 %v2654
    %2764 = vmatprep.subr.mxu0 %v2717
    %2765 = vmatpush2.msra.mxu0 %v2716
    %2766 = vmatprep.subr.mxu0 %v2715
    %2767 = vmatpush2.msra.mxu0 %v2714
    %2768 = vmatprep.subr.mxu0 %v2713
    %2769 = vmatpush2.msra.mxu0 %v2712
    %2770 = vmatprep.subr.mxu0 %v2711
    %2771 = vmatpush2.msra.mxu0 %v2710
    %2772 = vmatprep.subr.mxu0 %v2709
    %2773 = vmatpush2.msra.mxu0 %v2708
    %2774 = vmatprep.subr.mxu0 %v2707
    %2775 = vmatpush2.msra.mxu0 %v2706
    %2776 = vmatprep.subr.mxu0 %v2705
    %2777 = vmatpush2.msra.mxu0 %v2704
    %2778 = vmatprep.subr.mxu0 %v2703
    %2779 = vmatpush2.msra.mxu0 %v2702
    %2780 = vmatprep.subr.mxu0 %v2701
    %2781 = vmatpush2.msra.mxu0 %v2700
    %2782 = vmatprep.subr.mxu0 %v2699
    %2783 = vmatpush2.msra.mxu0 %v2698
    %2784 = vmatprep.subr.mxu0 %v2697
    %2785 = vmatpush2.msra.mxu0 %v2696
    %2786 = vmatprep.subr.mxu0 %v2695
    %2787 = vmatpush2.msra.mxu0 %v2694
    %2788 = vmatprep.subr.mxu0 %v2693
    %2789 = vmatpush2.msra.mxu0 %v2692
    %2790 = vmatprep.subr.mxu0 %v2691
    %2791 = vmatpush2.msra.mxu0 %v2690
    %2792 = vmatprep.subr.mxu0 %v2689
    %2793 = vmatpush2.msra.mxu0 %v2688
    %2794 = vmatprep.subr.mxu0 %v2687
    %2795 = vmatpush2.msra.mxu0 %v2686
    %2796 = vmatprep.mubr.f32.mxu0 %v2570
    %2797 = vmatmul.mubr.f32.gmra.mxu0 %v2568
    %v2798 = vpop.f32.mrf.mxu0
    %v2799 = vadd.f32 0.0, %v2798
    %v2800 = vpop.f32.mrf.mxu0
    %v2801 = vadd.f32 0.0, %v2800
    %2802 = vmatprep.mubr.f32.mxu0 %v2576
    %2803 = vmatmul.mubr.f32.gmra.mxu0 %v2574
    %v2804 = vpop.f32.mrf.mxu0
    %v2805 = vadd.f32 0.0, %v2804
    %v2806 = vpop.f32.mrf.mxu0
    %v2807 = vadd.f32 0.0, %v2806
    %2808 = vdwg.mxu0
    %2809 = vmatprep.subr.mxu0 0.0
    %2810 = vmatpush1.msra.mxu0 0.0
    %2811 = vmatprep.subr.mxu0 0.0
    %2812 = vmatpush1.msra.mxu0 0.0
    %2813 = vmatprep.subr.mxu0 0.0
    %2814 = vmatpush1.msra.mxu0 0.0
    %2815 = vmatprep.subr.mxu0 0.0
    %2816 = vmatpush1.msra.mxu0 0.0
    %2817 = vmatprep.subr.mxu0 0.0
    %2818 = vmatpush1.msra.mxu0 0.0
    %2819 = vmatprep.subr.mxu0 0.0
    %2820 = vmatpush1.msra.mxu0 0.0
    %2821 = vmatprep.subr.mxu0 0.0
    %2822 = vmatpush1.msra.mxu0 0.0
    %2823 = vmatprep.subr.mxu0 0.0
    %2824 = vmatpush1.msra.mxu0 0.0
    %2825 = vmatprep.subr.mxu0 0.0
    %2826 = vmatpush1.msra.mxu0 0.0
    %2827 = vmatprep.subr.mxu0 0.0
    %2828 = vmatpush1.msra.mxu0 0.0
    %2829 = vmatprep.subr.mxu0 0.0
    %2830 = vmatpush1.msra.mxu0 0.0
    %2831 = vmatprep.subr.mxu0 0.0
    %2832 = vmatpush1.msra.mxu0 0.0
    %2833 = vmatprep.subr.mxu0 %v2725
    %2834 = vmatpush1.msra.mxu0 %v2724
    %2835 = vmatprep.subr.mxu0 %v2723
    %2836 = vmatpush1.msra.mxu0 %v2722
    %2837 = vmatprep.subr.mxu0 %v2721
    %2838 = vmatpush1.msra.mxu0 %v2720
    %2839 = vmatprep.subr.mxu0 %v2719
    %2840 = vmatpush1.msra.mxu0 %v2718
    %2841 = vmatprep.subr.mxu0 0.0
    %2842 = vmatpush2.msra.mxu0 0.0
    %2843 = vmatprep.subr.mxu0 0.0
    %2844 = vmatpush2.msra.mxu0 0.0
    %2845 = vmatprep.subr.mxu0 0.0
    %2846 = vmatpush2.msra.mxu0 0.0
    %2847 = vmatprep.subr.mxu0 0.0
    %2848 = vmatpush2.msra.mxu0 0.0
    %2849 = vmatprep.subr.mxu0 0.0
    %2850 = vmatpush2.msra.mxu0 0.0
    %2851 = vmatprep.subr.mxu0 0.0
    %2852 = vmatpush2.msra.mxu0 0.0
    %2853 = vmatprep.subr.mxu0 0.0
    %2854 = vmatpush2.msra.mxu0 0.0
    %2855 = vmatprep.subr.mxu0 0.0
    %2856 = vmatpush2.msra.mxu0 0.0
    %2857 = vmatprep.subr.mxu0 0.0
    %2858 = vmatpush2.msra.mxu0 0.0
    %2859 = vmatprep.subr.mxu0 0.0
    %2860 = vmatpush2.msra.mxu0 0.0
    %2861 = vmatprep.subr.mxu0 0.0
    %2862 = vmatpush2.msra.mxu0 0.0
    %2863 = vmatprep.subr.mxu0 0.0
    %2864 = vmatpush2.msra.mxu0 0.0
    %2865 = vmatprep.subr.mxu0 0.0
    %2866 = vmatpush2.msra.mxu0 0.0
    %2867 = vmatprep.subr.mxu0 0.0
    %2868 = vmatpush2.msra.mxu0 0.0
    %2869 = vmatprep.subr.mxu0 0.0
    %2870 = vmatpush2.msra.mxu0 0.0
    %2871 = vmatprep.subr.mxu0 0.0
    %2872 = vmatpush2.msra.mxu0 0.0
    %2873 = vmatprep.mubr.f32.mxu0 0.0
    %2874 = vmatmul.mubr.f32.gmra.mxu0 %v2727
    %v2875 = vpop.f32.mrf.mxu0
    %v2876 = vadd.f32 %v2799, %v2875
    %v2877 = vpop.f32.mrf.mxu0
    %v2878 = vadd.f32 %v2801, %v2877
    %2879 = vmatprep.mubr.f32.mxu0 0.0
    %2880 = vmatmul.mubr.f32.gmra.mxu0 %v2730
    %v2881 = vpop.f32.mrf.mxu0
    %v2882 = vadd.f32 %v2805, %v2881
    %v2883 = vpop.f32.mrf.mxu0
    %v2884 = vadd.f32 %v2807, %v2883
    %2885 = vdwg.mxu0
    %v2887 = vsel %vm593, %v2412, 0
    %v2890 = vsel %vm593, %v2417, 0
    %2892 = vmatprep.subr.mxu0 %v2451
    %2893 = vmatpush1.msra.mxu0 %v2450
    %2894 = vmatprep.subr.mxu0 %v2449
    %2895 = vmatpush1.msra.mxu0 %v2448
    %2896 = vmatprep.subr.mxu0 %v2447
    %2897 = vmatpush1.msra.mxu0 %v2446
    %2898 = vmatprep.subr.mxu0 %v2445
    %2899 = vmatpush1.msra.mxu0 %v2444
    %2900 = vmatprep.subr.mxu0 %v2443
    %2901 = vmatpush1.msra.mxu0 %v2442
    %2902 = vmatprep.subr.mxu0 %v2441
    %2903 = vmatpush1.msra.mxu0 %v2440
    %2904 = vmatprep.subr.mxu0 %v2439
    %2905 = vmatpush1.msra.mxu0 %v2438
    %2906 = vmatprep.subr.mxu0 %v2437
    %2907 = vmatpush1.msra.mxu0 %v2436
    %2908 = vmatprep.subr.mxu0 %v2435
    %2909 = vmatpush1.msra.mxu0 %v2434
    %2910 = vmatprep.subr.mxu0 %v2433
    %2911 = vmatpush1.msra.mxu0 %v2432
    %2912 = vmatprep.subr.mxu0 %v2431
    %2913 = vmatpush1.msra.mxu0 %v2430
    %2914 = vmatprep.subr.mxu0 %v2429
    %2915 = vmatpush1.msra.mxu0 %v2428
    %2916 = vmatprep.subr.mxu0 %v2427
    %2917 = vmatpush1.msra.mxu0 %v2426
    %2918 = vmatprep.subr.mxu0 %v2425
    %2919 = vmatpush1.msra.mxu0 %v2424
    %2920 = vmatprep.subr.mxu0 %v2423
    %2921 = vmatpush1.msra.mxu0 %v2422
    %2922 = vmatprep.subr.mxu0 %v2421
    %2923 = vmatpush1.msra.mxu0 %v2420
    %2924 = vmatprep.subr.mxu0 %v2483
    %2925 = vmatpush2.msra.mxu0 %v2482
    %2926 = vmatprep.subr.mxu0 %v2481
    %2927 = vmatpush2.msra.mxu0 %v2480
    %2928 = vmatprep.subr.mxu0 %v2479
    %2929 = vmatpush2.msra.mxu0 %v2478
    %2930 = vmatprep.subr.mxu0 %v2477
    %2931 = vmatpush2.msra.mxu0 %v2476
    %2932 = vmatprep.subr.mxu0 %v2475
    %2933 = vmatpush2.msra.mxu0 %v2474
    %2934 = vmatprep.subr.mxu0 %v2473
    %2935 = vmatpush2.msra.mxu0 %v2472
    %2936 = vmatprep.subr.mxu0 %v2471
    %2937 = vmatpush2.msra.mxu0 %v2470
    %2938 = vmatprep.subr.mxu0 %v2469
    %2939 = vmatpush2.msra.mxu0 %v2468
    %2940 = vmatprep.subr.mxu0 %v2467
    %2941 = vmatpush2.msra.mxu0 %v2466
    %2942 = vmatprep.subr.mxu0 %v2465
    %2943 = vmatpush2.msra.mxu0 %v2464
    %2944 = vmatprep.subr.mxu0 %v2463
    %2945 = vmatpush2.msra.mxu0 %v2462
    %2946 = vmatprep.subr.mxu0 %v2461
    %2947 = vmatpush2.msra.mxu0 %v2460
    %2948 = vmatprep.subr.mxu0 %v2459
    %2949 = vmatpush2.msra.mxu0 %v2458
    %2950 = vmatprep.subr.mxu0 %v2457
    %2951 = vmatpush2.msra.mxu0 %v2456
    %2952 = vmatprep.subr.mxu0 %v2455
    %2953 = vmatpush2.msra.mxu0 %v2454
    %2954 = vmatprep.subr.mxu0 %v2453
    %2955 = vmatpush2.msra.mxu0 %v2452
    %2956 = vmatprep.mubr.f32.mxu0 %v2337
    %2957 = vmatmul.mubr.f32.gmra.mxu0 %v2335
    %v2958 = vpop.f32.mrf.mxu0
    %v2959 = vadd.f32 %v2876, %v2958
    %v2960 = vpop.f32.mrf.mxu0
    %v2961 = vadd.f32 %v2878, %v2960
    %2962 = vmatprep.mubr.f32.mxu0 %v2343
    %2963 = vmatmul.mubr.f32.gmra.mxu0 %v2341
    %v2964 = vpop.f32.mrf.mxu0
    %v2965 = vadd.f32 %v2882, %v2964
    %v2966 = vpop.f32.mrf.mxu0
    %v2967 = vadd.f32 %v2884, %v2966
    %2968 = vdwg.mxu0
    %2969 = vmatprep.subr.mxu0 0.0
    %2970 = vmatpush1.msra.mxu0 0.0
    %2971 = vmatprep.subr.mxu0 0.0
    %2972 = vmatpush1.msra.mxu0 0.0
    %2973 = vmatprep.subr.mxu0 0.0
    %2974 = vmatpush1.msra.mxu0 0.0
    %2975 = vmatprep.subr.mxu0 0.0
    %2976 = vmatpush1.msra.mxu0 0.0
    %2977 = vmatprep.subr.mxu0 0.0
    %2978 = vmatpush1.msra.mxu0 0.0
    %2979 = vmatprep.subr.mxu0 0.0
    %2980 = vmatpush1.msra.mxu0 0.0
    %2981 = vmatprep.subr.mxu0 0.0
    %2982 = vmatpush1.msra.mxu0 0.0
    %2983 = vmatprep.subr.mxu0 0.0
    %2984 = vmatpush1.msra.mxu0 0.0
    %2985 = vmatprep.subr.mxu0 0.0
    %2986 = vmatpush1.msra.mxu0 0.0
    %2987 = vmatprep.subr.mxu0 0.0
    %2988 = vmatpush1.msra.mxu0 0.0
    %2989 = vmatprep.subr.mxu0 0.0
    %2990 = vmatpush1.msra.mxu0 0.0
    %2991 = vmatprep.subr.mxu0 0.0
    %2992 = vmatpush1.msra.mxu0 0.0
    %2993 = vmatprep.subr.mxu0 %v2491
    %2994 = vmatpush1.msra.mxu0 %v2490
    %2995 = vmatprep.subr.mxu0 %v2489
    %2996 = vmatpush1.msra.mxu0 %v2488
    %2997 = vmatprep.subr.mxu0 %v2487
    %2998 = vmatpush1.msra.mxu0 %v2486
    %2999 = vmatprep.subr.mxu0 %v2485
    %3000 = vmatpush1.msra.mxu0 %v2484
    %3001 = vmatprep.subr.mxu0 0.0
    %3002 = vmatpush2.msra.mxu0 0.0
    %3003 = vmatprep.subr.mxu0 0.0
    %3004 = vmatpush2.msra.mxu0 0.0
    %3005 = vmatprep.subr.mxu0 0.0
    %3006 = vmatpush2.msra.mxu0 0.0
    %3007 = vmatprep.subr.mxu0 0.0
    %3008 = vmatpush2.msra.mxu0 0.0
    %3009 = vmatprep.subr.mxu0 0.0
    %3010 = vmatpush2.msra.mxu0 0.0
    %3011 = vmatprep.subr.mxu0 0.0
    %3012 = vmatpush2.msra.mxu0 0.0
    %3013 = vmatprep.subr.mxu0 0.0
    %3014 = vmatpush2.msra.mxu0 0.0
    %3015 = vmatprep.subr.mxu0 0.0
    %3016 = vmatpush2.msra.mxu0 0.0
    %3017 = vmatprep.subr.mxu0 0.0
    %3018 = vmatpush2.msra.mxu0 0.0
    %3019 = vmatprep.subr.mxu0 0.0
    %3020 = vmatpush2.msra.mxu0 0.0
    %3021 = vmatprep.subr.mxu0 0.0
    %3022 = vmatpush2.msra.mxu0 0.0
    %3023 = vmatprep.subr.mxu0 0.0
    %3024 = vmatpush2.msra.mxu0 0.0
    %3025 = vmatprep.subr.mxu0 0.0
    %3026 = vmatpush2.msra.mxu0 0.0
    %3027 = vmatprep.subr.mxu0 0.0
    %3028 = vmatpush2.msra.mxu0 0.0
    %3029 = vmatprep.subr.mxu0 0.0
    %3030 = vmatpush2.msra.mxu0 0.0
    %3031 = vmatprep.subr.mxu0 0.0
    %3032 = vmatpush2.msra.mxu0 0.0
    %3033 = vmatprep.mubr.f32.mxu0 0.0
    %3034 = vmatmul.mubr.f32.gmra.mxu0 %v2887
    %v3035 = vpop.f32.mrf.mxu0
    %v3036 = vadd.f32 %v2959, %v3035
    %v3037 = vpop.f32.mrf.mxu0
    %v3038 = vadd.f32 %v2961, %v3037
    %3039 = vmatprep.mubr.f32.mxu0 0.0
    %3040 = vmatmul.mubr.f32.gmra.mxu0 %v2890
    %v3041 = vpop.f32.mrf.mxu0
    %v3042 = vadd.f32 %v2965, %v3041
    %v3043 = vpop.f32.mrf.mxu0
    %v3044 = vadd.f32 %v2967, %v3043
    %3045 = vdwg.mxu0
    %s3046 = scalar_lea.vmem [#allocation11], 32
    %v3047 = vld [vmem:[%s3046] sm:$0xff]
    %v3048 = vld [vmem:[%s3046 + $0x8] sm:$0x3f]
    %v3050 = vsel %vm2251, %v3047, 0
    %v3053 = vsel %vm2251, %v3048, 0
    %3055 = vmatprep.subr.mxu0 0.0
    %3056 = vmatpush1.msra.mxu0 0.0
    %3057 = vmatprep.subr.mxu0 0.0
    %3058 = vmatpush1.msra.mxu0 0.0
    %3059 = vmatprep.subr.mxu0 0.0
    %3060 = vmatpush1.msra.mxu0 0.0
    %3061 = vmatprep.subr.mxu0 0.0
    %3062 = vmatpush1.msra.mxu0 0.0
    %3063 = vmatprep.subr.mxu0 0.0
    %3064 = vmatpush1.msra.mxu0 0.0
    %3065 = vmatprep.subr.mxu0 0.0
    %3066 = vmatpush1.msra.mxu0 0.0
    %3067 = vmatprep.subr.mxu0 0.0
    %3068 = vmatpush1.msra.mxu0 0.0
    %3069 = vmatprep.subr.mxu0 0.0
    %3070 = vmatpush1.msra.mxu0 0.0
    %3071 = vmatprep.subr.mxu0 0.0
    %3072 = vmatpush1.msra.mxu0 0.0
    %3073 = vmatprep.subr.mxu0 0.0
    %3074 = vmatpush1.msra.mxu0 0.0
    %3075 = vmatprep.subr.mxu0 0.0
    %3076 = vmatpush1.msra.mxu0 0.0
    %3077 = vmatprep.subr.mxu0 %v2263
    %3078 = vmatpush1.msra.mxu0 %v2260
    %3079 = vmatprep.subr.mxu0 %v2244
    %3080 = vmatpush1.msra.mxu0 %v2243
    %3081 = vmatprep.subr.mxu0 %v2241
    %3082 = vmatpush1.msra.mxu0 %v2240
    %3083 = vmatprep.subr.mxu0 %v2238
    %3084 = vmatpush1.msra.mxu0 %v2237
    %3085 = vmatprep.subr.mxu0 %v2235
    %3086 = vmatpush1.msra.mxu0 %v2234
    %3087 = vmatprep.subr.mxu0 0.0
    %3088 = vmatpush2.msra.mxu0 0.0
    %3089 = vmatprep.subr.mxu0 0.0
    %3090 = vmatpush2.msra.mxu0 0.0
    %3091 = vmatprep.subr.mxu0 0.0
    %3092 = vmatpush2.msra.mxu0 0.0
    %3093 = vmatprep.subr.mxu0 0.0
    %3094 = vmatpush2.msra.mxu0 0.0
    %3095 = vmatprep.subr.mxu0 0.0
    %3096 = vmatpush2.msra.mxu0 0.0
    %3097 = vmatprep.subr.mxu0 0.0
    %3098 = vmatpush2.msra.mxu0 0.0
    %3099 = vmatprep.subr.mxu0 0.0
    %3100 = vmatpush2.msra.mxu0 0.0
    %3101 = vmatprep.subr.mxu0 0.0
    %3102 = vmatpush2.msra.mxu0 0.0
    %3103 = vmatprep.subr.mxu0 0.0
    %3104 = vmatpush2.msra.mxu0 0.0
    %3105 = vmatprep.subr.mxu0 0.0
    %3106 = vmatpush2.msra.mxu0 0.0
    %3107 = vmatprep.subr.mxu0 0.0
    %3108 = vmatpush2.msra.mxu0 0.0
    %3109 = vmatprep.subr.mxu0 0.0
    %3110 = vmatpush2.msra.mxu0 0.0
    %3111 = vmatprep.subr.mxu0 0.0
    %3112 = vmatpush2.msra.mxu0 0.0
    %3113 = vmatprep.subr.mxu0 0.0
    %3114 = vmatpush2.msra.mxu0 0.0
    %3115 = vmatprep.subr.mxu0 0.0
    %3116 = vmatpush2.msra.mxu0 0.0
    %3117 = vmatprep.subr.mxu0 0.0
    %3118 = vmatpush2.msra.mxu0 0.0
    %3119 = vmatprep.mubr.f32.mxu0 0.0
    %3120 = vmatmul.mubr.f32.gmra.mxu0 %v3050
    %v3121 = vpop.f32.mrf.mxu0
    %v3122 = vadd.f32 0.0, %v3121
    %v3123 = vpop.f32.mrf.mxu0
    %v3124 = vadd.f32 0.0, %v3123
    %3125 = vmatprep.mubr.f32.mxu0 0.0
    %3126 = vmatmul.mubr.f32.gmra.mxu0 %v3053
    %v3127 = vpop.f32.mrf.mxu0
    %v3128 = vadd.f32 0.0, %v3127
    %v3129 = vpop.f32.mrf.mxu0
    %v3130 = vadd.f32 0.0, %v3129
    %3131 = vdwg.mxu0
    %3132 = vmatprep.subr.mxu0 0.0
    %3133 = vmatpush1.msra.mxu0 0.0
    %3134 = vmatprep.subr.mxu0 0.0
    %3135 = vmatpush1.msra.mxu0 0.0
    %3136 = vmatprep.subr.mxu0 0.0
    %3137 = vmatpush1.msra.mxu0 0.0
    %3138 = vmatprep.subr.mxu0 0.0
    %3139 = vmatpush1.msra.mxu0 0.0
    %3140 = vmatprep.subr.mxu0 0.0
    %3141 = vmatpush1.msra.mxu0 0.0
    %3142 = vmatprep.subr.mxu0 0.0
    %3143 = vmatpush1.msra.mxu0 0.0
    %3144 = vmatprep.subr.mxu0 0.0
    %3145 = vmatpush1.msra.mxu0 0.0
    %3146 = vmatprep.subr.mxu0 0.0
    %3147 = vmatpush1.msra.mxu0 0.0
    %3148 = vmatprep.subr.mxu0 0.0
    %3149 = vmatpush1.msra.mxu0 0.0
    %3150 = vmatprep.subr.mxu0 0.0
    %3151 = vmatpush1.msra.mxu0 0.0
    %3152 = vmatprep.subr.mxu0 0.0
    %3153 = vmatpush1.msra.mxu0 0.0
    %3154 = vmatprep.subr.mxu0 0.0
    %3155 = vmatpush1.msra.mxu0 %v2266
    %3156 = vmatprep.subr.mxu0 0.0
    %3157 = vmatpush1.msra.mxu0 %v2245
    %3158 = vmatprep.subr.mxu0 0.0
    %3159 = vmatpush1.msra.mxu0 %v2242
    %3160 = vmatprep.subr.mxu0 0.0
    %3161 = vmatpush1.msra.mxu0 %v2239
    %3162 = vmatprep.subr.mxu0 0.0
    %3163 = vmatpush1.msra.mxu0 %v2236
    %3164 = vmatprep.subr.mxu0 0.0
    %3165 = vmatpush2.msra.mxu0 0.0
    %3166 = vmatprep.subr.mxu0 0.0
    %3167 = vmatpush2.msra.mxu0 0.0
    %3168 = vmatprep.subr.mxu0 0.0
    %3169 = vmatpush2.msra.mxu0 0.0
    %3170 = vmatprep.subr.mxu0 0.0
    %3171 = vmatpush2.msra.mxu0 0.0
    %3172 = vmatprep.subr.mxu0 0.0
    %3173 = vmatpush2.msra.mxu0 0.0
    %3174 = vmatprep.subr.mxu0 0.0
    %3175 = vmatpush2.msra.mxu0 0.0
    %3176 = vmatprep.subr.mxu0 0.0
    %3177 = vmatpush2.msra.mxu0 0.0
    %3178 = vmatprep.subr.mxu0 0.0
    %3179 = vmatpush2.msra.mxu0 0.0
    %3180 = vmatprep.subr.mxu0 0.0
    %3181 = vmatpush2.msra.mxu0 0.0
    %3182 = vmatprep.subr.mxu0 0.0
    %3183 = vmatpush2.msra.mxu0 0.0
    %3184 = vmatprep.subr.mxu0 0.0
    %3185 = vmatpush2.msra.mxu0 0.0
    %3186 = vmatprep.subr.mxu0 0.0
    %3187 = vmatpush2.msra.mxu0 0.0
    %3188 = vmatprep.subr.mxu0 0.0
    %3189 = vmatpush2.msra.mxu0 0.0
    %3190 = vmatprep.subr.mxu0 0.0
    %3191 = vmatpush2.msra.mxu0 0.0
    %3192 = vmatprep.subr.mxu0 0.0
    %3193 = vmatpush2.msra.mxu0 0.0
    %3194 = vmatprep.subr.mxu0 0.0
    %3195 = vmatpush2.msra.mxu0 0.0
    %3196 = vmatprep.mubr.f32.mxu0 0.0
    %3197 = vmatmul.mubr.f32.gmra.mxu0 %v3050
    %v3198 = vpop.f32.mrf.mxu0
    %v3199 = vadd.f32 0.0, %v3198
    %v3200 = vpop.f32.mrf.mxu0
    %3201 = vmatprep.mubr.f32.mxu0 0.0
    %3202 = vmatmul.mubr.f32.gmra.mxu0 %v3053
    %v3203 = vpop.f32.mrf.mxu0
    %v3204 = vadd.f32 0.0, %v3203
    %v3205 = vpop.f32.mrf.mxu0
    %3206 = vdwg.mxu0
    %s3207 = scalar_lea.vmem [#allocation13], 1152
    %v3208 = vld [vmem:[%s3207] sm:$0xff]
    %v3209 = vld [vmem:[%s3207 + $0x8] sm:$0xff]
    %v3210 = vld [vmem:[%s3207 + $0x10] sm:$0xff]
    %v3211 = vld [vmem:[%s3207 + $0x18] sm:$0xff]
    %v3212 = vld [vmem:[%s3207 + $0x20] sm:$0xff]
    %v3213 = vld [vmem:[%s3207 + $0x28] sm:$0xff]
    %v3214 = vld [vmem:[%s3207 + $0x30] sm:$0xff]
    %v3215 = vld [vmem:[%s3207 + $0x38] sm:$0xff]
    %v3216 = vld [vmem:[%s3207 + $0x40] sm:$0xff]
    %v3217 = vld [vmem:[%s3207 + $0x48] sm:$0xff]
    %v3218 = vld [vmem:[%s3207 + $0x50] sm:$0xff]
    %v3219 = vld [vmem:[%s3207 + $0x58] sm:$0xff]
    %v3220 = vld [vmem:[%s3207 + $0x60] sm:$0xff]
    %v3221 = vld [vmem:[%s3207 + $0x68] sm:$0xff]
    %v3222 = vld [vmem:[%s3207 + $0x70] sm:$0xff]
    %v3223 = vld [vmem:[%s3207 + $0x78] sm:$0xff]
    %v3224 = vld [vmem:[%s3207 + $0x80] sm:$0xff]
    %v3225 = vld [vmem:[%s3207 + $0x88] sm:$0xff]
    %v3226 = vld [vmem:[%s3207 + $0x90] sm:$0xff]
    %v3227 = vld [vmem:[%s3207 + $0x98] sm:$0xff]
    %v3228 = vld [vmem:[%s3207 + $0xa0] sm:$0xff]
    %v3229 = vld [vmem:[%s3207 + $0xa8] sm:$0xff]
    %v3230 = vld [vmem:[%s3207 + $0xb0] sm:$0xff]
    %v3231 = vld [vmem:[%s3207 + $0xb8] sm:$0xff]
    %v3232 = vld [vmem:[%s3207 + $0xc0] sm:$0xff]
    %v3233 = vld [vmem:[%s3207 + $0xc8] sm:$0xff]
    %v3234 = vld [vmem:[%s3207 + $0xd0] sm:$0xff]
    %v3235 = vld [vmem:[%s3207 + $0xd8] sm:$0xff]
    %v3236 = vld [vmem:[%s3207 + $0xe0] sm:$0xff]
    %v3237 = vld [vmem:[%s3207 + $0xe8] sm:$0xff]
    %v3238 = vld [vmem:[%s3207 + $0xf0] sm:$0xff]
    %v3239 = vld [vmem:[%s3207 + $0xf8] sm:$0xff]
    %v3240 = vld [vmem:[%s3207 + $0x100] sm:$0xff]
    %v3241 = vld [vmem:[%s3207 + $0x108] sm:$0xff]
    %v3242 = vld [vmem:[%s3207 + $0x110] sm:$0xff]
    %v3243 = vld [vmem:[%s3207 + $0x118] sm:$0xff]
    %v3244 = vld [vmem:[%s3207 + $0x120] sm:$0xff]
    %v3245 = vld [vmem:[%s3207 + $0x128] sm:$0xff]
    %v3246 = vld [vmem:[%s3207 + $0x130] sm:$0xff]
    %v3247 = vld [vmem:[%s3207 + $0x138] sm:$0xff]
    %v3248 = vld [vmem:[%s3207 + $0x140] sm:$0xff]
    %v3249 = vld [vmem:[%s3207 + $0x148] sm:$0xff]
    %v3250 = vld [vmem:[%s3207 + $0x150] sm:$0xff]
    %v3251 = vld [vmem:[%s3207 + $0x158] sm:$0xff]
    %v3252 = vld [vmem:[%s3207 + $0x160] sm:$0xff]
    %v3253 = vld [vmem:[%s3207 + $0x168] sm:$0xff]
    %v3254 = vld [vmem:[%s3207 + $0x170] sm:$0xff]
    %v3255 = vld [vmem:[%s3207 + $0x178] sm:$0xff]
    %v3256 = vld [vmem:[%s3207 + $0x180] sm:$0xff]
    %v3257 = vld [vmem:[%s3207 + $0x188] sm:$0xff]
    %v3258 = vld [vmem:[%s3207 + $0x190] sm:$0xff]
    %v3259 = vld [vmem:[%s3207 + $0x198] sm:$0xff]
    %v3260 = vld [vmem:[%s3207 + $0x1a0] sm:$0xff]
    %v3261 = vld [vmem:[%s3207 + $0x1a8] sm:$0xff]
    %v3262 = vld [vmem:[%s3207 + $0x1b0] sm:$0xff]
    %v3263 = vld [vmem:[%s3207 + $0x1b8] sm:$0xff]
    %v3264 = vld [vmem:[%s3207 + $0x1c0] sm:$0xff]
    %v3265 = vld [vmem:[%s3207 + $0x1c8] sm:$0xff]
    %v3266 = vld [vmem:[%s3207 + $0x1d0] sm:$0xff]
    %v3267 = vld [vmem:[%s3207 + $0x1d8] sm:$0xff]
    %v3268 = vld [vmem:[%s3207 + $0x1e0] sm:$0xff]
    %v3269 = vld [vmem:[%s3207 + $0x1e8] sm:$0xff]
    %v3270 = vld [vmem:[%s3207 + $0x1f0] sm:$0xff]
    %v3271 = vld [vmem:[%s3207 + $0x1f8] sm:$0xff]
    %v3272 = vld [vmem:[%s3207 + $0x200] sm:$0xff]
    %v3273 = vld [vmem:[%s3207 + $0x208] sm:$0xff]
    %v3274 = vld [vmem:[%s3207 + $0x210] sm:$0xff]
    %v3275 = vld [vmem:[%s3207 + $0x218] sm:$0xff]
    %v3276 = vld [vmem:[%s3207 + $0x220] sm:$0xff]
    %v3277 = vld [vmem:[%s3207 + $0x228] sm:$0xff]
    %v3278 = vld [vmem:[%s3207 + $0x230] sm:$0xff]
    %v3279 = vld [vmem:[%s3207 + $0x238] sm:$0xff]
    %v3281 = vsel %vm593, %v3199, 0
    %v3284 = vsel %vm593, %v3204, 0
    %3286 = vmatprep.subr.mxu0 %v3239
    %3287 = vmatpush1.msra.mxu0 %v3238
    %3288 = vmatprep.subr.mxu0 %v3237
    %3289 = vmatpush1.msra.mxu0 %v3236
    %3290 = vmatprep.subr.mxu0 %v3235
    %3291 = vmatpush1.msra.mxu0 %v3234
    %3292 = vmatprep.subr.mxu0 %v3233
    %3293 = vmatpush1.msra.mxu0 %v3232
    %3294 = vmatprep.subr.mxu0 %v3231
    %3295 = vmatpush1.msra.mxu0 %v3230
    %3296 = vmatprep.subr.mxu0 %v3229
    %3297 = vmatpush1.msra.mxu0 %v3228
    %3298 = vmatprep.subr.mxu0 %v3227
    %3299 = vmatpush1.msra.mxu0 %v3226
    %3300 = vmatprep.subr.mxu0 %v3225
    %3301 = vmatpush1.msra.mxu0 %v3224
    %3302 = vmatprep.subr.mxu0 %v3223
    %3303 = vmatpush1.msra.mxu0 %v3222
    %3304 = vmatprep.subr.mxu0 %v3221
    %3305 = vmatpush1.msra.mxu0 %v3220
    %3306 = vmatprep.subr.mxu0 %v3219
    %3307 = vmatpush1.msra.mxu0 %v3218
    %3308 = vmatprep.subr.mxu0 %v3217
    %3309 = vmatpush1.msra.mxu0 %v3216
    %3310 = vmatprep.subr.mxu0 %v3215
    %3311 = vmatpush1.msra.mxu0 %v3214
    %3312 = vmatprep.subr.mxu0 %v3213
    %3313 = vmatpush1.msra.mxu0 %v3212
    %3314 = vmatprep.subr.mxu0 %v3211
    %3315 = vmatpush1.msra.mxu0 %v3210
    %3316 = vmatprep.subr.mxu0 %v3209
    %3317 = vmatpush1.msra.mxu0 %v3208
    %3318 = vmatprep.subr.mxu0 %v3271
    %3319 = vmatpush2.msra.mxu0 %v3270
    %3320 = vmatprep.subr.mxu0 %v3269
    %3321 = vmatpush2.msra.mxu0 %v3268
    %3322 = vmatprep.subr.mxu0 %v3267
    %3323 = vmatpush2.msra.mxu0 %v3266
    %3324 = vmatprep.subr.mxu0 %v3265
    %3325 = vmatpush2.msra.mxu0 %v3264
    %3326 = vmatprep.subr.mxu0 %v3263
    %3327 = vmatpush2.msra.mxu0 %v3262
    %3328 = vmatprep.subr.mxu0 %v3261
    %3329 = vmatpush2.msra.mxu0 %v3260
    %3330 = vmatprep.subr.mxu0 %v3259
    %3331 = vmatpush2.msra.mxu0 %v3258
    %3332 = vmatprep.subr.mxu0 %v3257
    %3333 = vmatpush2.msra.mxu0 %v3256
    %3334 = vmatprep.subr.mxu0 %v3255
    %3335 = vmatpush2.msra.mxu0 %v3254
    %3336 = vmatprep.subr.mxu0 %v3253
    %3337 = vmatpush2.msra.mxu0 %v3252
    %3338 = vmatprep.subr.mxu0 %v3251
    %3339 = vmatpush2.msra.mxu0 %v3250
    %3340 = vmatprep.subr.mxu0 %v3249
    %3341 = vmatpush2.msra.mxu0 %v3248
    %3342 = vmatprep.subr.mxu0 %v3247
    %3343 = vmatpush2.msra.mxu0 %v3246
    %3344 = vmatprep.subr.mxu0 %v3245
    %3345 = vmatpush2.msra.mxu0 %v3244
    %3346 = vmatprep.subr.mxu0 %v3243
    %3347 = vmatpush2.msra.mxu0 %v3242
    %3348 = vmatprep.subr.mxu0 %v3241
    %3349 = vmatpush2.msra.mxu0 %v3240
    %3350 = vmatprep.mubr.f32.mxu0 %v3124
    %3351 = vmatmul.mubr.f32.gmra.mxu0 %v3122
    %v3352 = vpop.f32.mrf.mxu0
    %v3353 = vadd.f32 0.0, %v3352
    %v3354 = vpop.f32.mrf.mxu0
    %v3355 = vadd.f32 0.0, %v3354
    %3356 = vmatprep.mubr.f32.mxu0 %v3130
    %3357 = vmatmul.mubr.f32.gmra.mxu0 %v3128
    %v3358 = vpop.f32.mrf.mxu0
    %v3359 = vadd.f32 0.0, %v3358
    %v3360 = vpop.f32.mrf.mxu0
    %v3361 = vadd.f32 0.0, %v3360
    %3362 = vdwg.mxu0
    %3363 = vmatprep.subr.mxu0 0.0
    %3364 = vmatpush1.msra.mxu0 0.0
    %3365 = vmatprep.subr.mxu0 0.0
    %3366 = vmatpush1.msra.mxu0 0.0
    %3367 = vmatprep.subr.mxu0 0.0
    %3368 = vmatpush1.msra.mxu0 0.0
    %3369 = vmatprep.subr.mxu0 0.0
    %3370 = vmatpush1.msra.mxu0 0.0
    %3371 = vmatprep.subr.mxu0 0.0
    %3372 = vmatpush1.msra.mxu0 0.0
    %3373 = vmatprep.subr.mxu0 0.0
    %3374 = vmatpush1.msra.mxu0 0.0
    %3375 = vmatprep.subr.mxu0 0.0
    %3376 = vmatpush1.msra.mxu0 0.0
    %3377 = vmatprep.subr.mxu0 0.0
    %3378 = vmatpush1.msra.mxu0 0.0
    %3379 = vmatprep.subr.mxu0 0.0
    %3380 = vmatpush1.msra.mxu0 0.0
    %3381 = vmatprep.subr.mxu0 0.0
    %3382 = vmatpush1.msra.mxu0 0.0
    %3383 = vmatprep.subr.mxu0 0.0
    %3384 = vmatpush1.msra.mxu0 0.0
    %3385 = vmatprep.subr.mxu0 0.0
    %3386 = vmatpush1.msra.mxu0 0.0
    %3387 = vmatprep.subr.mxu0 %v3279
    %3388 = vmatpush1.msra.mxu0 %v3278
    %3389 = vmatprep.subr.mxu0 %v3277
    %3390 = vmatpush1.msra.mxu0 %v3276
    %3391 = vmatprep.subr.mxu0 %v3275
    %3392 = vmatpush1.msra.mxu0 %v3274
    %3393 = vmatprep.subr.mxu0 %v3273
    %3394 = vmatpush1.msra.mxu0 %v3272
    %3395 = vmatprep.subr.mxu0 0.0
    %3396 = vmatpush2.msra.mxu0 0.0
    %3397 = vmatprep.subr.mxu0 0.0
    %3398 = vmatpush2.msra.mxu0 0.0
    %3399 = vmatprep.subr.mxu0 0.0
    %3400 = vmatpush2.msra.mxu0 0.0
    %3401 = vmatprep.subr.mxu0 0.0
    %3402 = vmatpush2.msra.mxu0 0.0
    %3403 = vmatprep.subr.mxu0 0.0
    %3404 = vmatpush2.msra.mxu0 0.0
    %3405 = vmatprep.subr.mxu0 0.0
    %3406 = vmatpush2.msra.mxu0 0.0
    %3407 = vmatprep.subr.mxu0 0.0
    %3408 = vmatpush2.msra.mxu0 0.0
    %3409 = vmatprep.subr.mxu0 0.0
    %3410 = vmatpush2.msra.mxu0 0.0
    %3411 = vmatprep.subr.mxu0 0.0
    %3412 = vmatpush2.msra.mxu0 0.0
    %3413 = vmatprep.subr.mxu0 0.0
    %3414 = vmatpush2.msra.mxu0 0.0
    %3415 = vmatprep.subr.mxu0 0.0
    %3416 = vmatpush2.msra.mxu0 0.0
    %3417 = vmatprep.subr.mxu0 0.0
    %3418 = vmatpush2.msra.mxu0 0.0
    %3419 = vmatprep.subr.mxu0 0.0
    %3420 = vmatpush2.msra.mxu0 0.0
    %3421 = vmatprep.subr.mxu0 0.0
    %3422 = vmatpush2.msra.mxu0 0.0
    %3423 = vmatprep.subr.mxu0 0.0
    %3424 = vmatpush2.msra.mxu0 0.0
    %3425 = vmatprep.subr.mxu0 0.0
    %3426 = vmatpush2.msra.mxu0 0.0
    %3427 = vmatprep.mubr.f32.mxu0 0.0
    %3428 = vmatmul.mubr.f32.gmra.mxu0 %v3281
    %v3429 = vpop.f32.mrf.mxu0
    %v3430 = vadd.f32 %v3353, %v3429
    %v3431 = vpop.f32.mrf.mxu0
    %v3432 = vadd.f32 %v3355, %v3431
    %3433 = vmatprep.mubr.f32.mxu0 0.0
    %3434 = vmatmul.mubr.f32.gmra.mxu0 %v3284
    %v3435 = vpop.f32.mrf.mxu0
    %v3436 = vadd.f32 %v3359, %v3435
    %v3437 = vpop.f32.mrf.mxu0
    %v3438 = vadd.f32 %v3361, %v3437
    %3439 = vdwg.mxu0
    %v3440 = vadd.f32 %v3036, %v3430
    %v3441 = vadd.f32 %v3038, %v3432
    %v3442 = vadd.f32 %v3042, %v3436
    %v3443 = vadd.f32 %v3044, %v3438
    %s3444 = scalar_lea.vmem [#allocation11], 48
    %v3445 = vld [vmem:[%s3444] sm:$0xff]
    %v3446 = vld [vmem:[%s3444 + $0x8] sm:$0x3f]
    %v3448 = vsel %vm2251, %v3445, 0
    %v3451 = vsel %vm2251, %v3446, 0
    %3453 = vmatprep.subr.mxu0 0.0
    %3454 = vmatpush1.msra.mxu0 0.0
    %3455 = vmatprep.subr.mxu0 0.0
    %3456 = vmatpush1.msra.mxu0 0.0
    %3457 = vmatprep.subr.mxu0 0.0
    %3458 = vmatpush1.msra.mxu0 0.0
    %3459 = vmatprep.subr.mxu0 0.0
    %3460 = vmatpush1.msra.mxu0 0.0
    %3461 = vmatprep.subr.mxu0 0.0
    %3462 = vmatpush1.msra.mxu0 0.0
    %3463 = vmatprep.subr.mxu0 0.0
    %3464 = vmatpush1.msra.mxu0 0.0
    %3465 = vmatprep.subr.mxu0 0.0
    %3466 = vmatpush1.msra.mxu0 0.0
    %3467 = vmatprep.subr.mxu0 0.0
    %3468 = vmatpush1.msra.mxu0 0.0
    %3469 = vmatprep.subr.mxu0 0.0
    %3470 = vmatpush1.msra.mxu0 0.0
    %3471 = vmatprep.subr.mxu0 0.0
    %3472 = vmatpush1.msra.mxu0 0.0
    %3473 = vmatprep.subr.mxu0 0.0
    %3474 = vmatpush1.msra.mxu0 0.0
    %3475 = vmatprep.subr.mxu0 %v2263
    %3476 = vmatpush1.msra.mxu0 %v2260
    %3477 = vmatprep.subr.mxu0 %v2244
    %3478 = vmatpush1.msra.mxu0 %v2243
    %3479 = vmatprep.subr.mxu0 %v2241
    %3480 = vmatpush1.msra.mxu0 %v2240
    %3481 = vmatprep.subr.mxu0 %v2238
    %3482 = vmatpush1.msra.mxu0 %v2237
    %3483 = vmatprep.subr.mxu0 %v2235
    %3484 = vmatpush1.msra.mxu0 %v2234
    %3485 = vmatprep.subr.mxu0 0.0
    %3486 = vmatpush2.msra.mxu0 0.0
    %3487 = vmatprep.subr.mxu0 0.0
    %3488 = vmatpush2.msra.mxu0 0.0
    %3489 = vmatprep.subr.mxu0 0.0
    %3490 = vmatpush2.msra.mxu0 0.0
    %3491 = vmatprep.subr.mxu0 0.0
    %3492 = vmatpush2.msra.mxu0 0.0
    %3493 = vmatprep.subr.mxu0 0.0
    %3494 = vmatpush2.msra.mxu0 0.0
    %3495 = vmatprep.subr.mxu0 0.0
    %3496 = vmatpush2.msra.mxu0 0.0
    %3497 = vmatprep.subr.mxu0 0.0
    %3498 = vmatpush2.msra.mxu0 0.0
    %3499 = vmatprep.subr.mxu0 0.0
    %3500 = vmatpush2.msra.mxu0 0.0
    %3501 = vmatprep.subr.mxu0 0.0
    %3502 = vmatpush2.msra.mxu0 0.0
    %3503 = vmatprep.subr.mxu0 0.0
    %3504 = vmatpush2.msra.mxu0 0.0
    %3505 = vmatprep.subr.mxu0 0.0
    %3506 = vmatpush2.msra.mxu0 0.0
    %3507 = vmatprep.subr.mxu0 0.0
    %3508 = vmatpush2.msra.mxu0 0.0
    %3509 = vmatprep.subr.mxu0 0.0
    %3510 = vmatpush2.msra.mxu0 0.0
    %3511 = vmatprep.subr.mxu0 0.0
    %3512 = vmatpush2.msra.mxu0 0.0
    %3513 = vmatprep.subr.mxu0 0.0
    %3514 = vmatpush2.msra.mxu0 0.0
    %3515 = vmatprep.subr.mxu0 0.0
    %3516 = vmatpush2.msra.mxu0 0.0
    %3517 = vmatprep.mubr.f32.mxu0 0.0
    %3518 = vmatmul.mubr.f32.gmra.mxu0 %v3448
    %v3519 = vpop.f32.mrf.mxu0
    %v3520 = vadd.f32 0.0, %v3519
    %v3521 = vpop.f32.mrf.mxu0
    %v3522 = vadd.f32 0.0, %v3521
    %3523 = vmatprep.mubr.f32.mxu0 0.0
    %3524 = vmatmul.mubr.f32.gmra.mxu0 %v3451
    %v3525 = vpop.f32.mrf.mxu0
    %v3526 = vadd.f32 0.0, %v3525
    %v3527 = vpop.f32.mrf.mxu0
    %v3528 = vadd.f32 0.0, %v3527
    %3529 = vdwg.mxu0
    %3530 = vmatprep.subr.mxu0 0.0
    %3531 = vmatpush1.msra.mxu0 0.0
    %3532 = vmatprep.subr.mxu0 0.0
    %3533 = vmatpush1.msra.mxu0 0.0
    %3534 = vmatprep.subr.mxu0 0.0
    %3535 = vmatpush1.msra.mxu0 0.0
    %3536 = vmatprep.subr.mxu0 0.0
    %3537 = vmatpush1.msra.mxu0 0.0
    %3538 = vmatprep.subr.mxu0 0.0
    %3539 = vmatpush1.msra.mxu0 0.0
    %3540 = vmatprep.subr.mxu0 0.0
    %3541 = vmatpush1.msra.mxu0 0.0
    %3542 = vmatprep.subr.mxu0 0.0
    %3543 = vmatpush1.msra.mxu0 0.0
    %3544 = vmatprep.subr.mxu0 0.0
    %3545 = vmatpush1.msra.mxu0 0.0
    %3546 = vmatprep.subr.mxu0 0.0
    %3547 = vmatpush1.msra.mxu0 0.0
    %3548 = vmatprep.subr.mxu0 0.0
    %3549 = vmatpush1.msra.mxu0 0.0
    %3550 = vmatprep.subr.mxu0 0.0
    %3551 = vmatpush1.msra.mxu0 0.0
    %3552 = vmatprep.subr.mxu0 0.0
    %3553 = vmatpush1.msra.mxu0 %v2266
    %3554 = vmatprep.subr.mxu0 0.0
    %3555 = vmatpush1.msra.mxu0 %v2245
    %3556 = vmatprep.subr.mxu0 0.0
    %3557 = vmatpush1.msra.mxu0 %v2242
    %3558 = vmatprep.subr.mxu0 0.0
    %3559 = vmatpush1.msra.mxu0 %v2239
    %3560 = vmatprep.subr.mxu0 0.0
    %3561 = vmatpush1.msra.mxu0 %v2236
    %3562 = vmatprep.subr.mxu0 0.0
    %3563 = vmatpush2.msra.mxu0 0.0
    %3564 = vmatprep.subr.mxu0 0.0
    %3565 = vmatpush2.msra.mxu0 0.0
    %3566 = vmatprep.subr.mxu0 0.0
    %3567 = vmatpush2.msra.mxu0 0.0
    %3568 = vmatprep.subr.mxu0 0.0
    %3569 = vmatpush2.msra.mxu0 0.0
    %3570 = vmatprep.subr.mxu0 0.0
    %3571 = vmatpush2.msra.mxu0 0.0
    %3572 = vmatprep.subr.mxu0 0.0
    %3573 = vmatpush2.msra.mxu0 0.0
    %3574 = vmatprep.subr.mxu0 0.0
    %3575 = vmatpush2.msra.mxu0 0.0
    %3576 = vmatprep.subr.mxu0 0.0
    %3577 = vmatpush2.msra.mxu0 0.0
    %3578 = vmatprep.subr.mxu0 0.0
    %3579 = vmatpush2.msra.mxu0 0.0
    %3580 = vmatprep.subr.mxu0 0.0
    %3581 = vmatpush2.msra.mxu0 0.0
    %3582 = vmatprep.subr.mxu0 0.0
    %3583 = vmatpush2.msra.mxu0 0.0
    %3584 = vmatprep.subr.mxu0 0.0
    %3585 = vmatpush2.msra.mxu0 0.0
    %3586 = vmatprep.subr.mxu0 0.0
    %3587 = vmatpush2.msra.mxu0 0.0
    %3588 = vmatprep.subr.mxu0 0.0
    %3589 = vmatpush2.msra.mxu0 0.0
    %3590 = vmatprep.subr.mxu0 0.0
    %3591 = vmatpush2.msra.mxu0 0.0
    %3592 = vmatprep.subr.mxu0 0.0
    %3593 = vmatpush2.msra.mxu0 0.0
    %3594 = vmatprep.mubr.f32.mxu0 0.0
    %3595 = vmatmul.mubr.f32.gmra.mxu0 %v3448
    %v3596 = vpop.f32.mrf.mxu0
    %v3597 = vadd.f32 0.0, %v3596
    %v3598 = vpop.f32.mrf.mxu0
    %3599 = vmatprep.mubr.f32.mxu0 0.0
    %3600 = vmatmul.mubr.f32.gmra.mxu0 %v3451
    %v3601 = vpop.f32.mrf.mxu0
    %v3602 = vadd.f32 0.0, %v3601
    %v3603 = vpop.f32.mrf.mxu0
    %3604 = vdwg.mxu0
    %s3605 = scalar_lea.vmem [#allocation13], 1728
    %v3606 = vld [vmem:[%s3605] sm:$0xff]
    %v3607 = vld [vmem:[%s3605 + $0x8] sm:$0xff]
    %v3608 = vld [vmem:[%s3605 + $0x10] sm:$0xff]
    %v3609 = vld [vmem:[%s3605 + $0x18] sm:$0xff]
    %v3610 = vld [vmem:[%s3605 + $0x20] sm:$0xff]
    %v3611 = vld [vmem:[%s3605 + $0x28] sm:$0xff]
    %v3612 = vld [vmem:[%s3605 + $0x30] sm:$0xff]
    %v3613 = vld [vmem:[%s3605 + $0x38] sm:$0xff]
    %v3614 = vld [vmem:[%s3605 + $0x40] sm:$0xff]
    %v3615 = vld [vmem:[%s3605 + $0x48] sm:$0xff]
    %v3616 = vld [vmem:[%s3605 + $0x50] sm:$0xff]
    %v3617 = vld [vmem:[%s3605 + $0x58] sm:$0xff]
    %v3618 = vld [vmem:[%s3605 + $0x60] sm:$0xff]
    %v3619 = vld [vmem:[%s3605 + $0x68] sm:$0xff]
    %v3620 = vld [vmem:[%s3605 + $0x70] sm:$0xff]
    %v3621 = vld [vmem:[%s3605 + $0x78] sm:$0xff]
    %v3622 = vld [vmem:[%s3605 + $0x80] sm:$0xff]
    %v3623 = vld [vmem:[%s3605 + $0x88] sm:$0xff]
    %v3624 = vld [vmem:[%s3605 + $0x90] sm:$0xff]
    %v3625 = vld [vmem:[%s3605 + $0x98] sm:$0xff]
    %v3626 = vld [vmem:[%s3605 + $0xa0] sm:$0xff]
    %v3627 = vld [vmem:[%s3605 + $0xa8] sm:$0xff]
    %v3628 = vld [vmem:[%s3605 + $0xb0] sm:$0xff]
    %v3629 = vld [vmem:[%s3605 + $0xb8] sm:$0xff]
    %v3630 = vld [vmem:[%s3605 + $0xc0] sm:$0xff]
    %v3631 = vld [vmem:[%s3605 + $0xc8] sm:$0xff]
    %v3632 = vld [vmem:[%s3605 + $0xd0] sm:$0xff]
    %v3633 = vld [vmem:[%s3605 + $0xd8] sm:$0xff]
    %v3634 = vld [vmem:[%s3605 + $0xe0] sm:$0xff]
    %v3635 = vld [vmem:[%s3605 + $0xe8] sm:$0xff]
    %v3636 = vld [vmem:[%s3605 + $0xf0] sm:$0xff]
    %v3637 = vld [vmem:[%s3605 + $0xf8] sm:$0xff]
    %v3638 = vld [vmem:[%s3605 + $0x100] sm:$0xff]
    %v3639 = vld [vmem:[%s3605 + $0x108] sm:$0xff]
    %v3640 = vld [vmem:[%s3605 + $0x110] sm:$0xff]
    %v3641 = vld [vmem:[%s3605 + $0x118] sm:$0xff]
    %v3642 = vld [vmem:[%s3605 + $0x120] sm:$0xff]
    %v3643 = vld [vmem:[%s3605 + $0x128] sm:$0xff]
    %v3644 = vld [vmem:[%s3605 + $0x130] sm:$0xff]
    %v3645 = vld [vmem:[%s3605 + $0x138] sm:$0xff]
    %v3646 = vld [vmem:[%s3605 + $0x140] sm:$0xff]
    %v3647 = vld [vmem:[%s3605 + $0x148] sm:$0xff]
    %v3648 = vld [vmem:[%s3605 + $0x150] sm:$0xff]
    %v3649 = vld [vmem:[%s3605 + $0x158] sm:$0xff]
    %v3650 = vld [vmem:[%s3605 + $0x160] sm:$0xff]
    %v3651 = vld [vmem:[%s3605 + $0x168] sm:$0xff]
    %v3652 = vld [vmem:[%s3605 + $0x170] sm:$0xff]
    %v3653 = vld [vmem:[%s3605 + $0x178] sm:$0xff]
    %v3654 = vld [vmem:[%s3605 + $0x180] sm:$0xff]
    %v3655 = vld [vmem:[%s3605 + $0x188] sm:$0xff]
    %v3656 = vld [vmem:[%s3605 + $0x190] sm:$0xff]
    %v3657 = vld [vmem:[%s3605 + $0x198] sm:$0xff]
    %v3658 = vld [vmem:[%s3605 + $0x1a0] sm:$0xff]
    %v3659 = vld [vmem:[%s3605 + $0x1a8] sm:$0xff]
    %v3660 = vld [vmem:[%s3605 + $0x1b0] sm:$0xff]
    %v3661 = vld [vmem:[%s3605 + $0x1b8] sm:$0xff]
    %v3662 = vld [vmem:[%s3605 + $0x1c0] sm:$0xff]
    %v3663 = vld [vmem:[%s3605 + $0x1c8] sm:$0xff]
    %v3664 = vld [vmem:[%s3605 + $0x1d0] sm:$0xff]
    %v3665 = vld [vmem:[%s3605 + $0x1d8] sm:$0xff]
    %v3666 = vld [vmem:[%s3605 + $0x1e0] sm:$0xff]
    %v3667 = vld [vmem:[%s3605 + $0x1e8] sm:$0xff]
    %v3668 = vld [vmem:[%s3605 + $0x1f0] sm:$0xff]
    %v3669 = vld [vmem:[%s3605 + $0x1f8] sm:$0xff]
    %v3670 = vld [vmem:[%s3605 + $0x200] sm:$0xff]
    %v3671 = vld [vmem:[%s3605 + $0x208] sm:$0xff]
    %v3672 = vld [vmem:[%s3605 + $0x210] sm:$0xff]
    %v3673 = vld [vmem:[%s3605 + $0x218] sm:$0xff]
    %v3674 = vld [vmem:[%s3605 + $0x220] sm:$0xff]
    %v3675 = vld [vmem:[%s3605 + $0x228] sm:$0xff]
    %v3676 = vld [vmem:[%s3605 + $0x230] sm:$0xff]
    %v3677 = vld [vmem:[%s3605 + $0x238] sm:$0xff]
    %v3679 = vsel %vm593, %v3597, 0
    %v3682 = vsel %vm593, %v3602, 0
    %3684 = vmatprep.subr.mxu0 %v3637
    %3685 = vmatpush1.msra.mxu0 %v3636
    %3686 = vmatprep.subr.mxu0 %v3635
    %3687 = vmatpush1.msra.mxu0 %v3634
    %3688 = vmatprep.subr.mxu0 %v3633
    %3689 = vmatpush1.msra.mxu0 %v3632
    %3690 = vmatprep.subr.mxu0 %v3631
    %3691 = vmatpush1.msra.mxu0 %v3630
    %3692 = vmatprep.subr.mxu0 %v3629
    %3693 = vmatpush1.msra.mxu0 %v3628
    %3694 = vmatprep.subr.mxu0 %v3627
    %3695 = vmatpush1.msra.mxu0 %v3626
    %3696 = vmatprep.subr.mxu0 %v3625
    %3697 = vmatpush1.msra.mxu0 %v3624
    %3698 = vmatprep.subr.mxu0 %v3623
    %3699 = vmatpush1.msra.mxu0 %v3622
    %3700 = vmatprep.subr.mxu0 %v3621
    %3701 = vmatpush1.msra.mxu0 %v3620
    %3702 = vmatprep.subr.mxu0 %v3619
    %3703 = vmatpush1.msra.mxu0 %v3618
    %3704 = vmatprep.subr.mxu0 %v3617
    %3705 = vmatpush1.msra.mxu0 %v3616
    %3706 = vmatprep.subr.mxu0 %v3615
    %3707 = vmatpush1.msra.mxu0 %v3614
    %3708 = vmatprep.subr.mxu0 %v3613
    %3709 = vmatpush1.msra.mxu0 %v3612
    %3710 = vmatprep.subr.mxu0 %v3611
    %3711 = vmatpush1.msra.mxu0 %v3610
    %3712 = vmatprep.subr.mxu0 %v3609
    %3713 = vmatpush1.msra.mxu0 %v3608
    %3714 = vmatprep.subr.mxu0 %v3607
    %3715 = vmatpush1.msra.mxu0 %v3606
    %3716 = vmatprep.subr.mxu0 %v3669
    %3717 = vmatpush2.msra.mxu0 %v3668
    %3718 = vmatprep.subr.mxu0 %v3667
    %3719 = vmatpush2.msra.mxu0 %v3666
    %3720 = vmatprep.subr.mxu0 %v3665
    %3721 = vmatpush2.msra.mxu0 %v3664
    %3722 = vmatprep.subr.mxu0 %v3663
    %3723 = vmatpush2.msra.mxu0 %v3662
    %3724 = vmatprep.subr.mxu0 %v3661
    %3725 = vmatpush2.msra.mxu0 %v3660
    %3726 = vmatprep.subr.mxu0 %v3659
    %3727 = vmatpush2.msra.mxu0 %v3658
    %3728 = vmatprep.subr.mxu0 %v3657
    %3729 = vmatpush2.msra.mxu0 %v3656
    %3730 = vmatprep.subr.mxu0 %v3655
    %3731 = vmatpush2.msra.mxu0 %v3654
    %3732 = vmatprep.subr.mxu0 %v3653
    %3733 = vmatpush2.msra.mxu0 %v3652
    %3734 = vmatprep.subr.mxu0 %v3651
    %3735 = vmatpush2.msra.mxu0 %v3650
    %3736 = vmatprep.subr.mxu0 %v3649
    %3737 = vmatpush2.msra.mxu0 %v3648
    %3738 = vmatprep.subr.mxu0 %v3647
    %3739 = vmatpush2.msra.mxu0 %v3646
    %3740 = vmatprep.subr.mxu0 %v3645
    %3741 = vmatpush2.msra.mxu0 %v3644
    %3742 = vmatprep.subr.mxu0 %v3643
    %3743 = vmatpush2.msra.mxu0 %v3642
    %3744 = vmatprep.subr.mxu0 %v3641
    %3745 = vmatpush2.msra.mxu0 %v3640
    %3746 = vmatprep.subr.mxu0 %v3639
    %3747 = vmatpush2.msra.mxu0 %v3638
    %3748 = vmatprep.mubr.f32.mxu0 %v3522
    %3749 = vmatmul.mubr.f32.gmra.mxu0 %v3520
    %v3750 = vpop.f32.mrf.mxu0
    %v3751 = vadd.f32 0.0, %v3750
    %v3752 = vpop.f32.mrf.mxu0
    %v3753 = vadd.f32 0.0, %v3752
    %3754 = vmatprep.mubr.f32.mxu0 %v3528
    %3755 = vmatmul.mubr.f32.gmra.mxu0 %v3526
    %v3756 = vpop.f32.mrf.mxu0
    %v3757 = vadd.f32 0.0, %v3756
    %v3758 = vpop.f32.mrf.mxu0
    %v3759 = vadd.f32 0.0, %v3758
    %3760 = vdwg.mxu0
    %3761 = vmatprep.subr.mxu0 0.0
    %3762 = vmatpush1.msra.mxu0 0.0
    %3763 = vmatprep.subr.mxu0 0.0
    %3764 = vmatpush1.msra.mxu0 0.0
    %3765 = vmatprep.subr.mxu0 0.0
    %3766 = vmatpush1.msra.mxu0 0.0
    %3767 = vmatprep.subr.mxu0 0.0
    %3768 = vmatpush1.msra.mxu0 0.0
    %3769 = vmatprep.subr.mxu0 0.0
    %3770 = vmatpush1.msra.mxu0 0.0
    %3771 = vmatprep.subr.mxu0 0.0
    %3772 = vmatpush1.msra.mxu0 0.0
    %3773 = vmatprep.subr.mxu0 0.0
    %3774 = vmatpush1.msra.mxu0 0.0
    %3775 = vmatprep.subr.mxu0 0.0
    %3776 = vmatpush1.msra.mxu0 0.0
    %3777 = vmatprep.subr.mxu0 0.0
    %3778 = vmatpush1.msra.mxu0 0.0
    %3779 = vmatprep.subr.mxu0 0.0
    %3780 = vmatpush1.msra.mxu0 0.0
    %3781 = vmatprep.subr.mxu0 0.0
    %3782 = vmatpush1.msra.mxu0 0.0
    %3783 = vmatprep.subr.mxu0 0.0
    %3784 = vmatpush1.msra.mxu0 0.0
    %3785 = vmatprep.subr.mxu0 %v3677
    %3786 = vmatpush1.msra.mxu0 %v3676
    %3787 = vmatprep.subr.mxu0 %v3675
    %3788 = vmatpush1.msra.mxu0 %v3674
    %3789 = vmatprep.subr.mxu0 %v3673
    %3790 = vmatpush1.msra.mxu0 %v3672
    %3791 = vmatprep.subr.mxu0 %v3671
    %3792 = vmatpush1.msra.mxu0 %v3670
    %3793 = vmatprep.subr.mxu0 0.0
    %3794 = vmatpush2.msra.mxu0 0.0
    %3795 = vmatprep.subr.mxu0 0.0
    %3796 = vmatpush2.msra.mxu0 0.0
    %3797 = vmatprep.subr.mxu0 0.0
    %3798 = vmatpush2.msra.mxu0 0.0
    %3799 = vmatprep.subr.mxu0 0.0
    %3800 = vmatpush2.msra.mxu0 0.0
    %3801 = vmatprep.subr.mxu0 0.0
    %3802 = vmatpush2.msra.mxu0 0.0
    %3803 = vmatprep.subr.mxu0 0.0
    %3804 = vmatpush2.msra.mxu0 0.0
    %3805 = vmatprep.subr.mxu0 0.0
    %3806 = vmatpush2.msra.mxu0 0.0
    %3807 = vmatprep.subr.mxu0 0.0
    %3808 = vmatpush2.msra.mxu0 0.0
    %3809 = vmatprep.subr.mxu0 0.0
    %3810 = vmatpush2.msra.mxu0 0.0
    %3811 = vmatprep.subr.mxu0 0.0
    %3812 = vmatpush2.msra.mxu0 0.0
    %3813 = vmatprep.subr.mxu0 0.0
    %3814 = vmatpush2.msra.mxu0 0.0
    %3815 = vmatprep.subr.mxu0 0.0
    %3816 = vmatpush2.msra.mxu0 0.0
    %3817 = vmatprep.subr.mxu0 0.0
    %3818 = vmatpush2.msra.mxu0 0.0
    %3819 = vmatprep.subr.mxu0 0.0
    %3820 = vmatpush2.msra.mxu0 0.0
    %3821 = vmatprep.subr.mxu0 0.0
    %3822 = vmatpush2.msra.mxu0 0.0
    %3823 = vmatprep.subr.mxu0 0.0
    %3824 = vmatpush2.msra.mxu0 0.0
    %3825 = vmatprep.mubr.f32.mxu0 0.0
    %3826 = vmatmul.mubr.f32.gmra.mxu0 %v3679
    %v3827 = vpop.f32.mrf.mxu0
    %v3828 = vadd.f32 %v3751, %v3827
    %v3829 = vpop.f32.mrf.mxu0
    %v3830 = vadd.f32 %v3753, %v3829
    %3831 = vmatprep.mubr.f32.mxu0 0.0
    %3832 = vmatmul.mubr.f32.gmra.mxu0 %v3682
    %v3833 = vpop.f32.mrf.mxu0
    %v3834 = vadd.f32 %v3757, %v3833
    %v3835 = vpop.f32.mrf.mxu0
    %v3836 = vadd.f32 %v3759, %v3835
    %3837 = vdwg.mxu0
    %v3838 = vadd.f32 %v3440, %v3828
    %v3839 = vadd.f32 %v3441, %v3830
    %v3840 = vadd.f32 %v3442, %v3834
    %v3841 = vadd.f32 %v3443, %v3836
    %s3842 = scalar_lea.vmem [#allocation11], 64
    %v3843 = vld [vmem:[%s3842] sm:$0xff]
    %v3844 = vld [vmem:[%s3842 + $0x8] sm:$0x3f]
    %v3846 = vsel %vm2251, %v3843, 0
    %v3849 = vsel %vm2251, %v3844, 0
    %3851 = vmatprep.subr.mxu0 0.0
    %3852 = vmatpush1.msra.mxu0 0.0
    %3853 = vmatprep.subr.mxu0 0.0
    %3854 = vmatpush1.msra.mxu0 0.0
    %3855 = vmatprep.subr.mxu0 0.0
    %3856 = vmatpush1.msra.mxu0 0.0
    %3857 = vmatprep.subr.mxu0 0.0
    %3858 = vmatpush1.msra.mxu0 0.0
    %3859 = vmatprep.subr.mxu0 0.0
    %3860 = vmatpush1.msra.mxu0 0.0
    %3861 = vmatprep.subr.mxu0 0.0
    %3862 = vmatpush1.msra.mxu0 0.0
    %3863 = vmatprep.subr.mxu0 0.0
    %3864 = vmatpush1.msra.mxu0 0.0
    %3865 = vmatprep.subr.mxu0 0.0
    %3866 = vmatpush1.msra.mxu0 0.0
    %3867 = vmatprep.subr.mxu0 0.0
    %3868 = vmatpush1.msra.mxu0 0.0
    %3869 = vmatprep.subr.mxu0 0.0
    %3870 = vmatpush1.msra.mxu0 0.0
    %3871 = vmatprep.subr.mxu0 0.0
    %3872 = vmatpush1.msra.mxu0 0.0
    %3873 = vmatprep.subr.mxu0 %v2263
    %3874 = vmatpush1.msra.mxu0 %v2260
    %3875 = vmatprep.subr.mxu0 %v2244
    %3876 = vmatpush1.msra.mxu0 %v2243
    %3877 = vmatprep.subr.mxu0 %v2241
    %3878 = vmatpush1.msra.mxu0 %v2240
    %3879 = vmatprep.subr.mxu0 %v2238
    %3880 = vmatpush1.msra.mxu0 %v2237
    %3881 = vmatprep.subr.mxu0 %v2235
    %3882 = vmatpush1.msra.mxu0 %v2234
    %3883 = vmatprep.subr.mxu0 0.0
    %3884 = vmatpush2.msra.mxu0 0.0
    %3885 = vmatprep.subr.mxu0 0.0
    %3886 = vmatpush2.msra.mxu0 0.0
    %3887 = vmatprep.subr.mxu0 0.0
    %3888 = vmatpush2.msra.mxu0 0.0
    %3889 = vmatprep.subr.mxu0 0.0
    %3890 = vmatpush2.msra.mxu0 0.0
    %3891 = vmatprep.subr.mxu0 0.0
    %3892 = vmatpush2.msra.mxu0 0.0
    %3893 = vmatprep.subr.mxu0 0.0
    %3894 = vmatpush2.msra.mxu0 0.0
    %3895 = vmatprep.subr.mxu0 0.0
    %3896 = vmatpush2.msra.mxu0 0.0
    %3897 = vmatprep.subr.mxu0 0.0
    %3898 = vmatpush2.msra.mxu0 0.0
    %3899 = vmatprep.subr.mxu0 0.0
    %3900 = vmatpush2.msra.mxu0 0.0
    %3901 = vmatprep.subr.mxu0 0.0
    %3902 = vmatpush2.msra.mxu0 0.0
    %3903 = vmatprep.subr.mxu0 0.0
    %3904 = vmatpush2.msra.mxu0 0.0
    %3905 = vmatprep.subr.mxu0 0.0
    %3906 = vmatpush2.msra.mxu0 0.0
    %3907 = vmatprep.subr.mxu0 0.0
    %3908 = vmatpush2.msra.mxu0 0.0
    %3909 = vmatprep.subr.mxu0 0.0
    %3910 = vmatpush2.msra.mxu0 0.0
    %3911 = vmatprep.subr.mxu0 0.0
    %3912 = vmatpush2.msra.mxu0 0.0
    %3913 = vmatprep.subr.mxu0 0.0
    %3914 = vmatpush2.msra.mxu0 0.0
    %3915 = vmatprep.mubr.f32.mxu0 0.0
    %3916 = vmatmul.mubr.f32.gmra.mxu0 %v3846
    %v3917 = vpop.f32.mrf.mxu0
    %v3918 = vadd.f32 0.0, %v3917
    %v3919 = vpop.f32.mrf.mxu0
    %v3920 = vadd.f32 0.0, %v3919
    %3921 = vmatprep.mubr.f32.mxu0 0.0
    %3922 = vmatmul.mubr.f32.gmra.mxu0 %v3849
    %v3923 = vpop.f32.mrf.mxu0
    %v3924 = vadd.f32 0.0, %v3923
    %v3925 = vpop.f32.mrf.mxu0
    %v3926 = vadd.f32 0.0, %v3925
    %3927 = vdwg.mxu0
    %3928 = vmatprep.subr.mxu0 0.0
    %3929 = vmatpush1.msra.mxu0 0.0
    %3930 = vmatprep.subr.mxu0 0.0
    %3931 = vmatpush1.msra.mxu0 0.0
    %3932 = vmatprep.subr.mxu0 0.0
    %3933 = vmatpush1.msra.mxu0 0.0
    %3934 = vmatprep.subr.mxu0 0.0
    %3935 = vmatpush1.msra.mxu0 0.0
    %3936 = vmatprep.subr.mxu0 0.0
    %3937 = vmatpush1.msra.mxu0 0.0
    %3938 = vmatprep.subr.mxu0 0.0
    %3939 = vmatpush1.msra.mxu0 0.0
    %3940 = vmatprep.subr.mxu0 0.0
    %3941 = vmatpush1.msra.mxu0 0.0
    %3942 = vmatprep.subr.mxu0 0.0
    %3943 = vmatpush1.msra.mxu0 0.0
    %3944 = vmatprep.subr.mxu0 0.0
    %3945 = vmatpush1.msra.mxu0 0.0
    %3946 = vmatprep.subr.mxu0 0.0
    %3947 = vmatpush1.msra.mxu0 0.0
    %3948 = vmatprep.subr.mxu0 0.0
    %3949 = vmatpush1.msra.mxu0 0.0
    %3950 = vmatprep.subr.mxu0 0.0
    %3951 = vmatpush1.msra.mxu0 %v2266
    %3952 = vmatprep.subr.mxu0 0.0
    %3953 = vmatpush1.msra.mxu0 %v2245
    %3954 = vmatprep.subr.mxu0 0.0
    %3955 = vmatpush1.msra.mxu0 %v2242
    %3956 = vmatprep.subr.mxu0 0.0
    %3957 = vmatpush1.msra.mxu0 %v2239
    %3958 = vmatprep.subr.mxu0 0.0
    %3959 = vmatpush1.msra.mxu0 %v2236
    %3960 = vmatprep.subr.mxu0 0.0
    %3961 = vmatpush2.msra.mxu0 0.0
    %3962 = vmatprep.subr.mxu0 0.0
    %3963 = vmatpush2.msra.mxu0 0.0
    %3964 = vmatprep.subr.mxu0 0.0
    %3965 = vmatpush2.msra.mxu0 0.0
    %3966 = vmatprep.subr.mxu0 0.0
    %3967 = vmatpush2.msra.mxu0 0.0
    %3968 = vmatprep.subr.mxu0 0.0
    %3969 = vmatpush2.msra.mxu0 0.0
    %3970 = vmatprep.subr.mxu0 0.0
    %3971 = vmatpush2.msra.mxu0 0.0
    %3972 = vmatprep.subr.mxu0 0.0
    %3973 = vmatpush2.msra.mxu0 0.0
    %3974 = vmatprep.subr.mxu0 0.0
    %3975 = vmatpush2.msra.mxu0 0.0
    %3976 = vmatprep.subr.mxu0 0.0
    %3977 = vmatpush2.msra.mxu0 0.0
    %3978 = vmatprep.subr.mxu0 0.0
    %3979 = vmatpush2.msra.mxu0 0.0
    %3980 = vmatprep.subr.mxu0 0.0
    %3981 = vmatpush2.msra.mxu0 0.0
    %3982 = vmatprep.subr.mxu0 0.0
    %3983 = vmatpush2.msra.mxu0 0.0
    %3984 = vmatprep.subr.mxu0 0.0
    %3985 = vmatpush2.msra.mxu0 0.0
    %3986 = vmatprep.subr.mxu0 0.0
    %3987 = vmatpush2.msra.mxu0 0.0
    %3988 = vmatprep.subr.mxu0 0.0
    %3989 = vmatpush2.msra.mxu0 0.0
    %3990 = vmatprep.subr.mxu0 0.0
    %3991 = vmatpush2.msra.mxu0 0.0
    %3992 = vmatprep.mubr.f32.mxu0 0.0
    %3993 = vmatmul.mubr.f32.gmra.mxu0 %v3846
    %v3994 = vpop.f32.mrf.mxu0
    %v3995 = vadd.f32 0.0, %v3994
    %v3996 = vpop.f32.mrf.mxu0
    %3997 = vmatprep.mubr.f32.mxu0 0.0
    %3998 = vmatmul.mubr.f32.gmra.mxu0 %v3849
    %v3999 = vpop.f32.mrf.mxu0
    %v4000 = vadd.f32 0.0, %v3999
    %v4001 = vpop.f32.mrf.mxu0
    %4002 = vdwg.mxu0
    %s4003 = scalar_lea.vmem [#allocation13], 2304
    %v4004 = vld [vmem:[%s4003] sm:$0xff]
    %v4005 = vld [vmem:[%s4003 + $0x8] sm:$0xff]
    %v4006 = vld [vmem:[%s4003 + $0x10] sm:$0xff]
    %v4007 = vld [vmem:[%s4003 + $0x18] sm:$0xff]
    %v4008 = vld [vmem:[%s4003 + $0x20] sm:$0xff]
    %v4009 = vld [vmem:[%s4003 + $0x28] sm:$0xff]
    %v4010 = vld [vmem:[%s4003 + $0x30] sm:$0xff]
    %v4011 = vld [vmem:[%s4003 + $0x38] sm:$0xff]
    %v4012 = vld [vmem:[%s4003 + $0x40] sm:$0xff]
    %v4013 = vld [vmem:[%s4003 + $0x48] sm:$0xff]
    %v4014 = vld [vmem:[%s4003 + $0x50] sm:$0xff]
    %v4015 = vld [vmem:[%s4003 + $0x58] sm:$0xff]
    %v4016 = vld [vmem:[%s4003 + $0x60] sm:$0xff]
    %v4017 = vld [vmem:[%s4003 + $0x68] sm:$0xff]
    %v4018 = vld [vmem:[%s4003 + $0x70] sm:$0xff]
    %v4019 = vld [vmem:[%s4003 + $0x78] sm:$0xff]
    %v4020 = vld [vmem:[%s4003 + $0x80] sm:$0xff]
    %v4021 = vld [vmem:[%s4003 + $0x88] sm:$0xff]
    %v4022 = vld [vmem:[%s4003 + $0x90] sm:$0xff]
    %v4023 = vld [vmem:[%s4003 + $0x98] sm:$0xff]
    %v4024 = vld [vmem:[%s4003 + $0xa0] sm:$0xff]
    %v4025 = vld [vmem:[%s4003 + $0xa8] sm:$0xff]
    %v4026 = vld [vmem:[%s4003 + $0xb0] sm:$0xff]
    %v4027 = vld [vmem:[%s4003 + $0xb8] sm:$0xff]
    %v4028 = vld [vmem:[%s4003 + $0xc0] sm:$0xff]
    %v4029 = vld [vmem:[%s4003 + $0xc8] sm:$0xff]
    %v4030 = vld [vmem:[%s4003 + $0xd0] sm:$0xff]
    %v4031 = vld [vmem:[%s4003 + $0xd8] sm:$0xff]
    %v4032 = vld [vmem:[%s4003 + $0xe0] sm:$0xff]
    %v4033 = vld [vmem:[%s4003 + $0xe8] sm:$0xff]
    %v4034 = vld [vmem:[%s4003 + $0xf0] sm:$0xff]
    %v4035 = vld [vmem:[%s4003 + $0xf8] sm:$0xff]
    %v4036 = vld [vmem:[%s4003 + $0x100] sm:$0xff]
    %v4037 = vld [vmem:[%s4003 + $0x108] sm:$0xff]
    %v4038 = vld [vmem:[%s4003 + $0x110] sm:$0xff]
    %v4039 = vld [vmem:[%s4003 + $0x118] sm:$0xff]
    %v4040 = vld [vmem:[%s4003 + $0x120] sm:$0xff]
    %v4041 = vld [vmem:[%s4003 + $0x128] sm:$0xff]
    %v4042 = vld [vmem:[%s4003 + $0x130] sm:$0xff]
    %v4043 = vld [vmem:[%s4003 + $0x138] sm:$0xff]
    %v4044 = vld [vmem:[%s4003 + $0x140] sm:$0xff]
    %v4045 = vld [vmem:[%s4003 + $0x148] sm:$0xff]
    %v4046 = vld [vmem:[%s4003 + $0x150] sm:$0xff]
    %v4047 = vld [vmem:[%s4003 + $0x158] sm:$0xff]
    %v4048 = vld [vmem:[%s4003 + $0x160] sm:$0xff]
    %v4049 = vld [vmem:[%s4003 + $0x168] sm:$0xff]
    %v4050 = vld [vmem:[%s4003 + $0x170] sm:$0xff]
    %v4051 = vld [vmem:[%s4003 + $0x178] sm:$0xff]
    %v4052 = vld [vmem:[%s4003 + $0x180] sm:$0xff]
    %v4053 = vld [vmem:[%s4003 + $0x188] sm:$0xff]
    %v4054 = vld [vmem:[%s4003 + $0x190] sm:$0xff]
    %v4055 = vld [vmem:[%s4003 + $0x198] sm:$0xff]
    %v4056 = vld [vmem:[%s4003 + $0x1a0] sm:$0xff]
    %v4057 = vld [vmem:[%s4003 + $0x1a8] sm:$0xff]
    %v4058 = vld [vmem:[%s4003 + $0x1b0] sm:$0xff]
    %v4059 = vld [vmem:[%s4003 + $0x1b8] sm:$0xff]
    %v4060 = vld [vmem:[%s4003 + $0x1c0] sm:$0xff]
    %v4061 = vld [vmem:[%s4003 + $0x1c8] sm:$0xff]
    %v4062 = vld [vmem:[%s4003 + $0x1d0] sm:$0xff]
    %v4063 = vld [vmem:[%s4003 + $0x1d8] sm:$0xff]
    %v4064 = vld [vmem:[%s4003 + $0x1e0] sm:$0xff]
    %v4065 = vld [vmem:[%s4003 + $0x1e8] sm:$0xff]
    %v4066 = vld [vmem:[%s4003 + $0x1f0] sm:$0xff]
    %v4067 = vld [vmem:[%s4003 + $0x1f8] sm:$0xff]
    %v4068 = vld [vmem:[%s4003 + $0x200] sm:$0xff]
    %v4069 = vld [vmem:[%s4003 + $0x208] sm:$0xff]
    %v4070 = vld [vmem:[%s4003 + $0x210] sm:$0xff]
    %v4071 = vld [vmem:[%s4003 + $0x218] sm:$0xff]
    %v4072 = vld [vmem:[%s4003 + $0x220] sm:$0xff]
    %v4073 = vld [vmem:[%s4003 + $0x228] sm:$0xff]
    %v4074 = vld [vmem:[%s4003 + $0x230] sm:$0xff]
    %v4075 = vld [vmem:[%s4003 + $0x238] sm:$0xff]
    %v4077 = vsel %vm593, %v3995, 0
    %v4080 = vsel %vm593, %v4000, 0
    %4082 = vmatprep.subr.mxu0 %v4035
    %4083 = vmatpush1.msra.mxu0 %v4034
    %4084 = vmatprep.subr.mxu0 %v4033
    %4085 = vmatpush1.msra.mxu0 %v4032
    %4086 = vmatprep.subr.mxu0 %v4031
    %4087 = vmatpush1.msra.mxu0 %v4030
    %4088 = vmatprep.subr.mxu0 %v4029
    %4089 = vmatpush1.msra.mxu0 %v4028
    %4090 = vmatprep.subr.mxu0 %v4027
    %4091 = vmatpush1.msra.mxu0 %v4026
    %4092 = vmatprep.subr.mxu0 %v4025
    %4093 = vmatpush1.msra.mxu0 %v4024
    %4094 = vmatprep.subr.mxu0 %v4023
    %4095 = vmatpush1.msra.mxu0 %v4022
    %4096 = vmatprep.subr.mxu0 %v4021
    %4097 = vmatpush1.msra.mxu0 %v4020
    %4098 = vmatprep.subr.mxu0 %v4019
    %4099 = vmatpush1.msra.mxu0 %v4018
    %4100 = vmatprep.subr.mxu0 %v4017
    %4101 = vmatpush1.msra.mxu0 %v4016
    %4102 = vmatprep.subr.mxu0 %v4015
    %4103 = vmatpush1.msra.mxu0 %v4014
    %4104 = vmatprep.subr.mxu0 %v4013
    %4105 = vmatpush1.msra.mxu0 %v4012
    %4106 = vmatprep.subr.mxu0 %v4011
    %4107 = vmatpush1.msra.mxu0 %v4010
    %4108 = vmatprep.subr.mxu0 %v4009
    %4109 = vmatpush1.msra.mxu0 %v4008
    %4110 = vmatprep.subr.mxu0 %v4007
    %4111 = vmatpush1.msra.mxu0 %v4006
    %4112 = vmatprep.subr.mxu0 %v4005
    %4113 = vmatpush1.msra.mxu0 %v4004
    %4114 = vmatprep.subr.mxu0 %v4067
    %4115 = vmatpush2.msra.mxu0 %v4066
    %4116 = vmatprep.subr.mxu0 %v4065
    %4117 = vmatpush2.msra.mxu0 %v4064
    %4118 = vmatprep.subr.mxu0 %v4063
    %4119 = vmatpush2.msra.mxu0 %v4062
    %4120 = vmatprep.subr.mxu0 %v4061
    %4121 = vmatpush2.msra.mxu0 %v4060
    %4122 = vmatprep.subr.mxu0 %v4059
    %4123 = vmatpush2.msra.mxu0 %v4058
    %4124 = vmatprep.subr.mxu0 %v4057
    %4125 = vmatpush2.msra.mxu0 %v4056
    %4126 = vmatprep.subr.mxu0 %v4055
    %4127 = vmatpush2.msra.mxu0 %v4054
    %4128 = vmatprep.subr.mxu0 %v4053
    %4129 = vmatpush2.msra.mxu0 %v4052
    %4130 = vmatprep.subr.mxu0 %v4051
    %4131 = vmatpush2.msra.mxu0 %v4050
    %4132 = vmatprep.subr.mxu0 %v4049
    %4133 = vmatpush2.msra.mxu0 %v4048
    %4134 = vmatprep.subr.mxu0 %v4047
    %4135 = vmatpush2.msra.mxu0 %v4046
    %4136 = vmatprep.subr.mxu0 %v4045
    %4137 = vmatpush2.msra.mxu0 %v4044
    %4138 = vmatprep.subr.mxu0 %v4043
    %4139 = vmatpush2.msra.mxu0 %v4042
    %4140 = vmatprep.subr.mxu0 %v4041
    %4141 = vmatpush2.msra.mxu0 %v4040
    %4142 = vmatprep.subr.mxu0 %v4039
    %4143 = vmatpush2.msra.mxu0 %v4038
    %4144 = vmatprep.subr.mxu0 %v4037
    %4145 = vmatpush2.msra.mxu0 %v4036
    %4146 = vmatprep.mubr.f32.mxu0 %v3920
    %4147 = vmatmul.mubr.f32.gmra.mxu0 %v3918
    %v4148 = vpop.f32.mrf.mxu0
    %v4149 = vadd.f32 0.0, %v4148
    %v4150 = vpop.f32.mrf.mxu0
    %v4151 = vadd.f32 0.0, %v4150
    %4152 = vmatprep.mubr.f32.mxu0 %v3926
    %4153 = vmatmul.mubr.f32.gmra.mxu0 %v3924
    %v4154 = vpop.f32.mrf.mxu0
    %v4155 = vadd.f32 0.0, %v4154
    %v4156 = vpop.f32.mrf.mxu0
    %v4157 = vadd.f32 0.0, %v4156
    %4158 = vdwg.mxu0
    %4159 = vmatprep.subr.mxu0 0.0
    %4160 = vmatpush1.msra.mxu0 0.0
    %4161 = vmatprep.subr.mxu0 0.0
    %4162 = vmatpush1.msra.mxu0 0.0
    %4163 = vmatprep.subr.mxu0 0.0
    %4164 = vmatpush1.msra.mxu0 0.0
    %4165 = vmatprep.subr.mxu0 0.0
    %4166 = vmatpush1.msra.mxu0 0.0
    %4167 = vmatprep.subr.mxu0 0.0
    %4168 = vmatpush1.msra.mxu0 0.0
    %4169 = vmatprep.subr.mxu0 0.0
    %4170 = vmatpush1.msra.mxu0 0.0
    %4171 = vmatprep.subr.mxu0 0.0
    %4172 = vmatpush1.msra.mxu0 0.0
    %4173 = vmatprep.subr.mxu0 0.0
    %4174 = vmatpush1.msra.mxu0 0.0
    %4175 = vmatprep.subr.mxu0 0.0
    %4176 = vmatpush1.msra.mxu0 0.0
    %4177 = vmatprep.subr.mxu0 0.0
    %4178 = vmatpush1.msra.mxu0 0.0
    %4179 = vmatprep.subr.mxu0 0.0
    %4180 = vmatpush1.msra.mxu0 0.0
    %4181 = vmatprep.subr.mxu0 0.0
    %4182 = vmatpush1.msra.mxu0 0.0
    %4183 = vmatprep.subr.mxu0 %v4075
    %4184 = vmatpush1.msra.mxu0 %v4074
    %4185 = vmatprep.subr.mxu0 %v4073
    %4186 = vmatpush1.msra.mxu0 %v4072
    %4187 = vmatprep.subr.mxu0 %v4071
    %4188 = vmatpush1.msra.mxu0 %v4070
    %4189 = vmatprep.subr.mxu0 %v4069
    %4190 = vmatpush1.msra.mxu0 %v4068
    %4191 = vmatprep.subr.mxu0 0.0
    %4192 = vmatpush2.msra.mxu0 0.0
    %4193 = vmatprep.subr.mxu0 0.0
    %4194 = vmatpush2.msra.mxu0 0.0
    %4195 = vmatprep.subr.mxu0 0.0
    %4196 = vmatpush2.msra.mxu0 0.0
    %4197 = vmatprep.subr.mxu0 0.0
    %4198 = vmatpush2.msra.mxu0 0.0
    %4199 = vmatprep.subr.mxu0 0.0
    %4200 = vmatpush2.msra.mxu0 0.0
    %4201 = vmatprep.subr.mxu0 0.0
    %4202 = vmatpush2.msra.mxu0 0.0
    %4203 = vmatprep.subr.mxu0 0.0
    %4204 = vmatpush2.msra.mxu0 0.0
    %4205 = vmatprep.subr.mxu0 0.0
    %4206 = vmatpush2.msra.mxu0 0.0
    %4207 = vmatprep.subr.mxu0 0.0
    %4208 = vmatpush2.msra.mxu0 0.0
    %4209 = vmatprep.subr.mxu0 0.0
    %4210 = vmatpush2.msra.mxu0 0.0
    %4211 = vmatprep.subr.mxu0 0.0
    %4212 = vmatpush2.msra.mxu0 0.0
    %4213 = vmatprep.subr.mxu0 0.0
    %4214 = vmatpush2.msra.mxu0 0.0
    %4215 = vmatprep.subr.mxu0 0.0
    %4216 = vmatpush2.msra.mxu0 0.0
    %4217 = vmatprep.subr.mxu0 0.0
    %4218 = vmatpush2.msra.mxu0 0.0
    %4219 = vmatprep.subr.mxu0 0.0
    %4220 = vmatpush2.msra.mxu0 0.0
    %4221 = vmatprep.subr.mxu0 0.0
    %4222 = vmatpush2.msra.mxu0 0.0
    %4223 = vmatprep.mubr.f32.mxu0 0.0
    %4224 = vmatmul.mubr.f32.gmra.mxu0 %v4077
    %v4225 = vpop.f32.mrf.mxu0
    %v4226 = vadd.f32 %v4149, %v4225
    %v4227 = vpop.f32.mrf.mxu0
    %v4228 = vadd.f32 %v4151, %v4227
    %4229 = vmatprep.mubr.f32.mxu0 0.0
    %4230 = vmatmul.mubr.f32.gmra.mxu0 %v4080
    %v4231 = vpop.f32.mrf.mxu0
    %v4232 = vadd.f32 %v4155, %v4231
    %v4233 = vpop.f32.mrf.mxu0
    %v4234 = vadd.f32 %v4157, %v4233
    %4235 = vdwg.mxu0
    %v4236 = vadd.f32 %v3838, %v4226
    %v4237 = vadd.f32 %v3839, %v4228
    %v4238 = vadd.f32 %v3840, %v4232
    %v4239 = vadd.f32 %v3841, %v4234
    %v4240 = vld [vmem:[#allocation14] sm:$0x3]
    %v4242 = vlaneseq
    %v4243 = vshrl.u32 %v4242, 7
    %v4244 = vsub.s32 0, %v4243
    %v4245 = vrot.slane %v4240, %v4244
    %v4246 = vlaneseq
    %v4247 = vshrl.u32 %v4246, 7
    %v4248 = vsub.s32 1, %v4247
    %v4249 = vrot.slane %v4240, %v4248
    %v4252 = vmul.f32 %v4236, %v4245
    %v4253 = vmul.f32 %v4237, %v4249
    %v4254 = vmul.f32 %v4238, %v4245
    %v4255 = vmul.f32 %v4239, %v4249
    %v4256 = vld [vmem:[#allocation16] sm:$0x3]
    %v4258 = vlaneseq
    %v4259 = vshrl.u32 %v4258, 7
    %v4260 = vsub.s32 0, %v4259
    %v4261 = vrot.slane %v4256, %v4260
    %v4262 = vlaneseq
    %v4263 = vshrl.u32 %v4262, 7
    %v4264 = vsub.s32 1, %v4263
    %v4265 = vrot.slane %v4256, %v4264
    %v4268 = vadd.f32 %v4252, %v4261
    %v4269 = vadd.f32 %v4253, %v4265
    %v4270 = vadd.f32 %v4254, %v4261
    %v4271 = vadd.f32 %v4255, %v4265
    %v4272 = vmax.f32 %v4268, 0.0
    %v4273 = vmax.f32 %v4269, 0.0
    %v4274 = vmax.f32 %v4270, 0.0
    %v4275 = vmax.f32 %v4271, 0.0
    %v4276 = vld [vmem:[#allocation17] sm:$0xf]
    %vm4277 = vcmask 113664
    %v4279 = vsel %vm4277, %v4276, 0
    %vm4281 = vcmask 1045504
    %v4283 = vsel %vm4281, %v4274, 0
    %v4286 = vsel %vm4281, %v4275, 0
    %4288 = vmatprep.subr.mxu0 0.0
    %4289 = vmatpush1.msra.mxu0 0.0
    %4290 = vmatprep.subr.mxu0 0.0
    %4291 = vmatpush1.msra.mxu0 0.0
    %4292 = vmatprep.subr.mxu0 0.0
    %4293 = vmatpush1.msra.mxu0 0.0
    %4294 = vmatprep.subr.mxu0 0.0
    %4295 = vmatpush1.msra.mxu0 0.0
    %4296 = vmatprep.subr.mxu0 0.0
    %4297 = vmatpush1.msra.mxu0 0.0
    %4298 = vmatprep.subr.mxu0 0.0
    %4299 = vmatpush1.msra.mxu0 0.0
    %4300 = vmatprep.subr.mxu0 0.0
    %4301 = vmatpush1.msra.mxu0 0.0
    %4302 = vmatprep.subr.mxu0 0.0
    %4303 = vmatpush1.msra.mxu0 0.0
    %4304 = vmatprep.subr.mxu0 0.0
    %4305 = vmatpush1.msra.mxu0 0.0
    %4306 = vmatprep.subr.mxu0 0.0
    %4307 = vmatpush1.msra.mxu0 0.0
    %4308 = vmatprep.subr.mxu0 0.0
    %4309 = vmatpush1.msra.mxu0 0.0
    %4310 = vmatprep.subr.mxu0 0.0
    %4311 = vmatpush1.msra.mxu0 0.0
    %4312 = vmatprep.subr.mxu0 0.0
    %4313 = vmatpush1.msra.mxu0 0.0
    %4314 = vmatprep.subr.mxu0 0.0
    %4315 = vmatpush1.msra.mxu0 0.0
    %4316 = vmatprep.subr.mxu0 %v4286
    %4317 = vmatpush1.msra.mxu0 %v4283
    %4318 = vmatprep.subr.mxu0 %v4273
    %4319 = vmatpush1.msra.mxu0 %v4272
    %4320 = vmatprep.subr.mxu0 0.0
    %4321 = vmatpush2.msra.mxu0 0.0
    %4322 = vmatprep.subr.mxu0 0.0
    %4323 = vmatpush2.msra.mxu0 0.0
    %4324 = vmatprep.subr.mxu0 0.0
    %4325 = vmatpush2.msra.mxu0 0.0
    %4326 = vmatprep.subr.mxu0 0.0
    %4327 = vmatpush2.msra.mxu0 0.0
    %4328 = vmatprep.subr.mxu0 0.0
    %4329 = vmatpush2.msra.mxu0 0.0
    %4330 = vmatprep.subr.mxu0 0.0
    %4331 = vmatpush2.msra.mxu0 0.0
    %4332 = vmatprep.subr.mxu0 0.0
    %4333 = vmatpush2.msra.mxu0 0.0
    %4334 = vmatprep.subr.mxu0 0.0
    %4335 = vmatpush2.msra.mxu0 0.0
    %4336 = vmatprep.subr.mxu0 0.0
    %4337 = vmatpush2.msra.mxu0 0.0
    %4338 = vmatprep.subr.mxu0 0.0
    %4339 = vmatpush2.msra.mxu0 0.0
    %4340 = vmatprep.subr.mxu0 0.0
    %4341 = vmatpush2.msra.mxu0 0.0
    %4342 = vmatprep.subr.mxu0 0.0
    %4343 = vmatpush2.msra.mxu0 0.0
    %4344 = vmatprep.subr.mxu0 0.0
    %4345 = vmatpush2.msra.mxu0 0.0
    %4346 = vmatprep.subr.mxu0 0.0
    %4347 = vmatpush2.msra.mxu0 0.0
    %4348 = vmatprep.subr.mxu0 0.0
    %4349 = vmatpush2.msra.mxu0 0.0
    %4350 = vmatprep.subr.mxu0 0.0
    %4351 = vmatpush2.msra.mxu0 0.0
    %4352 = vmatprep.mubr.f32.mxu0 0.0
    %4353 = vmatmul.mubr.f32.gmra.mxu0 %v4279
    %v4354 = vpop.f32.mrf.mxu0
    %v4355 = vadd.f32 0.0, %v4354
    %v4356 = vpop.f32.mrf.mxu0
    %v4357 = vadd.f32 0.0, %v4356
    %4358 = vdwg.mxu0
    %v4359 = vld [vmem:[%s10] sm:$0xff]
    %v4360 = vld [vmem:[%s10 + $0x8] sm:$0xff]
    %v4361 = vld [vmem:[%s10 + $0x10] sm:$0xff]
    %v4362 = vld [vmem:[%s10 + $0x18] sm:$0xff]
    %v4363 = vld [vmem:[%s10 + $0x20] sm:$0xff]
    %v4364 = vld [vmem:[%s10 + $0x28] sm:$0xff]
    %v4365 = vld [vmem:[%s10 + $0x30] sm:$0xff]
    %v4366 = vld [vmem:[%s10 + $0x38] sm:$0xff]
    %v4367 = vld [vmem:[%s10 + $0x40] sm:$0xff]
    %v4368 = vld [vmem:[%s10 + $0x48] sm:$0xff]
    %v4369 = vld [vmem:[%s10 + $0x50] sm:$0xff]
    %v4370 = vld [vmem:[%s10 + $0x58] sm:$0xff]
    %v4371 = vld [vmem:[%s10 + $0x60] sm:$0xff]
    %v4372 = vld [vmem:[%s10 + $0x68] sm:$0xff]
    %v4373 = vld [vmem:[%s10 + $0x70] sm:$0xff]
    %v4374 = vld [vmem:[%s10 + $0x78] sm:$0xff]
    %v4375 = vld [vmem:[%s10 + $0x80] sm:$0xff]
    %v4376 = vld [vmem:[%s10 + $0x88] sm:$0xff]
    %v4377 = vld [vmem:[%s10 + $0x90] sm:$0xff]
    %v4378 = vld [vmem:[%s10 + $0x98] sm:$0xff]
    %v4379 = vld [vmem:[%s10 + $0xa0] sm:$0xff]
    %v4380 = vld [vmem:[%s10 + $0xa8] sm:$0xff]
    %v4381 = vld [vmem:[%s10 + $0xb0] sm:$0xff]
    %v4382 = vld [vmem:[%s10 + $0xb8] sm:$0xff]
    %v4383 = vld [vmem:[%s10 + $0xc0] sm:$0xff]
    %v4384 = vld [vmem:[%s10 + $0xc8] sm:$0xff]
    %v4385 = vld [vmem:[%s10 + $0xd0] sm:$0xff]
    %v4386 = vld [vmem:[%s10 + $0xd8] sm:$0xff]
    %s4387 = scalar_lea.vmem [#allocation17], 4
    %v4388 = vld [vmem:[%s4387] sm:$0xf]
    %v4390 = vsel %vm4277, %v4388, 0
    %4392 = vmatprep.subr.mxu0 0.0
    %4393 = vmatpush1.msra.mxu0 0.0
    %4394 = vmatprep.subr.mxu0 0.0
    %4395 = vmatpush1.msra.mxu0 0.0
    %4396 = vmatprep.subr.mxu0 0.0
    %4397 = vmatpush1.msra.mxu0 0.0
    %4398 = vmatprep.subr.mxu0 0.0
    %4399 = vmatpush1.msra.mxu0 0.0
    %4400 = vmatprep.subr.mxu0 0.0
    %4401 = vmatpush1.msra.mxu0 0.0
    %4402 = vmatprep.subr.mxu0 0.0
    %4403 = vmatpush1.msra.mxu0 0.0
    %4404 = vmatprep.subr.mxu0 0.0
    %4405 = vmatpush1.msra.mxu0 0.0
    %4406 = vmatprep.subr.mxu0 0.0
    %4407 = vmatpush1.msra.mxu0 0.0
    %4408 = vmatprep.subr.mxu0 0.0
    %4409 = vmatpush1.msra.mxu0 0.0
    %4410 = vmatprep.subr.mxu0 0.0
    %4411 = vmatpush1.msra.mxu0 0.0
    %4412 = vmatprep.subr.mxu0 0.0
    %4413 = vmatpush1.msra.mxu0 0.0
    %4414 = vmatprep.subr.mxu0 0.0
    %4415 = vmatpush1.msra.mxu0 0.0
    %4416 = vmatprep.subr.mxu0 0.0
    %4417 = vmatpush1.msra.mxu0 0.0
    %4418 = vmatprep.subr.mxu0 0.0
    %4419 = vmatpush1.msra.mxu0 0.0
    %4420 = vmatprep.subr.mxu0 %v4286
    %4421 = vmatpush1.msra.mxu0 %v4283
    %4422 = vmatprep.subr.mxu0 %v4273
    %4423 = vmatpush1.msra.mxu0 %v4272
    %4424 = vmatprep.subr.mxu0 0.0
    %4425 = vmatpush2.msra.mxu0 0.0
    %4426 = vmatprep.subr.mxu0 0.0
    %4427 = vmatpush2.msra.mxu0 0.0
    %4428 = vmatprep.subr.mxu0 0.0
    %4429 = vmatpush2.msra.mxu0 0.0
    %4430 = vmatprep.subr.mxu0 0.0
    %4431 = vmatpush2.msra.mxu0 0.0
    %4432 = vmatprep.subr.mxu0 0.0
    %4433 = vmatpush2.msra.mxu0 0.0
    %4434 = vmatprep.subr.mxu0 0.0
    %4435 = vmatpush2.msra.mxu0 0.0
    %4436 = vmatprep.subr.mxu0 0.0
    %4437 = vmatpush2.msra.mxu0 0.0
    %4438 = vmatprep.subr.mxu0 0.0
    %4439 = vmatpush2.msra.mxu0 0.0
    %4440 = vmatprep.subr.mxu0 0.0
    %4441 = vmatpush2.msra.mxu0 0.0
    %4442 = vmatprep.subr.mxu0 0.0
    %4443 = vmatpush2.msra.mxu0 0.0
    %4444 = vmatprep.subr.mxu0 0.0
    %4445 = vmatpush2.msra.mxu0 0.0
    %4446 = vmatprep.subr.mxu0 0.0
    %4447 = vmatpush2.msra.mxu0 0.0
    %4448 = vmatprep.subr.mxu0 0.0
    %4449 = vmatpush2.msra.mxu0 0.0
    %4450 = vmatprep.subr.mxu0 0.0
    %4451 = vmatpush2.msra.mxu0 0.0
    %4452 = vmatprep.subr.mxu0 0.0
    %4453 = vmatpush2.msra.mxu0 0.0
    %4454 = vmatprep.subr.mxu0 0.0
    %4455 = vmatpush2.msra.mxu0 0.0
    %4456 = vmatprep.mubr.f32.mxu0 0.0
    %4457 = vmatmul.mubr.f32.gmra.mxu0 %v4390
    %v4458 = vpop.f32.mrf.mxu0
    %v4459 = vadd.f32 0.0, %v4458
    %v4460 = vpop.f32.mrf.mxu0
    %v4461 = vadd.f32 0.0, %v4460
    %4462 = vdwg.mxu0
    %s4463 = scalar_lea.vmem %s10, 224
    %v4464 = vld [vmem:[%s4463] sm:$0xff]
    %v4465 = vld [vmem:[%s4463 + $0x8] sm:$0xff]
    %v4466 = vld [vmem:[%s4463 + $0x10] sm:$0xff]
    %v4467 = vld [vmem:[%s4463 + $0x18] sm:$0xff]
    %v4468 = vld [vmem:[%s4463 + $0x20] sm:$0xff]
    %v4469 = vld [vmem:[%s4463 + $0x28] sm:$0xff]
    %v4470 = vld [vmem:[%s4463 + $0x30] sm:$0xff]
    %v4471 = vld [vmem:[%s4463 + $0x38] sm:$0xff]
    %v4472 = vld [vmem:[%s4463 + $0x40] sm:$0xff]
    %v4473 = vld [vmem:[%s4463 + $0x48] sm:$0xff]
    %v4474 = vld [vmem:[%s4463 + $0x50] sm:$0xff]
    %v4475 = vld [vmem:[%s4463 + $0x58] sm:$0xff]
    %v4476 = vld [vmem:[%s4463 + $0x60] sm:$0xff]
    %v4477 = vld [vmem:[%s4463 + $0x68] sm:$0xff]
    %v4478 = vld [vmem:[%s4463 + $0x70] sm:$0xff]
    %v4479 = vld [vmem:[%s4463 + $0x78] sm:$0xff]
    %v4480 = vld [vmem:[%s4463 + $0x80] sm:$0xff]
    %v4481 = vld [vmem:[%s4463 + $0x88] sm:$0xff]
    %v4482 = vld [vmem:[%s4463 + $0x90] sm:$0xff]
    %v4483 = vld [vmem:[%s4463 + $0x98] sm:$0xff]
    %v4484 = vld [vmem:[%s4463 + $0xa0] sm:$0xff]
    %v4485 = vld [vmem:[%s4463 + $0xa8] sm:$0xff]
    %v4486 = vld [vmem:[%s4463 + $0xb0] sm:$0xff]
    %v4487 = vld [vmem:[%s4463 + $0xb8] sm:$0xff]
    %v4488 = vld [vmem:[%s4463 + $0xc0] sm:$0xff]
    %v4489 = vld [vmem:[%s4463 + $0xc8] sm:$0xff]
    %v4490 = vld [vmem:[%s4463 + $0xd0] sm:$0xff]
    %v4491 = vld [vmem:[%s4463 + $0xd8] sm:$0xff]
    %vm4492 = vcmask 785408
    %v4494 = vsel %vm4492, %v4461, 0
    %4496 = vmatprep.subr.mxu0 0.0
    %4497 = vmatpush1.msra.mxu0 %v4479
    %4498 = vmatprep.subr.mxu0 0.0
    %4499 = vmatpush1.msra.mxu0 %v4478
    %4500 = vmatprep.subr.mxu0 0.0
    %4501 = vmatpush1.msra.mxu0 %v4477
    %4502 = vmatprep.subr.mxu0 0.0
    %4503 = vmatpush1.msra.mxu0 %v4476
    %4504 = vmatprep.subr.mxu0 0.0
    %4505 = vmatpush1.msra.mxu0 %v4475
    %4506 = vmatprep.subr.mxu0 0.0
    %4507 = vmatpush1.msra.mxu0 %v4474
    %4508 = vmatprep.subr.mxu0 0.0
    %4509 = vmatpush1.msra.mxu0 %v4473
    %4510 = vmatprep.subr.mxu0 0.0
    %4511 = vmatpush1.msra.mxu0 %v4472
    %4512 = vmatprep.subr.mxu0 0.0
    %4513 = vmatpush1.msra.mxu0 %v4471
    %4514 = vmatprep.subr.mxu0 0.0
    %4515 = vmatpush1.msra.mxu0 %v4470
    %4516 = vmatprep.subr.mxu0 0.0
    %4517 = vmatpush1.msra.mxu0 %v4469
    %4518 = vmatprep.subr.mxu0 0.0
    %4519 = vmatpush1.msra.mxu0 %v4468
    %4520 = vmatprep.subr.mxu0 0.0
    %4521 = vmatpush1.msra.mxu0 %v4467
    %4522 = vmatprep.subr.mxu0 0.0
    %4523 = vmatpush1.msra.mxu0 %v4466
    %4524 = vmatprep.subr.mxu0 0.0
    %4525 = vmatpush1.msra.mxu0 %v4465
    %4526 = vmatprep.subr.mxu0 0.0
    %4527 = vmatpush1.msra.mxu0 %v4464
    %4528 = vmatprep.subr.mxu0 0.0
    %4529 = vmatpush2.msra.mxu0 0.0
    %4530 = vmatprep.subr.mxu0 0.0
    %4531 = vmatpush2.msra.mxu0 0.0
    %4532 = vmatprep.subr.mxu0 0.0
    %4533 = vmatpush2.msra.mxu0 0.0
    %4534 = vmatprep.subr.mxu0 0.0
    %4535 = vmatpush2.msra.mxu0 0.0
    %4536 = vmatprep.subr.mxu0 0.0
    %4537 = vmatpush2.msra.mxu0 %v4491
    %4538 = vmatprep.subr.mxu0 0.0
    %4539 = vmatpush2.msra.mxu0 %v4490
    %4540 = vmatprep.subr.mxu0 0.0
    %4541 = vmatpush2.msra.mxu0 %v4489
    %4542 = vmatprep.subr.mxu0 0.0
    %4543 = vmatpush2.msra.mxu0 %v4488
    %4544 = vmatprep.subr.mxu0 0.0
    %4545 = vmatpush2.msra.mxu0 %v4487
    %4546 = vmatprep.subr.mxu0 0.0
    %4547 = vmatpush2.msra.mxu0 %v4486
    %4548 = vmatprep.subr.mxu0 0.0
    %4549 = vmatpush2.msra.mxu0 %v4485
    %4550 = vmatprep.subr.mxu0 0.0
    %4551 = vmatpush2.msra.mxu0 %v4484
    %4552 = vmatprep.subr.mxu0 0.0
    %4553 = vmatpush2.msra.mxu0 %v4483
    %4554 = vmatprep.subr.mxu0 0.0
    %4555 = vmatpush2.msra.mxu0 %v4482
    %4556 = vmatprep.subr.mxu0 0.0
    %4557 = vmatpush2.msra.mxu0 %v4481
    %4558 = vmatprep.subr.mxu0 0.0
    %4559 = vmatpush2.msra.mxu0 %v4480
    %4560 = vmatprep.mubr.f32.mxu0 %v4494
    %4561 = vmatmul.mubr.f32.gmra.mxu0 %v4459
    %v4562 = vpop.f32.mrf.mxu0
    %v4563 = vadd.f32 0.0, %v4562
    %v4564 = vpop.f32.mrf.mxu0
    %4565 = vdwg.mxu0
    %v4567 = vsel %vm4492, %v4357, 0
    %4569 = vmatprep.subr.mxu0 0.0
    %4570 = vmatpush1.msra.mxu0 %v4374
    %4571 = vmatprep.subr.mxu0 0.0
    %4572 = vmatpush1.msra.mxu0 %v4373
    %4573 = vmatprep.subr.mxu0 0.0
    %4574 = vmatpush1.msra.mxu0 %v4372
    %4575 = vmatprep.subr.mxu0 0.0
    %4576 = vmatpush1.msra.mxu0 %v4371
    %4577 = vmatprep.subr.mxu0 0.0
    %4578 = vmatpush1.msra.mxu0 %v4370
    %4579 = vmatprep.subr.mxu0 0.0
    %4580 = vmatpush1.msra.mxu0 %v4369
    %4581 = vmatprep.subr.mxu0 0.0
    %4582 = vmatpush1.msra.mxu0 %v4368
    %4583 = vmatprep.subr.mxu0 0.0
    %4584 = vmatpush1.msra.mxu0 %v4367
    %4585 = vmatprep.subr.mxu0 0.0
    %4586 = vmatpush1.msra.mxu0 %v4366
    %4587 = vmatprep.subr.mxu0 0.0
    %4588 = vmatpush1.msra.mxu0 %v4365
    %4589 = vmatprep.subr.mxu0 0.0
    %4590 = vmatpush1.msra.mxu0 %v4364
    %4591 = vmatprep.subr.mxu0 0.0
    %4592 = vmatpush1.msra.mxu0 %v4363
    %4593 = vmatprep.subr.mxu0 0.0
    %4594 = vmatpush1.msra.mxu0 %v4362
    %4595 = vmatprep.subr.mxu0 0.0
    %4596 = vmatpush1.msra.mxu0 %v4361
    %4597 = vmatprep.subr.mxu0 0.0
    %4598 = vmatpush1.msra.mxu0 %v4360
    %4599 = vmatprep.subr.mxu0 0.0
    %4600 = vmatpush1.msra.mxu0 %v4359
    %4601 = vmatprep.subr.mxu0 0.0
    %4602 = vmatpush2.msra.mxu0 0.0
    %4603 = vmatprep.subr.mxu0 0.0
    %4604 = vmatpush2.msra.mxu0 0.0
    %4605 = vmatprep.subr.mxu0 0.0
    %4606 = vmatpush2.msra.mxu0 0.0
    %4607 = vmatprep.subr.mxu0 0.0
    %4608 = vmatpush2.msra.mxu0 0.0
    %4609 = vmatprep.subr.mxu0 0.0
    %4610 = vmatpush2.msra.mxu0 %v4386
    %4611 = vmatprep.subr.mxu0 0.0
    %4612 = vmatpush2.msra.mxu0 %v4385
    %4613 = vmatprep.subr.mxu0 0.0
    %4614 = vmatpush2.msra.mxu0 %v4384
    %4615 = vmatprep.subr.mxu0 0.0
    %4616 = vmatpush2.msra.mxu0 %v4383
    %4617 = vmatprep.subr.mxu0 0.0
    %4618 = vmatpush2.msra.mxu0 %v4382
    %4619 = vmatprep.subr.mxu0 0.0
    %4620 = vmatpush2.msra.mxu0 %v4381
    %4621 = vmatprep.subr.mxu0 0.0
    %4622 = vmatpush2.msra.mxu0 %v4380
    %4623 = vmatprep.subr.mxu0 0.0
    %4624 = vmatpush2.msra.mxu0 %v4379
    %4625 = vmatprep.subr.mxu0 0.0
    %4626 = vmatpush2.msra.mxu0 %v4378
    %4627 = vmatprep.subr.mxu0 0.0
    %4628 = vmatpush2.msra.mxu0 %v4377
    %4629 = vmatprep.subr.mxu0 0.0
    %4630 = vmatpush2.msra.mxu0 %v4376
    %4631 = vmatprep.subr.mxu0 0.0
    %4632 = vmatpush2.msra.mxu0 %v4375
    %4633 = vmatprep.mubr.f32.mxu0 %v4567
    %4634 = vmatmul.mubr.f32.gmra.mxu0 %v4355
    %v4635 = vpop.f32.mrf.mxu0
    %v4636 = vadd.f32 %v4563, %v4635
    %v4637 = vpop.f32.mrf.mxu0
    %4638 = vdwg.mxu0
    %s4639 = scalar_lea.vmem [#allocation17], 8
    %v4640 = vld [vmem:[%s4639] sm:$0xf]
    %v4642 = vsel %vm4277, %v4640, 0
    %4644 = vmatprep.subr.mxu0 0.0
    %4645 = vmatpush1.msra.mxu0 0.0
    %4646 = vmatprep.subr.mxu0 0.0
    %4647 = vmatpush1.msra.mxu0 0.0
    %4648 = vmatprep.subr.mxu0 0.0
    %4649 = vmatpush1.msra.mxu0 0.0
    %4650 = vmatprep.subr.mxu0 0.0
    %4651 = vmatpush1.msra.mxu0 0.0
    %4652 = vmatprep.subr.mxu0 0.0
    %4653 = vmatpush1.msra.mxu0 0.0
    %4654 = vmatprep.subr.mxu0 0.0
    %4655 = vmatpush1.msra.mxu0 0.0
    %4656 = vmatprep.subr.mxu0 0.0
    %4657 = vmatpush1.msra.mxu0 0.0
    %4658 = vmatprep.subr.mxu0 0.0
    %4659 = vmatpush1.msra.mxu0 0.0
    %4660 = vmatprep.subr.mxu0 0.0
    %4661 = vmatpush1.msra.mxu0 0.0
    %4662 = vmatprep.subr.mxu0 0.0
    %4663 = vmatpush1.msra.mxu0 0.0
    %4664 = vmatprep.subr.mxu0 0.0
    %4665 = vmatpush1.msra.mxu0 0.0
    %4666 = vmatprep.subr.mxu0 0.0
    %4667 = vmatpush1.msra.mxu0 0.0
    %4668 = vmatprep.subr.mxu0 0.0
    %4669 = vmatpush1.msra.mxu0 0.0
    %4670 = vmatprep.subr.mxu0 0.0
    %4671 = vmatpush1.msra.mxu0 0.0
    %4672 = vmatprep.subr.mxu0 %v4286
    %4673 = vmatpush1.msra.mxu0 %v4283
    %4674 = vmatprep.subr.mxu0 %v4273
    %4675 = vmatpush1.msra.mxu0 %v4272
    %4676 = vmatprep.subr.mxu0 0.0
    %4677 = vmatpush2.msra.mxu0 0.0
    %4678 = vmatprep.subr.mxu0 0.0
    %4679 = vmatpush2.msra.mxu0 0.0
    %4680 = vmatprep.subr.mxu0 0.0
    %4681 = vmatpush2.msra.mxu0 0.0
    %4682 = vmatprep.subr.mxu0 0.0
    %4683 = vmatpush2.msra.mxu0 0.0
    %4684 = vmatprep.subr.mxu0 0.0
    %4685 = vmatpush2.msra.mxu0 0.0
    %4686 = vmatprep.subr.mxu0 0.0
    %4687 = vmatpush2.msra.mxu0 0.0
    %4688 = vmatprep.subr.mxu0 0.0
    %4689 = vmatpush2.msra.mxu0 0.0
    %4690 = vmatprep.subr.mxu0 0.0
    %4691 = vmatpush2.msra.mxu0 0.0
    %4692 = vmatprep.subr.mxu0 0.0
    %4693 = vmatpush2.msra.mxu0 0.0
    %4694 = vmatprep.subr.mxu0 0.0
    %4695 = vmatpush2.msra.mxu0 0.0
    %4696 = vmatprep.subr.mxu0 0.0
    %4697 = vmatpush2.msra.mxu0 0.0
    %4698 = vmatprep.subr.mxu0 0.0
    %4699 = vmatpush2.msra.mxu0 0.0
    %4700 = vmatprep.subr.mxu0 0.0
    %4701 = vmatpush2.msra.mxu0 0.0
    %4702 = vmatprep.subr.mxu0 0.0
    %4703 = vmatpush2.msra.mxu0 0.0
    %4704 = vmatprep.subr.mxu0 0.0
    %4705 = vmatpush2.msra.mxu0 0.0
    %4706 = vmatprep.subr.mxu0 0.0
    %4707 = vmatpush2.msra.mxu0 0.0
    %4708 = vmatprep.mubr.f32.mxu0 0.0
    %4709 = vmatmul.mubr.f32.gmra.mxu0 %v4642
    %v4710 = vpop.f32.mrf.mxu0
    %v4711 = vadd.f32 0.0, %v4710
    %v4712 = vpop.f32.mrf.mxu0
    %v4713 = vadd.f32 0.0, %v4712
    %4714 = vdwg.mxu0
    %s4715 = scalar_lea.vmem %s10, 448
    %v4716 = vld [vmem:[%s4715] sm:$0xff]
    %v4717 = vld [vmem:[%s4715 + $0x8] sm:$0xff]
    %v4718 = vld [vmem:[%s4715 + $0x10] sm:$0xff]
    %v4719 = vld [vmem:[%s4715 + $0x18] sm:$0xff]
    %v4720 = vld [vmem:[%s4715 + $0x20] sm:$0xff]
    %v4721 = vld [vmem:[%s4715 + $0x28] sm:$0xff]
    %v4722 = vld [vmem:[%s4715 + $0x30] sm:$0xff]
    %v4723 = vld [vmem:[%s4715 + $0x38] sm:$0xff]
    %v4724 = vld [vmem:[%s4715 + $0x40] sm:$0xff]
    %v4725 = vld [vmem:[%s4715 + $0x48] sm:$0xff]
    %v4726 = vld [vmem:[%s4715 + $0x50] sm:$0xff]
    %v4727 = vld [vmem:[%s4715 + $0x58] sm:$0xff]
    %v4728 = vld [vmem:[%s4715 + $0x60] sm:$0xff]
    %v4729 = vld [vmem:[%s4715 + $0x68] sm:$0xff]
    %v4730 = vld [vmem:[%s4715 + $0x70] sm:$0xff]
    %v4731 = vld [vmem:[%s4715 + $0x78] sm:$0xff]
    %v4732 = vld [vmem:[%s4715 + $0x80] sm:$0xff]
    %v4733 = vld [vmem:[%s4715 + $0x88] sm:$0xff]
    %v4734 = vld [vmem:[%s4715 + $0x90] sm:$0xff]
    %v4735 = vld [vmem:[%s4715 + $0x98] sm:$0xff]
    %v4736 = vld [vmem:[%s4715 + $0xa0] sm:$0xff]
    %v4737 = vld [vmem:[%s4715 + $0xa8] sm:$0xff]
    %v4738 = vld [vmem:[%s4715 + $0xb0] sm:$0xff]
    %v4739 = vld [vmem:[%s4715 + $0xb8] sm:$0xff]
    %v4740 = vld [vmem:[%s4715 + $0xc0] sm:$0xff]
    %v4741 = vld [vmem:[%s4715 + $0xc8] sm:$0xff]
    %v4742 = vld [vmem:[%s4715 + $0xd0] sm:$0xff]
    %v4743 = vld [vmem:[%s4715 + $0xd8] sm:$0xff]
    %v4745 = vsel %vm4492, %v4713, 0
    %4747 = vmatprep.subr.mxu0 0.0
    %4748 = vmatpush1.msra.mxu0 %v4731
    %4749 = vmatprep.subr.mxu0 0.0
    %4750 = vmatpush1.msra.mxu0 %v4730
    %4751 = vmatprep.subr.mxu0 0.0
    %4752 = vmatpush1.msra.mxu0 %v4729
    %4753 = vmatprep.subr.mxu0 0.0
    %4754 = vmatpush1.msra.mxu0 %v4728
    %4755 = vmatprep.subr.mxu0 0.0
    %4756 = vmatpush1.msra.mxu0 %v4727
    %4757 = vmatprep.subr.mxu0 0.0
    %4758 = vmatpush1.msra.mxu0 %v4726
    %4759 = vmatprep.subr.mxu0 0.0
    %4760 = vmatpush1.msra.mxu0 %v4725
    %4761 = vmatprep.subr.mxu0 0.0
    %4762 = vmatpush1.msra.mxu0 %v4724
    %4763 = vmatprep.subr.mxu0 0.0
    %4764 = vmatpush1.msra.mxu0 %v4723
    %4765 = vmatprep.subr.mxu0 0.0
    %4766 = vmatpush1.msra.mxu0 %v4722
    %4767 = vmatprep.subr.mxu0 0.0
    %4768 = vmatpush1.msra.mxu0 %v4721
    %4769 = vmatprep.subr.mxu0 0.0
    %4770 = vmatpush1.msra.mxu0 %v4720
    %4771 = vmatprep.subr.mxu0 0.0
    %4772 = vmatpush1.msra.mxu0 %v4719
    %4773 = vmatprep.subr.mxu0 0.0
    %4774 = vmatpush1.msra.mxu0 %v4718
    %4775 = vmatprep.subr.mxu0 0.0
    %4776 = vmatpush1.msra.mxu0 %v4717
    %4777 = vmatprep.subr.mxu0 0.0
    %4778 = vmatpush1.msra.mxu0 %v4716
    %4779 = vmatprep.subr.mxu0 0.0
    %4780 = vmatpush2.msra.mxu0 0.0
    %4781 = vmatprep.subr.mxu0 0.0
    %4782 = vmatpush2.msra.mxu0 0.0
    %4783 = vmatprep.subr.mxu0 0.0
    %4784 = vmatpush2.msra.mxu0 0.0
    %4785 = vmatprep.subr.mxu0 0.0
    %4786 = vmatpush2.msra.mxu0 0.0
    %4787 = vmatprep.subr.mxu0 0.0
    %4788 = vmatpush2.msra.mxu0 %v4743
    %4789 = vmatprep.subr.mxu0 0.0
    %4790 = vmatpush2.msra.mxu0 %v4742
    %4791 = vmatprep.subr.mxu0 0.0
    %4792 = vmatpush2.msra.mxu0 %v4741
    %4793 = vmatprep.subr.mxu0 0.0
    %4794 = vmatpush2.msra.mxu0 %v4740
    %4795 = vmatprep.subr.mxu0 0.0
    %4796 = vmatpush2.msra.mxu0 %v4739
    %4797 = vmatprep.subr.mxu0 0.0
    %4798 = vmatpush2.msra.mxu0 %v4738
    %4799 = vmatprep.subr.mxu0 0.0
    %4800 = vmatpush2.msra.mxu0 %v4737
    %4801 = vmatprep.subr.mxu0 0.0
    %4802 = vmatpush2.msra.mxu0 %v4736
    %4803 = vmatprep.subr.mxu0 0.0
    %4804 = vmatpush2.msra.mxu0 %v4735
    %4805 = vmatprep.subr.mxu0 0.0
    %4806 = vmatpush2.msra.mxu0 %v4734
    %4807 = vmatprep.subr.mxu0 0.0
    %4808 = vmatpush2.msra.mxu0 %v4733
    %4809 = vmatprep.subr.mxu0 0.0
    %4810 = vmatpush2.msra.mxu0 %v4732
    %4811 = vmatprep.mubr.f32.mxu0 %v4745
    %4812 = vmatmul.mubr.f32.gmra.mxu0 %v4711
    %v4813 = vpop.f32.mrf.mxu0
    %v4814 = vadd.f32 0.0, %v4813
    %v4815 = vpop.f32.mrf.mxu0
    %4816 = vdwg.mxu0
    %v4817 = vadd.f32 %v4636, %v4814
    %s4818 = scalar_lea.vmem [#allocation17], 12
    %v4819 = vld [vmem:[%s4818] sm:$0xf]
    %v4821 = vsel %vm4277, %v4819, 0
    %4823 = vmatprep.subr.mxu0 0.0
    %4824 = vmatpush1.msra.mxu0 0.0
    %4825 = vmatprep.subr.mxu0 0.0
    %4826 = vmatpush1.msra.mxu0 0.0
    %4827 = vmatprep.subr.mxu0 0.0
    %4828 = vmatpush1.msra.mxu0 0.0
    %4829 = vmatprep.subr.mxu0 0.0
    %4830 = vmatpush1.msra.mxu0 0.0
    %4831 = vmatprep.subr.mxu0 0.0
    %4832 = vmatpush1.msra.mxu0 0.0
    %4833 = vmatprep.subr.mxu0 0.0
    %4834 = vmatpush1.msra.mxu0 0.0
    %4835 = vmatprep.subr.mxu0 0.0
    %4836 = vmatpush1.msra.mxu0 0.0
    %4837 = vmatprep.subr.mxu0 0.0
    %4838 = vmatpush1.msra.mxu0 0.0
    %4839 = vmatprep.subr.mxu0 0.0
    %4840 = vmatpush1.msra.mxu0 0.0
    %4841 = vmatprep.subr.mxu0 0.0
    %4842 = vmatpush1.msra.mxu0 0.0
    %4843 = vmatprep.subr.mxu0 0.0
    %4844 = vmatpush1.msra.mxu0 0.0
    %4845 = vmatprep.subr.mxu0 0.0
    %4846 = vmatpush1.msra.mxu0 0.0
    %4847 = vmatprep.subr.mxu0 0.0
    %4848 = vmatpush1.msra.mxu0 0.0
    %4849 = vmatprep.subr.mxu0 0.0
    %4850 = vmatpush1.msra.mxu0 0.0
    %4851 = vmatprep.subr.mxu0 %v4286
    %4852 = vmatpush1.msra.mxu0 %v4283
    %4853 = vmatprep.subr.mxu0 %v4273
    %4854 = vmatpush1.msra.mxu0 %v4272
    %4855 = vmatprep.subr.mxu0 0.0
    %4856 = vmatpush2.msra.mxu0 0.0
    %4857 = vmatprep.subr.mxu0 0.0
    %4858 = vmatpush2.msra.mxu0 0.0
    %4859 = vmatprep.subr.mxu0 0.0
    %4860 = vmatpush2.msra.mxu0 0.0
    %4861 = vmatprep.subr.mxu0 0.0
    %4862 = vmatpush2.msra.mxu0 0.0
    %4863 = vmatprep.subr.mxu0 0.0
    %4864 = vmatpush2.msra.mxu0 0.0
    %4865 = vmatprep.subr.mxu0 0.0
    %4866 = vmatpush2.msra.mxu0 0.0
    %4867 = vmatprep.subr.mxu0 0.0
    %4868 = vmatpush2.msra.mxu0 0.0
    %4869 = vmatprep.subr.mxu0 0.0
    %4870 = vmatpush2.msra.mxu0 0.0
    %4871 = vmatprep.subr.mxu0 0.0
    %4872 = vmatpush2.msra.mxu0 0.0
    %4873 = vmatprep.subr.mxu0 0.0
    %4874 = vmatpush2.msra.mxu0 0.0
    %4875 = vmatprep.subr.mxu0 0.0
    %4876 = vmatpush2.msra.mxu0 0.0
    %4877 = vmatprep.subr.mxu0 0.0
    %4878 = vmatpush2.msra.mxu0 0.0
    %4879 = vmatprep.subr.mxu0 0.0
    %4880 = vmatpush2.msra.mxu0 0.0
    %4881 = vmatprep.subr.mxu0 0.0
    %4882 = vmatpush2.msra.mxu0 0.0
    %4883 = vmatprep.subr.mxu0 0.0
    %4884 = vmatpush2.msra.mxu0 0.0
    %4885 = vmatprep.subr.mxu0 0.0
    %4886 = vmatpush2.msra.mxu0 0.0
    %4887 = vmatprep.mubr.f32.mxu0 0.0
    %4888 = vmatmul.mubr.f32.gmra.mxu0 %v4821
    %v4889 = vpop.f32.mrf.mxu0
    %v4890 = vadd.f32 0.0, %v4889
    %v4891 = vpop.f32.mrf.mxu0
    %v4892 = vadd.f32 0.0, %v4891
    %4893 = vdwg.mxu0
    %s4894 = scalar_lea.vmem %s10, 672
    %v4895 = vld [vmem:[%s4894] sm:$0xff]
    %v4896 = vld [vmem:[%s4894 + $0x8] sm:$0xff]
    %v4897 = vld [vmem:[%s4894 + $0x10] sm:$0xff]
    %v4898 = vld [vmem:[%s4894 + $0x18] sm:$0xff]
    %v4899 = vld [vmem:[%s4894 + $0x20] sm:$0xff]
    %v4900 = vld [vmem:[%s4894 + $0x28] sm:$0xff]
    %v4901 = vld [vmem:[%s4894 + $0x30] sm:$0xff]
    %v4902 = vld [vmem:[%s4894 + $0x38] sm:$0xff]
    %v4903 = vld [vmem:[%s4894 + $0x40] sm:$0xff]
    %v4904 = vld [vmem:[%s4894 + $0x48] sm:$0xff]
    %v4905 = vld [vmem:[%s4894 + $0x50] sm:$0xff]
    %v4906 = vld [vmem:[%s4894 + $0x58] sm:$0xff]
    %v4907 = vld [vmem:[%s4894 + $0x60] sm:$0xff]
    %v4908 = vld [vmem:[%s4894 + $0x68] sm:$0xff]
    %v4909 = vld [vmem:[%s4894 + $0x70] sm:$0xff]
    %v4910 = vld [vmem:[%s4894 + $0x78] sm:$0xff]
    %v4911 = vld [vmem:[%s4894 + $0x80] sm:$0xff]
    %v4912 = vld [vmem:[%s4894 + $0x88] sm:$0xff]
    %v4913 = vld [vmem:[%s4894 + $0x90] sm:$0xff]
    %v4914 = vld [vmem:[%s4894 + $0x98] sm:$0xff]
    %v4915 = vld [vmem:[%s4894 + $0xa0] sm:$0xff]
    %v4916 = vld [vmem:[%s4894 + $0xa8] sm:$0xff]
    %v4917 = vld [vmem:[%s4894 + $0xb0] sm:$0xff]
    %v4918 = vld [vmem:[%s4894 + $0xb8] sm:$0xff]
    %v4919 = vld [vmem:[%s4894 + $0xc0] sm:$0xff]
    %v4920 = vld [vmem:[%s4894 + $0xc8] sm:$0xff]
    %v4921 = vld [vmem:[%s4894 + $0xd0] sm:$0xff]
    %v4922 = vld [vmem:[%s4894 + $0xd8] sm:$0xff]
    %v4924 = vsel %vm4492, %v4892, 0
    %4926 = vmatprep.subr.mxu0 0.0
    %4927 = vmatpush1.msra.mxu0 %v4910
    %4928 = vmatprep.subr.mxu0 0.0
    %4929 = vmatpush1.msra.mxu0 %v4909
    %4930 = vmatprep.subr.mxu0 0.0
    %4931 = vmatpush1.msra.mxu0 %v4908
    %4932 = vmatprep.subr.mxu0 0.0
    %4933 = vmatpush1.msra.mxu0 %v4907
    %4934 = vmatprep.subr.mxu0 0.0
    %4935 = vmatpush1.msra.mxu0 %v4906
    %4936 = vmatprep.subr.mxu0 0.0
    %4937 = vmatpush1.msra.mxu0 %v4905
    %4938 = vmatprep.subr.mxu0 0.0
    %4939 = vmatpush1.msra.mxu0 %v4904
    %4940 = vmatprep.subr.mxu0 0.0
    %4941 = vmatpush1.msra.mxu0 %v4903
    %4942 = vmatprep.subr.mxu0 0.0
    %4943 = vmatpush1.msra.mxu0 %v4902
    %4944 = vmatprep.subr.mxu0 0.0
    %4945 = vmatpush1.msra.mxu0 %v4901
    %4946 = vmatprep.subr.mxu0 0.0
    %4947 = vmatpush1.msra.mxu0 %v4900
    %4948 = vmatprep.subr.mxu0 0.0
    %4949 = vmatpush1.msra.mxu0 %v4899
    %4950 = vmatprep.subr.mxu0 0.0
    %4951 = vmatpush1.msra.mxu0 %v4898
    %4952 = vmatprep.subr.mxu0 0.0
    %4953 = vmatpush1.msra.mxu0 %v4897
    %4954 = vmatprep.subr.mxu0 0.0
    %4955 = vmatpush1.msra.mxu0 %v4896
    %4956 = vmatprep.subr.mxu0 0.0
    %4957 = vmatpush1.msra.mxu0 %v4895
    %4958 = vmatprep.subr.mxu0 0.0
    %4959 = vmatpush2.msra.mxu0 0.0
    %4960 = vmatprep.subr.mxu0 0.0
    %4961 = vmatpush2.msra.mxu0 0.0
    %4962 = vmatprep.subr.mxu0 0.0
    %4963 = vmatpush2.msra.mxu0 0.0
    %4964 = vmatprep.subr.mxu0 0.0
    %4965 = vmatpush2.msra.mxu0 0.0
    %4966 = vmatprep.subr.mxu0 0.0
    %4967 = vmatpush2.msra.mxu0 %v4922
    %4968 = vmatprep.subr.mxu0 0.0
    %4969 = vmatpush2.msra.mxu0 %v4921
    %4970 = vmatprep.subr.mxu0 0.0
    %4971 = vmatpush2.msra.mxu0 %v4920
    %4972 = vmatprep.subr.mxu0 0.0
    %4973 = vmatpush2.msra.mxu0 %v4919
    %4974 = vmatprep.subr.mxu0 0.0
    %4975 = vmatpush2.msra.mxu0 %v4918
    %4976 = vmatprep.subr.mxu0 0.0
    %4977 = vmatpush2.msra.mxu0 %v4917
    %4978 = vmatprep.subr.mxu0 0.0
    %4979 = vmatpush2.msra.mxu0 %v4916
    %4980 = vmatprep.subr.mxu0 0.0
    %4981 = vmatpush2.msra.mxu0 %v4915
    %4982 = vmatprep.subr.mxu0 0.0
    %4983 = vmatpush2.msra.mxu0 %v4914
    %4984 = vmatprep.subr.mxu0 0.0
    %4985 = vmatpush2.msra.mxu0 %v4913
    %4986 = vmatprep.subr.mxu0 0.0
    %4987 = vmatpush2.msra.mxu0 %v4912
    %4988 = vmatprep.subr.mxu0 0.0
    %4989 = vmatpush2.msra.mxu0 %v4911
    %4990 = vmatprep.mubr.f32.mxu0 %v4924
    %4991 = vmatmul.mubr.f32.gmra.mxu0 %v4890
    %v4992 = vpop.f32.mrf.mxu0
    %v4993 = vadd.f32 0.0, %v4992
    %v4994 = vpop.f32.mrf.mxu0
    %4995 = vdwg.mxu0
    %v4996 = vadd.f32 %v4817, %v4993
    %s4997 = scalar_lea.vmem [#allocation17], 16
    %v4998 = vld [vmem:[%s4997] sm:$0xf]
    %v5000 = vsel %vm4277, %v4998, 0
    %5002 = vmatprep.subr.mxu0 0.0
    %5003 = vmatpush1.msra.mxu0 0.0
    %5004 = vmatprep.subr.mxu0 0.0
    %5005 = vmatpush1.msra.mxu0 0.0
    %5006 = vmatprep.subr.mxu0 0.0
    %5007 = vmatpush1.msra.mxu0 0.0
    %5008 = vmatprep.subr.mxu0 0.0
    %5009 = vmatpush1.msra.mxu0 0.0
    %5010 = vmatprep.subr.mxu0 0.0
    %5011 = vmatpush1.msra.mxu0 0.0
    %5012 = vmatprep.subr.mxu0 0.0
    %5013 = vmatpush1.msra.mxu0 0.0
    %5014 = vmatprep.subr.mxu0 0.0
    %5015 = vmatpush1.msra.mxu0 0.0
    %5016 = vmatprep.subr.mxu0 0.0
    %5017 = vmatpush1.msra.mxu0 0.0
    %5018 = vmatprep.subr.mxu0 0.0
    %5019 = vmatpush1.msra.mxu0 0.0
    %5020 = vmatprep.subr.mxu0 0.0
    %5021 = vmatpush1.msra.mxu0 0.0
    %5022 = vmatprep.subr.mxu0 0.0
    %5023 = vmatpush1.msra.mxu0 0.0
    %5024 = vmatprep.subr.mxu0 0.0
    %5025 = vmatpush1.msra.mxu0 0.0
    %5026 = vmatprep.subr.mxu0 0.0
    %5027 = vmatpush1.msra.mxu0 0.0
    %5028 = vmatprep.subr.mxu0 0.0
    %5029 = vmatpush1.msra.mxu0 0.0
    %5030 = vmatprep.subr.mxu0 %v4286
    %5031 = vmatpush1.msra.mxu0 %v4283
    %5032 = vmatprep.subr.mxu0 %v4273
    %5033 = vmatpush1.msra.mxu0 %v4272
    %5034 = vmatprep.subr.mxu0 0.0
    %5035 = vmatpush2.msra.mxu0 0.0
    %5036 = vmatprep.subr.mxu0 0.0
    %5037 = vmatpush2.msra.mxu0 0.0
    %5038 = vmatprep.subr.mxu0 0.0
    %5039 = vmatpush2.msra.mxu0 0.0
    %5040 = vmatprep.subr.mxu0 0.0
    %5041 = vmatpush2.msra.mxu0 0.0
    %5042 = vmatprep.subr.mxu0 0.0
    %5043 = vmatpush2.msra.mxu0 0.0
    %5044 = vmatprep.subr.mxu0 0.0
    %5045 = vmatpush2.msra.mxu0 0.0
    %5046 = vmatprep.subr.mxu0 0.0
    %5047 = vmatpush2.msra.mxu0 0.0
    %5048 = vmatprep.subr.mxu0 0.0
    %5049 = vmatpush2.msra.mxu0 0.0
    %5050 = vmatprep.subr.mxu0 0.0
    %5051 = vmatpush2.msra.mxu0 0.0
    %5052 = vmatprep.subr.mxu0 0.0
    %5053 = vmatpush2.msra.mxu0 0.0
    %5054 = vmatprep.subr.mxu0 0.0
    %5055 = vmatpush2.msra.mxu0 0.0
    %5056 = vmatprep.subr.mxu0 0.0
    %5057 = vmatpush2.msra.mxu0 0.0
    %5058 = vmatprep.subr.mxu0 0.0
    %5059 = vmatpush2.msra.mxu0 0.0
    %5060 = vmatprep.subr.mxu0 0.0
    %5061 = vmatpush2.msra.mxu0 0.0
    %5062 = vmatprep.subr.mxu0 0.0
    %5063 = vmatpush2.msra.mxu0 0.0
    %5064 = vmatprep.subr.mxu0 0.0
    %5065 = vmatpush2.msra.mxu0 0.0
    %5066 = vmatprep.mubr.f32.mxu0 0.0
    %5067 = vmatmul.mubr.f32.gmra.mxu0 %v5000
    %v5068 = vpop.f32.mrf.mxu0
    %v5069 = vadd.f32 0.0, %v5068
    %v5070 = vpop.f32.mrf.mxu0
    %v5071 = vadd.f32 0.0, %v5070
    %5072 = vdwg.mxu0
    %s5073 = scalar_lea.vmem %s10, 896
    %v5074 = vld [vmem:[%s5073] sm:$0xff]
    %v5075 = vld [vmem:[%s5073 + $0x8] sm:$0xff]
    %v5076 = vld [vmem:[%s5073 + $0x10] sm:$0xff]
    %v5077 = vld [vmem:[%s5073 + $0x18] sm:$0xff]
    %v5078 = vld [vmem:[%s5073 + $0x20] sm:$0xff]
    %v5079 = vld [vmem:[%s5073 + $0x28] sm:$0xff]
    %v5080 = vld [vmem:[%s5073 + $0x30] sm:$0xff]
    %v5081 = vld [vmem:[%s5073 + $0x38] sm:$0xff]
    %v5082 = vld [vmem:[%s5073 + $0x40] sm:$0xff]
    %v5083 = vld [vmem:[%s5073 + $0x48] sm:$0xff]
    %v5084 = vld [vmem:[%s5073 + $0x50] sm:$0xff]
    %v5085 = vld [vmem:[%s5073 + $0x58] sm:$0xff]
    %v5086 = vld [vmem:[%s5073 + $0x60] sm:$0xff]
    %v5087 = vld [vmem:[%s5073 + $0x68] sm:$0xff]
    %v5088 = vld [vmem:[%s5073 + $0x70] sm:$0xff]
    %v5089 = vld [vmem:[%s5073 + $0x78] sm:$0xff]
    %v5090 = vld [vmem:[%s5073 + $0x80] sm:$0xff]
    %v5091 = vld [vmem:[%s5073 + $0x88] sm:$0xff]
    %v5092 = vld [vmem:[%s5073 + $0x90] sm:$0xff]
    %v5093 = vld [vmem:[%s5073 + $0x98] sm:$0xff]
    %v5094 = vld [vmem:[%s5073 + $0xa0] sm:$0xff]
    %v5095 = vld [vmem:[%s5073 + $0xa8] sm:$0xff]
    %v5096 = vld [vmem:[%s5073 + $0xb0] sm:$0xff]
    %v5097 = vld [vmem:[%s5073 + $0xb8] sm:$0xff]
    %v5098 = vld [vmem:[%s5073 + $0xc0] sm:$0xff]
    %v5099 = vld [vmem:[%s5073 + $0xc8] sm:$0xff]
    %v5100 = vld [vmem:[%s5073 + $0xd0] sm:$0xff]
    %v5101 = vld [vmem:[%s5073 + $0xd8] sm:$0xff]
    %v5103 = vsel %vm4492, %v5071, 0
    %5105 = vmatprep.subr.mxu0 0.0
    %5106 = vmatpush1.msra.mxu0 %v5089
    %5107 = vmatprep.subr.mxu0 0.0
    %5108 = vmatpush1.msra.mxu0 %v5088
    %5109 = vmatprep.subr.mxu0 0.0
    %5110 = vmatpush1.msra.mxu0 %v5087
    %5111 = vmatprep.subr.mxu0 0.0
    %5112 = vmatpush1.msra.mxu0 %v5086
    %5113 = vmatprep.subr.mxu0 0.0
    %5114 = vmatpush1.msra.mxu0 %v5085
    %5115 = vmatprep.subr.mxu0 0.0
    %5116 = vmatpush1.msra.mxu0 %v5084
    %5117 = vmatprep.subr.mxu0 0.0
    %5118 = vmatpush1.msra.mxu0 %v5083
    %5119 = vmatprep.subr.mxu0 0.0
    %5120 = vmatpush1.msra.mxu0 %v5082
    %5121 = vmatprep.subr.mxu0 0.0
    %5122 = vmatpush1.msra.mxu0 %v5081
    %5123 = vmatprep.subr.mxu0 0.0
    %5124 = vmatpush1.msra.mxu0 %v5080
    %5125 = vmatprep.subr.mxu0 0.0
    %5126 = vmatpush1.msra.mxu0 %v5079
    %5127 = vmatprep.subr.mxu0 0.0
    %5128 = vmatpush1.msra.mxu0 %v5078
    %5129 = vmatprep.subr.mxu0 0.0
    %5130 = vmatpush1.msra.mxu0 %v5077
    %5131 = vmatprep.subr.mxu0 0.0
    %5132 = vmatpush1.msra.mxu0 %v5076
    %5133 = vmatprep.subr.mxu0 0.0
    %5134 = vmatpush1.msra.mxu0 %v5075
    %5135 = vmatprep.subr.mxu0 0.0
    %5136 = vmatpush1.msra.mxu0 %v5074
    %5137 = vmatprep.subr.mxu0 0.0
    %5138 = vmatpush2.msra.mxu0 0.0
    %5139 = vmatprep.subr.mxu0 0.0
    %5140 = vmatpush2.msra.mxu0 0.0
    %5141 = vmatprep.subr.mxu0 0.0
    %5142 = vmatpush2.msra.mxu0 0.0
    %5143 = vmatprep.subr.mxu0 0.0
    %5144 = vmatpush2.msra.mxu0 0.0
    %5145 = vmatprep.subr.mxu0 0.0
    %5146 = vmatpush2.msra.mxu0 %v5101
    %5147 = vmatprep.subr.mxu0 0.0
    %5148 = vmatpush2.msra.mxu0 %v5100
    %5149 = vmatprep.subr.mxu0 0.0
    %5150 = vmatpush2.msra.mxu0 %v5099
    %5151 = vmatprep.subr.mxu0 0.0
    %5152 = vmatpush2.msra.mxu0 %v5098
    %5153 = vmatprep.subr.mxu0 0.0
    %5154 = vmatpush2.msra.mxu0 %v5097
    %5155 = vmatprep.subr.mxu0 0.0
    %5156 = vmatpush2.msra.mxu0 %v5096
    %5157 = vmatprep.subr.mxu0 0.0
    %5158 = vmatpush2.msra.mxu0 %v5095
    %5159 = vmatprep.subr.mxu0 0.0
    %5160 = vmatpush2.msra.mxu0 %v5094
    %5161 = vmatprep.subr.mxu0 0.0
    %5162 = vmatpush2.msra.mxu0 %v5093
    %5163 = vmatprep.subr.mxu0 0.0
    %5164 = vmatpush2.msra.mxu0 %v5092
    %5165 = vmatprep.subr.mxu0 0.0
    %5166 = vmatpush2.msra.mxu0 %v5091
    %5167 = vmatprep.subr.mxu0 0.0
    %5168 = vmatpush2.msra.mxu0 %v5090
    %5169 = vmatprep.mubr.f32.mxu0 %v5103
    %5170 = vmatmul.mubr.f32.gmra.mxu0 %v5069
    %v5171 = vpop.f32.mrf.mxu0
    %v5172 = vadd.f32 0.0, %v5171
    %v5173 = vpop.f32.mrf.mxu0
    %5174 = vdwg.mxu0
    %v5175 = vadd.f32 %v4996, %v5172
    %v5176 = vld [vmem:[#allocation19] sm:$0x1]
    %v5178 = vlaneseq
    %v5179 = vshrl.u32 %v5178, 7
    %v5180 = vsub.s32 0, %v5179
    %v5181 = vrot.slane %v5176, %v5180
    %v5183 = vmul.f32 %v5175, %v5181
    %v5184 = vld [vmem:[#allocation20] sm:$0x1]
    %v5186 = vlaneseq
    %v5187 = vshrl.u32 %v5186, 7
    %v5188 = vsub.s32 0, %v5187
    %v5189 = vrot.slane %v5184, %v5188
    %v5191 = vadd.f32 %v5183, %v5189
    %v5192 = vmax.f32 %v5191, 0.0
    %v5193 = vld [vmem:[#allocation22] sm:$0x1]
    %v5194 = vld [vmem:[%s13] sm:$0xff]
    %v5195 = vld [vmem:[%s13 + $0x8] sm:$0xff]
    %v5196 = vld [vmem:[%s13 + $0x10] sm:$0xff]
    %v5197 = vld [vmem:[%s13 + $0x18] sm:$0xff]
    %v5198 = vld [vmem:[%s13 + $0x20] sm:$0xff]
    %v5199 = vld [vmem:[%s13 + $0x28] sm:$0xff]
    %v5200 = vld [vmem:[%s13 + $0x30] sm:$0xff]
    %v5201 = vld [vmem:[%s13 + $0x38] sm:$0xff]
    %vm5202 = vcmask 523264
    %v5204 = vsel %vm5202, %v5192, 0
    %5206 = vmatprep.subr.mxu0 0.0
    %5207 = vmatpush1.msra.mxu0 0.0
    %5208 = vmatprep.subr.mxu0 0.0
    %5209 = vmatpush1.msra.mxu0 0.0
    %5210 = vmatprep.subr.mxu0 0.0
    %5211 = vmatpush1.msra.mxu0 0.0
    %5212 = vmatprep.subr.mxu0 0.0
    %5213 = vmatpush1.msra.mxu0 0.0
    %5214 = vmatprep.subr.mxu0 0.0
    %5215 = vmatpush1.msra.mxu0 0.0
    %5216 = vmatprep.subr.mxu0 0.0
    %5217 = vmatpush1.msra.mxu0 0.0
    %5218 = vmatprep.subr.mxu0 0.0
    %5219 = vmatpush1.msra.mxu0 0.0
    %5220 = vmatprep.subr.mxu0 0.0
    %5221 = vmatpush1.msra.mxu0 0.0
    %5222 = vmatprep.subr.mxu0 0.0
    %5223 = vmatpush1.msra.mxu0 %v5201
    %5224 = vmatprep.subr.mxu0 0.0
    %5225 = vmatpush1.msra.mxu0 %v5200
    %5226 = vmatprep.subr.mxu0 0.0
    %5227 = vmatpush1.msra.mxu0 %v5199
    %5228 = vmatprep.subr.mxu0 0.0
    %5229 = vmatpush1.msra.mxu0 %v5198
    %5230 = vmatprep.subr.mxu0 0.0
    %5231 = vmatpush1.msra.mxu0 %v5197
    %5232 = vmatprep.subr.mxu0 0.0
    %5233 = vmatpush1.msra.mxu0 %v5196
    %5234 = vmatprep.subr.mxu0 0.0
    %5235 = vmatpush1.msra.mxu0 %v5195
    %5236 = vmatprep.subr.mxu0 0.0
    %5237 = vmatpush1.msra.mxu0 %v5194
    %5238 = vmatprep.subr.mxu0 0.0
    %5239 = vmatpush2.msra.mxu0 0.0
    %5240 = vmatprep.subr.mxu0 0.0
    %5241 = vmatpush2.msra.mxu0 0.0
    %5242 = vmatprep.subr.mxu0 0.0
    %5243 = vmatpush2.msra.mxu0 0.0
    %5244 = vmatprep.subr.mxu0 0.0
    %5245 = vmatpush2.msra.mxu0 0.0
    %5246 = vmatprep.subr.mxu0 0.0
    %5247 = vmatpush2.msra.mxu0 0.0
    %5248 = vmatprep.subr.mxu0 0.0
    %5249 = vmatpush2.msra.mxu0 0.0
    %5250 = vmatprep.subr.mxu0 0.0
    %5251 = vmatpush2.msra.mxu0 0.0
    %5252 = vmatprep.subr.mxu0 0.0
    %5253 = vmatpush2.msra.mxu0 0.0
    %5254 = vmatprep.subr.mxu0 0.0
    %5255 = vmatpush2.msra.mxu0 0.0
    %5256 = vmatprep.subr.mxu0 0.0
    %5257 = vmatpush2.msra.mxu0 0.0
    %5258 = vmatprep.subr.mxu0 0.0
    %5259 = vmatpush2.msra.mxu0 0.0
    %5260 = vmatprep.subr.mxu0 0.0
    %5261 = vmatpush2.msra.mxu0 0.0
    %5262 = vmatprep.subr.mxu0 0.0
    %5263 = vmatpush2.msra.mxu0 0.0
    %5264 = vmatprep.subr.mxu0 0.0
    %5265 = vmatpush2.msra.mxu0 0.0
    %5266 = vmatprep.subr.mxu0 0.0
    %5267 = vmatpush2.msra.mxu0 0.0
    %5268 = vmatprep.subr.mxu0 0.0
    %5269 = vmatpush2.msra.mxu0 0.0
    %5270 = vmatprep.mubr.f32.mxu0 0.0
    %5271 = vmatmul.mubr.f32.gmra.mxu0 %v5204
    %v5272 = vpop.f32.mrf.mxu0
    %v5273 = vadd.f32 0.0, %v5272
    %v5274 = vpop.f32.mrf.mxu0
    %5275 = vdwg.mxu0
    %v5276 = vadd.f32 %v5193, %v5273
    %v5277 = vld [vmem:[%s13 + $0x40] sm:$0xff]
    %v5278 = vld [vmem:[%s13 + $0x48] sm:$0xff]
    %v5279 = vld [vmem:[%s13 + $0x50] sm:$0xff]
    %v5280 = vld [vmem:[%s13 + $0x58] sm:$0xff]
    %v5281 = vld [vmem:[%s13 + $0x60] sm:$0xff]
    %v5282 = vld [vmem:[%s13 + $0x68] sm:$0xff]
    %v5283 = vld [vmem:[%s13 + $0x70] sm:$0xff]
    %v5284 = vld [vmem:[%s13 + $0x78] sm:$0xff]
    %v5285 = vrot.slane %v5192, 1
    %v5286 = vsel %vm5202, %v5285, 0
    %5288 = vmatprep.subr.mxu0 0.0
    %5289 = vmatpush1.msra.mxu0 0.0
    %5290 = vmatprep.subr.mxu0 0.0
    %5291 = vmatpush1.msra.mxu0 0.0
    %5292 = vmatprep.subr.mxu0 0.0
    %5293 = vmatpush1.msra.mxu0 0.0
    %5294 = vmatprep.subr.mxu0 0.0
    %5295 = vmatpush1.msra.mxu0 0.0
    %5296 = vmatprep.subr.mxu0 0.0
    %5297 = vmatpush1.msra.mxu0 0.0
    %5298 = vmatprep.subr.mxu0 0.0
    %5299 = vmatpush1.msra.mxu0 0.0
    %5300 = vmatprep.subr.mxu0 0.0
    %5301 = vmatpush1.msra.mxu0 0.0
    %5302 = vmatprep.subr.mxu0 0.0
    %5303 = vmatpush1.msra.mxu0 0.0
    %5304 = vmatprep.subr.mxu0 0.0
    %5305 = vmatpush1.msra.mxu0 %v5284
    %5306 = vmatprep.subr.mxu0 0.0
    %5307 = vmatpush1.msra.mxu0 %v5283
    %5308 = vmatprep.subr.mxu0 0.0
    %5309 = vmatpush1.msra.mxu0 %v5282
    %5310 = vmatprep.subr.mxu0 0.0
    %5311 = vmatpush1.msra.mxu0 %v5281
    %5312 = vmatprep.subr.mxu0 0.0
    %5313 = vmatpush1.msra.mxu0 %v5280
    %5314 = vmatprep.subr.mxu0 0.0
    %5315 = vmatpush1.msra.mxu0 %v5279
    %5316 = vmatprep.subr.mxu0 0.0
    %5317 = vmatpush1.msra.mxu0 %v5278
    %5318 = vmatprep.subr.mxu0 0.0
    %5319 = vmatpush1.msra.mxu0 %v5277
    %5320 = vmatprep.subr.mxu0 0.0
    %5321 = vmatpush2.msra.mxu0 0.0
    %5322 = vmatprep.subr.mxu0 0.0
    %5323 = vmatpush2.msra.mxu0 0.0
    %5324 = vmatprep.subr.mxu0 0.0
    %5325 = vmatpush2.msra.mxu0 0.0
    %5326 = vmatprep.subr.mxu0 0.0
    %5327 = vmatpush2.msra.mxu0 0.0
    %5328 = vmatprep.subr.mxu0 0.0
    %5329 = vmatpush2.msra.mxu0 0.0
    %5330 = vmatprep.subr.mxu0 0.0
    %5331 = vmatpush2.msra.mxu0 0.0
    %5332 = vmatprep.subr.mxu0 0.0
    %5333 = vmatpush2.msra.mxu0 0.0
    %5334 = vmatprep.subr.mxu0 0.0
    %5335 = vmatpush2.msra.mxu0 0.0
    %5336 = vmatprep.subr.mxu0 0.0
    %5337 = vmatpush2.msra.mxu0 0.0
    %5338 = vmatprep.subr.mxu0 0.0
    %5339 = vmatpush2.msra.mxu0 0.0
    %5340 = vmatprep.subr.mxu0 0.0
    %5341 = vmatpush2.msra.mxu0 0.0
    %5342 = vmatprep.subr.mxu0 0.0
    %5343 = vmatpush2.msra.mxu0 0.0
    %5344 = vmatprep.subr.mxu0 0.0
    %5345 = vmatpush2.msra.mxu0 0.0
    %5346 = vmatprep.subr.mxu0 0.0
    %5347 = vmatpush2.msra.mxu0 0.0
    %5348 = vmatprep.subr.mxu0 0.0
    %5349 = vmatpush2.msra.mxu0 0.0
    %5350 = vmatprep.subr.mxu0 0.0
    %5351 = vmatpush2.msra.mxu0 0.0
    %5352 = vmatprep.mubr.f32.mxu0 0.0
    %5353 = vmatmul.mubr.f32.gmra.mxu0 %v5286
    %v5354 = vpop.f32.mrf.mxu0
    %v5355 = vadd.f32 0.0, %v5354
    %v5356 = vpop.f32.mrf.mxu0
    %5357 = vdwg.mxu0
    %v5358 = vadd.f32 %v5276, %v5355
    %v5359 = vmax.f32 %v5358, 0.0
    %v5360 = vld [vmem:[%s15] sm:$0xff]
    %v5361 = vld [vmem:[%s15 + $0x8] sm:$0xff]
    %v5362 = vld [vmem:[#allocation2] sm:$0x1]
    %vm5363 = vcmask 130048
    %v5365 = vsel %vm5363, %v5359, 0
    %5367 = vmatprep.subr.mxu0 0.0
    %5368 = vmatpush1.msra.mxu0 0.0
    %5369 = vmatprep.subr.mxu0 0.0
    %5370 = vmatpush1.msra.mxu0 0.0
    %5371 = vmatprep.subr.mxu0 0.0
    %5372 = vmatpush1.msra.mxu0 0.0
    %5373 = vmatprep.subr.mxu0 0.0
    %5374 = vmatpush1.msra.mxu0 0.0
    %5375 = vmatprep.subr.mxu0 0.0
    %5376 = vmatpush1.msra.mxu0 0.0
    %5377 = vmatprep.subr.mxu0 0.0
    %5378 = vmatpush1.msra.mxu0 0.0
    %5379 = vmatprep.subr.mxu0 0.0
    %5380 = vmatpush1.msra.mxu0 0.0
    %5381 = vmatprep.subr.mxu0 0.0
    %5382 = vmatpush1.msra.mxu0 0.0
    %5383 = vmatprep.subr.mxu0 0.0
    %5384 = vmatpush1.msra.mxu0 0.0
    %5385 = vmatprep.subr.mxu0 0.0
    %5386 = vmatpush1.msra.mxu0 0.0
    %5387 = vmatprep.subr.mxu0 0.0
    %5388 = vmatpush1.msra.mxu0 0.0
    %5389 = vmatprep.subr.mxu0 0.0
    %5390 = vmatpush1.msra.mxu0 0.0
    %5391 = vmatprep.subr.mxu0 0.0
    %5392 = vmatpush1.msra.mxu0 0.0
    %5393 = vmatprep.subr.mxu0 0.0
    %5394 = vmatpush1.msra.mxu0 0.0
    %5395 = vmatprep.subr.mxu0 0.0
    %5396 = vmatpush1.msra.mxu0 %v5361
    %5397 = vmatprep.subr.mxu0 0.0
    %5398 = vmatpush1.msra.mxu0 %v5360
    %5399 = vmatprep.subr.mxu0 0.0
    %5400 = vmatpush2.msra.mxu0 0.0
    %5401 = vmatprep.subr.mxu0 0.0
    %5402 = vmatpush2.msra.mxu0 0.0
    %5403 = vmatprep.subr.mxu0 0.0
    %5404 = vmatpush2.msra.mxu0 0.0
    %5405 = vmatprep.subr.mxu0 0.0
    %5406 = vmatpush2.msra.mxu0 0.0
    %5407 = vmatprep.subr.mxu0 0.0
    %5408 = vmatpush2.msra.mxu0 0.0
    %5409 = vmatprep.subr.mxu0 0.0
    %5410 = vmatpush2.msra.mxu0 0.0
    %5411 = vmatprep.subr.mxu0 0.0
    %5412 = vmatpush2.msra.mxu0 0.0
    %5413 = vmatprep.subr.mxu0 0.0
    %5414 = vmatpush2.msra.mxu0 0.0
    %5415 = vmatprep.subr.mxu0 0.0
    %5416 = vmatpush2.msra.mxu0 0.0
    %5417 = vmatprep.subr.mxu0 0.0
    %5418 = vmatpush2.msra.mxu0 0.0
    %5419 = vmatprep.subr.mxu0 0.0
    %5420 = vmatpush2.msra.mxu0 0.0
    %5421 = vmatprep.subr.mxu0 0.0
    %5422 = vmatpush2.msra.mxu0 0.0
    %5423 = vmatprep.subr.mxu0 0.0
    %5424 = vmatpush2.msra.mxu0 0.0
    %5425 = vmatprep.subr.mxu0 0.0
    %5426 = vmatpush2.msra.mxu0 0.0
    %5427 = vmatprep.subr.mxu0 0.0
    %5428 = vmatpush2.msra.mxu0 0.0
    %5429 = vmatprep.subr.mxu0 0.0
    %5430 = vmatpush2.msra.mxu0 0.0
    %5431 = vmatprep.mubr.f32.mxu0 0.0
    %5432 = vmatmul.mubr.f32.gmra.mxu0 %v5365
    %v5433 = vpop.f32.mrf.mxu0
    %v5434 = vadd.f32 %v5362, %v5433
    %v5435 = vpop.f32.mrf.mxu0
    %5436 = vdwg.mxu0
    %v5437 = vsub.f32 0.0, %v5434
    %v5438 = vmul.f32 %v5437, 1.442695
    %v5439 = vpow.pop %v5438
    %v5440 = vadd.f32 %v5439, 1.0
    %v5441 = vrcp.pop %v5440
    %v5442 = vmul.f32 1.0, %v5441
    %vm5443 = vcmask 0
    %5444 = vst.msk [vmem:[%s17] sm:$0x1] %vm5443, %v5442
    %v5445 = vld [vmem:[#allocation22] sm:$0x1]
    %v5446 = vld [vmem:[%s13] sm:$0xff]
    %v5447 = vld [vmem:[%s13 + $0x8] sm:$0xff]
    %v5448 = vld [vmem:[%s13 + $0x10] sm:$0xff]
    %v5449 = vld [vmem:[%s13 + $0x18] sm:$0xff]
    %v5450 = vld [vmem:[%s13 + $0x20] sm:$0xff]
    %v5451 = vld [vmem:[%s13 + $0x28] sm:$0xff]
    %v5452 = vld [vmem:[%s13 + $0x30] sm:$0xff]
    %v5453 = vld [vmem:[%s13 + $0x38] sm:$0xff]
    %v5454 = vrot.slane %v5192, 2
    %v5455 = vsel %vm5202, %v5454, 0
    %5457 = vmatprep.subr.mxu0 0.0
    %5458 = vmatpush1.msra.mxu0 0.0
    %5459 = vmatprep.subr.mxu0 0.0
    %5460 = vmatpush1.msra.mxu0 0.0
    %5461 = vmatprep.subr.mxu0 0.0
    %5462 = vmatpush1.msra.mxu0 0.0
    %5463 = vmatprep.subr.mxu0 0.0
    %5464 = vmatpush1.msra.mxu0 0.0
    %5465 = vmatprep.subr.mxu0 0.0
    %5466 = vmatpush1.msra.mxu0 0.0
    %5467 = vmatprep.subr.mxu0 0.0
    %5468 = vmatpush1.msra.mxu0 0.0
    %5469 = vmatprep.subr.mxu0 0.0
    %5470 = vmatpush1.msra.mxu0 0.0
    %5471 = vmatprep.subr.mxu0 0.0
    %5472 = vmatpush1.msra.mxu0 0.0
    %5473 = vmatprep.subr.mxu0 0.0
    %5474 = vmatpush1.msra.mxu0 %v5453
    %5475 = vmatprep.subr.mxu0 0.0
    %5476 = vmatpush1.msra.mxu0 %v5452
    %5477 = vmatprep.subr.mxu0 0.0
    %5478 = vmatpush1.msra.mxu0 %v5451
    %5479 = vmatprep.subr.mxu0 0.0
    %5480 = vmatpush1.msra.mxu0 %v5450
    %5481 = vmatprep.subr.mxu0 0.0
    %5482 = vmatpush1.msra.mxu0 %v5449
    %5483 = vmatprep.subr.mxu0 0.0
    %5484 = vmatpush1.msra.mxu0 %v5448
    %5485 = vmatprep.subr.mxu0 0.0
    %5486 = vmatpush1.msra.mxu0 %v5447
    %5487 = vmatprep.subr.mxu0 0.0
    %5488 = vmatpush1.msra.mxu0 %v5446
    %5489 = vmatprep.subr.mxu0 0.0
    %5490 = vmatpush2.msra.mxu0 0.0
    %5491 = vmatprep.subr.mxu0 0.0
    %5492 = vmatpush2.msra.mxu0 0.0
    %5493 = vmatprep.subr.mxu0 0.0
    %5494 = vmatpush2.msra.mxu0 0.0
    %5495 = vmatprep.subr.mxu0 0.0
    %5496 = vmatpush2.msra.mxu0 0.0
    %5497 = vmatprep.subr.mxu0 0.0
    %5498 = vmatpush2.msra.mxu0 0.0
    %5499 = vmatprep.subr.mxu0 0.0
    %5500 = vmatpush2.msra.mxu0 0.0
    %5501 = vmatprep.subr.mxu0 0.0
    %5502 = vmatpush2.msra.mxu0 0.0
    %5503 = vmatprep.subr.mxu0 0.0
    %5504 = vmatpush2.msra.mxu0 0.0
    %5505 = vmatprep.subr.mxu0 0.0
    %5506 = vmatpush2.msra.mxu0 0.0
    %5507 = vmatprep.subr.mxu0 0.0
    %5508 = vmatpush2.msra.mxu0 0.0
    %5509 = vmatprep.subr.mxu0 0.0
    %5510 = vmatpush2.msra.mxu0 0.0
    %5511 = vmatprep.subr.mxu0 0.0
    %5512 = vmatpush2.msra.mxu0 0.0
    %5513 = vmatprep.subr.mxu0 0.0
    %5514 = vmatpush2.msra.mxu0 0.0
    %5515 = vmatprep.subr.mxu0 0.0
    %5516 = vmatpush2.msra.mxu0 0.0
    %5517 = vmatprep.subr.mxu0 0.0
    %5518 = vmatpush2.msra.mxu0 0.0
    %5519 = vmatprep.subr.mxu0 0.0
    %5520 = vmatpush2.msra.mxu0 0.0
    %5521 = vmatprep.mubr.f32.mxu0 0.0
    %5522 = vmatmul.mubr.f32.gmra.mxu0 %v5455
    %v5523 = vpop.f32.mrf.mxu0
    %v5524 = vadd.f32 0.0, %v5523
    %v5525 = vpop.f32.mrf.mxu0
    %5526 = vdwg.mxu0
    %v5527 = vadd.f32 %v5445, %v5524
    %v5528 = vld [vmem:[%s13 + $0x40] sm:$0xff]
    %v5529 = vld [vmem:[%s13 + $0x48] sm:$0xff]
    %v5530 = vld [vmem:[%s13 + $0x50] sm:$0xff]
    %v5531 = vld [vmem:[%s13 + $0x58] sm:$0xff]
    %v5532 = vld [vmem:[%s13 + $0x60] sm:$0xff]
    %v5533 = vld [vmem:[%s13 + $0x68] sm:$0xff]
    %v5534 = vld [vmem:[%s13 + $0x70] sm:$0xff]
    %v5535 = vld [vmem:[%s13 + $0x78] sm:$0xff]
    %v5536 = vrot.slane %v5192, 3
    %v5537 = vsel %vm5202, %v5536, 0
    %5539 = vmatprep.subr.mxu0 0.0
    %5540 = vmatpush1.msra.mxu0 0.0
    %5541 = vmatprep.subr.mxu0 0.0
    %5542 = vmatpush1.msra.mxu0 0.0
    %5543 = vmatprep.subr.mxu0 0.0
    %5544 = vmatpush1.msra.mxu0 0.0
    %5545 = vmatprep.subr.mxu0 0.0
    %5546 = vmatpush1.msra.mxu0 0.0
    %5547 = vmatprep.subr.mxu0 0.0
    %5548 = vmatpush1.msra.mxu0 0.0
    %5549 = vmatprep.subr.mxu0 0.0
    %5550 = vmatpush1.msra.mxu0 0.0
    %5551 = vmatprep.subr.mxu0 0.0
    %5552 = vmatpush1.msra.mxu0 0.0
    %5553 = vmatprep.subr.mxu0 0.0
    %5554 = vmatpush1.msra.mxu0 0.0
    %5555 = vmatprep.subr.mxu0 0.0
    %5556 = vmatpush1.msra.mxu0 %v5535
    %5557 = vmatprep.subr.mxu0 0.0
    %5558 = vmatpush1.msra.mxu0 %v5534
    %5559 = vmatprep.subr.mxu0 0.0
    %5560 = vmatpush1.msra.mxu0 %v5533
    %5561 = vmatprep.subr.mxu0 0.0
    %5562 = vmatpush1.msra.mxu0 %v5532
    %5563 = vmatprep.subr.mxu0 0.0
    %5564 = vmatpush1.msra.mxu0 %v5531
    %5565 = vmatprep.subr.mxu0 0.0
    %5566 = vmatpush1.msra.mxu0 %v5530
    %5567 = vmatprep.subr.mxu0 0.0
    %5568 = vmatpush1.msra.mxu0 %v5529
    %5569 = vmatprep.subr.mxu0 0.0
    %5570 = vmatpush1.msra.mxu0 %v5528
    %5571 = vmatprep.subr.mxu0 0.0
    %5572 = vmatpush2.msra.mxu0 0.0
    %5573 = vmatprep.subr.mxu0 0.0
    %5574 = vmatpush2.msra.mxu0 0.0
    %5575 = vmatprep.subr.mxu0 0.0
    %5576 = vmatpush2.msra.mxu0 0.0
    %5577 = vmatprep.subr.mxu0 0.0
    %5578 = vmatpush2.msra.mxu0 0.0
    %5579 = vmatprep.subr.mxu0 0.0
    %5580 = vmatpush2.msra.mxu0 0.0
    %5581 = vmatprep.subr.mxu0 0.0
    %5582 = vmatpush2.msra.mxu0 0.0
    %5583 = vmatprep.subr.mxu0 0.0
    %5584 = vmatpush2.msra.mxu0 0.0
    %5585 = vmatprep.subr.mxu0 0.0
    %5586 = vmatpush2.msra.mxu0 0.0
    %5587 = vmatprep.subr.mxu0 0.0
    %5588 = vmatpush2.msra.mxu0 0.0
    %5589 = vmatprep.subr.mxu0 0.0
    %5590 = vmatpush2.msra.mxu0 0.0
    %5591 = vmatprep.subr.mxu0 0.0
    %5592 = vmatpush2.msra.mxu0 0.0
    %5593 = vmatprep.subr.mxu0 0.0
    %5594 = vmatpush2.msra.mxu0 0.0
    %5595 = vmatprep.subr.mxu0 0.0
    %5596 = vmatpush2.msra.mxu0 0.0
    %5597 = vmatprep.subr.mxu0 0.0
    %5598 = vmatpush2.msra.mxu0 0.0
    %5599 = vmatprep.subr.mxu0 0.0
    %5600 = vmatpush2.msra.mxu0 0.0
    %5601 = vmatprep.subr.mxu0 0.0
    %5602 = vmatpush2.msra.mxu0 0.0
    %5603 = vmatprep.mubr.f32.mxu0 0.0
    %5604 = vmatmul.mubr.f32.gmra.mxu0 %v5537
    %v5605 = vpop.f32.mrf.mxu0
    %v5606 = vadd.f32 0.0, %v5605
    %v5607 = vpop.f32.mrf.mxu0
    %5608 = vdwg.mxu0
    %v5609 = vadd.f32 %v5527, %v5606
    %v5610 = vmax.f32 %v5609, 0.0
    %v5611 = vld [vmem:[%s15] sm:$0xff]
    %v5612 = vld [vmem:[%s15 + $0x8] sm:$0xff]
    %v5613 = vld [vmem:[#allocation2] sm:$0x1]
    %v5615 = vsel %vm5363, %v5610, 0
    %5617 = vmatprep.subr.mxu0 0.0
    %5618 = vmatpush1.msra.mxu0 0.0
    %5619 = vmatprep.subr.mxu0 0.0
    %5620 = vmatpush1.msra.mxu0 0.0
    %5621 = vmatprep.subr.mxu0 0.0
    %5622 = vmatpush1.msra.mxu0 0.0
    %5623 = vmatprep.subr.mxu0 0.0
    %5624 = vmatpush1.msra.mxu0 0.0
    %5625 = vmatprep.subr.mxu0 0.0
    %5626 = vmatpush1.msra.mxu0 0.0
    %5627 = vmatprep.subr.mxu0 0.0
    %5628 = vmatpush1.msra.mxu0 0.0
    %5629 = vmatprep.subr.mxu0 0.0
    %5630 = vmatpush1.msra.mxu0 0.0
    %5631 = vmatprep.subr.mxu0 0.0
    %5632 = vmatpush1.msra.mxu0 0.0
    %5633 = vmatprep.subr.mxu0 0.0
    %5634 = vmatpush1.msra.mxu0 0.0
    %5635 = vmatprep.subr.mxu0 0.0
    %5636 = vmatpush1.msra.mxu0 0.0
    %5637 = vmatprep.subr.mxu0 0.0
    %5638 = vmatpush1.msra.mxu0 0.0
    %5639 = vmatprep.subr.mxu0 0.0
    %5640 = vmatpush1.msra.mxu0 0.0
    %5641 = vmatprep.subr.mxu0 0.0
    %5642 = vmatpush1.msra.mxu0 0.0
    %5643 = vmatprep.subr.mxu0 0.0
    %5644 = vmatpush1.msra.mxu0 0.0
    %5645 = vmatprep.subr.mxu0 0.0
    %5646 = vmatpush1.msra.mxu0 %v5612
    %5647 = vmatprep.subr.mxu0 0.0
    %5648 = vmatpush1.msra.mxu0 %v5611
    %5649 = vmatprep.subr.mxu0 0.0
    %5650 = vmatpush2.msra.mxu0 0.0
    %5651 = vmatprep.subr.mxu0 0.0
    %5652 = vmatpush2.msra.mxu0 0.0
    %5653 = vmatprep.subr.mxu0 0.0
    %5654 = vmatpush2.msra.mxu0 0.0
    %5655 = vmatprep.subr.mxu0 0.0
    %5656 = vmatpush2.msra.mxu0 0.0
    %5657 = vmatprep.subr.mxu0 0.0
    %5658 = vmatpush2.msra.mxu0 0.0
    %5659 = vmatprep.subr.mxu0 0.0
    %5660 = vmatpush2.msra.mxu0 0.0
    %5661 = vmatprep.subr.mxu0 0.0
    %5662 = vmatpush2.msra.mxu0 0.0
    %5663 = vmatprep.subr.mxu0 0.0
    %5664 = vmatpush2.msra.mxu0 0.0
    %5665 = vmatprep.subr.mxu0 0.0
    %5666 = vmatpush2.msra.mxu0 0.0
    %5667 = vmatprep.subr.mxu0 0.0
    %5668 = vmatpush2.msra.mxu0 0.0
    %5669 = vmatprep.subr.mxu0 0.0
    %5670 = vmatpush2.msra.mxu0 0.0
    %5671 = vmatprep.subr.mxu0 0.0
    %5672 = vmatpush2.msra.mxu0 0.0
    %5673 = vmatprep.subr.mxu0 0.0
    %5674 = vmatpush2.msra.mxu0 0.0
    %5675 = vmatprep.subr.mxu0 0.0
    %5676 = vmatpush2.msra.mxu0 0.0
    %5677 = vmatprep.subr.mxu0 0.0
    %5678 = vmatpush2.msra.mxu0 0.0
    %5679 = vmatprep.subr.mxu0 0.0
    %5680 = vmatpush2.msra.mxu0 0.0
    %5681 = vmatprep.mubr.f32.mxu0 0.0
    %5682 = vmatmul.mubr.f32.gmra.mxu0 %v5615
    %v5683 = vpop.f32.mrf.mxu0
    %v5684 = vadd.f32 %v5613, %v5683
    %v5685 = vpop.f32.mrf.mxu0
    %5686 = vdwg.mxu0
    %v5687 = vsub.f32 0.0, %v5684
    %v5688 = vmul.f32 %v5687, 1.442695
    %v5689 = vpow.pop %v5688
    %v5690 = vadd.f32 %v5689, 1.0
    %v5691 = vrcp.pop %v5690
    %v5692 = vmul.f32 1.0, %v5691
    %5693 = vst.msk [vmem:[%s17 + $0x1] sm:$0x1] %vm5443, %v5692
    // Predicated region
    $region122: #{tpu_custom_call.1} parent=1 // pred_check
      _
    $region123: #{tpu_custom_call.1} parent=1 // pred_check_branch
      %5695 = sbr.rel (0) target = $region125
    $region124: #{tpu_custom_call.1} parent=1 // pred_region
      _
    $region125: #{tpu_custom_call.1} parent=1 // pred_fallthru
      _
    // Predicated region
    $region126: #{tpu_custom_call.1} parent=1 // pred_check
      _
    $region127: #{tpu_custom_call.1} parent=1 // pred_check_branch
      %5697 = sbr.rel (0) target = $region129
    $region128: #{tpu_custom_call.1} parent=1 // pred_region
      _
    $region129: #{tpu_custom_call.1} parent=1 // pred_fallthru
      _
    %5698 = vsyncpa [#allocation4], 1
    %5699 = vsyncpa [#allocation6], 1
    %5700 = vsyncpa [#allocation9], 1
    %5701 = vsyncpa [#allocation12], 1
    %5702 = vsyncpa [#allocation15], 1
    %5703 = vsyncpa [#allocation18], 1
    %5704 = vsyncpa [#allocation21], 1

</llo_original>
